<compile_context>
chip_gen: v7x
topology: tpu7x:2x2x1
jax: 0.10.0
libtpu: 0.0.40
codegen_flags: <defaults>
</compile_context>

<pallas_src>
import math
from functools import partial

import jax
import jax.numpy as jnp
from jax.experimental import pallas as pl
from jax.experimental.pallas import tpu as pltpu

LATENT_SIZE = 32
DIMS = (32, 32, 32)          # hidden dims; linear_dim = DIMS[0]
MAPPING_HIDDEN = (32,)       # mapping_film_dims
OUT_DIM = 4                  # sdf + rgb
XYZ = 3
N_FEAT = LATENT_SIZE + XYZ   # 35 raw input features
K_IN = 48                    # features zero-padded to a bf16 sublane multiple


# ---------------- kernel --------------------------------------------------------

def decoder_kernel(
    x_ref,                                   # (K_IN, TB) bf16: [latent; xyz; 0-pad]
    w0f_ref, b0f_ref,                        # fused stage 0: (128, K_IN) bf16 / (128,1) f32
    wgb_ref, bgb_ref,                        # fused stage 2: (192, 96) bf16 / (192,1) f32
    w1_ref, b1_ref, w2_ref, b2_ref, w3_ref, b3_ref,
    out_ref,                                 # (4, TB) f32
    gb_ref,                                  # VMEM scratch (192, TB) f32
):
    """Features-major: activations are (features, TILE_B); weights are (out, in)."""
    D = DIMS[0]

    x = x_ref[...]                           # bf16

    # Fused stage 0: decoder lin0 (xyz->32) + the three FiLM stage-1 nets (lat->32)
    # in a single (128, K_IN) MXU push.  Biases added in f32.
    z = jnp.dot(w0f_ref[...], x, preferred_element_type=jnp.float32) + b0f_ref[...]
    h = z[0:D, :]                            # lin0 pre-activation          (32, TB) f32
    m = z[D:, :]                             # stacked mapping hidden       (96, TB) f32
    m = jnp.where(m > 0, m, 0.2 * m)         # LeakyReLU(0.2), f32

    # Fused stage 2: block-diagonal (192, 96) matmul -> all gammas/betas at once.
    # FiLM "+1" is pre-folded into the gamma half of bgb.  Parked in VMEM scratch.
    gb_ref[...] = (jnp.dot(wgb_ref[...], m.astype(jnp.bfloat16),
                           preferred_element_type=jnp.float32) + bgb_ref[...])

    # Serial decoder chain: FiLM_l + ReLU on lin_l's output, then lin_{l+1}.
    dec = ((w1_ref, b1_ref), (w2_ref, b2_ref), (w3_ref, b3_ref))
    for layer in range(3):
        gamma = gb_ref[2 * D * layer: 2 * D * layer + D, :]          # (32, TB) f32
        beta = gb_ref[2 * D * layer + D: 2 * D * (layer + 1), :]     # (32, TB) f32
        # FiLM followed by ReLU (the module's second ReLU is a no-op) — all f32.
        h = jnp.maximum(gamma * h + beta, 0.0)
        w_ref, b_ref = dec[layer]
        h = jnp.dot(w_ref[...], h.astype(jnp.bfloat16),
                    preferred_element_type=jnp.float32) + b_ref[...]

    # h: (4, TB).  Row 0 -> tanh(sdf); rows 1:3 were already *255 (folded in w3/b3).
    sdf = jnp.tanh(h[0:1, :])                # tanh only on the sdf row
    row = jax.lax.broadcasted_iota(jnp.int32, h.shape, 0)
    out_ref[...] = jnp.where(row == 0, jnp.broadcast_to(sdf, h.shape), h)


# ---------------- parameter construction (PyTorch-style init) -------------------

def _linear_params(key, fan_in, fan_out):
    kw, kb = jax.random.split(key)
    bound = 1.0 / math.sqrt(fan_in)
    w = jax.random.uniform(kw, (fan_in, fan_out), jnp.float32, -bound, bound)
    b = jax.random.uniform(kb, (fan_out,), jnp.float32, -bound, bound)
    return w, b


def make_params(key):
    """Original (PyTorch-like) layout: weights (in, out), biases (out,)."""
    linear_dim = DIMS[0]
    layer_dims = (XYZ,) + DIMS + (OUT_DIM,)       # 3 -> 32 -> 32 -> 32 -> 4
    keys = jax.random.split(key, 16)
    ki = 0

    dec = []
    for l in range(len(layer_dims) - 1):
        dec.append(_linear_params(keys[ki], layer_dims[l], layer_dims[l + 1]))
        ki += 1

    film = []
    for _ in range(len(DIMS)):
        w0, b0 = _linear_params(keys[ki], LATENT_SIZE, MAPPING_HIDDEN[0]); ki += 1
        w1, b1 = _linear_params(keys[ki], MAPPING_HIDDEN[0], 2 * linear_dim); ki += 1
        film.append((w0, b0, w1, b1))

    return {"dec": dec, "film": film}


def prepare_kernel_params(params):
    """One-time re-layout into the fused kernel format (call once, outside jit path):
       - fuse lin0 + three FiLM stage-1 weights into one (128, K_IN) bf16 matrix
       - fuse three FiLM stage-2 weights into one block-diagonal (192, 96) bf16 matrix
       - fold the FiLM '+1' into the gamma bias, the *255 scale into lin3
       - weights bf16 (out, in); biases f32 (out, 1)."""
    D = DIMS[0]
    dec, film = params["dec"], params["film"]

    # Fused stage 0.  Input row layout: 0:32 latent, 32:35 xyz, 35:K_IN zeros.
    w_lin0, b_lin0 = dec[0]
    w0f = jnp.zeros((4 * D, K_IN), jnp.float32)
    w0f = w0f.at[0:D, LATENT_SIZE:LATENT_SIZE + XYZ].set(w_lin0.T)
    b0f = [b_lin0]
    for l, (mw0, mb0, _, _) in enumerate(film):
        w0f = w0f.at[D * (l + 1):D * (l + 2), 0:LATENT_SIZE].set(mw0.T)
        b0f.append(mb0)
    b0f = jnp.concatenate(b0f).reshape(-1, 1)

    # Fused stage 2: block-diagonal gamma/beta projection.
    wgb = jnp.zeros((6 * D, 3 * D), jnp.float32)
    bgb = []
    for l, (_, _, mw1, mb1) in enumerate(film):
        wgb = wgb.at[2 * D * l:2 * D * (l + 1), D * l:D * (l + 1)].set(mw1.T)
        bgb.append(mb1.at[:D].add(1.0))          # fold FiLM "+1" into gamma bias
    bgb = jnp.concatenate(bgb).reshape(-1, 1)

    # Remaining decoder layers (255 scale folded into lin3 rows 1:3).
    rest = []
    for idx in (1, 2, 3):
        w, b = dec[idx]
        wt, bc = w.T, b.reshape(-1, 1)
        if idx == 3:
            scale = jnp.concatenate(
                [jnp.ones((1, 1), jnp.float32),
                 jnp.full((OUT_DIM - 1, 1), 255.0, jnp.float32)], axis=0)
            wt = wt * scale
            bc = bc * scale
        rest += [wt.astype(jnp.bfloat16), bc]

    return (w0f.astype(jnp.bfloat16), b0f,
            wgb.astype(jnp.bfloat16), bgb,
            *rest)


# ---------------- wrapper --------------------------------------------------------

def _round_up(x, m):
    return ((x + m - 1) // m) * m


@partial(jax.jit, static_argnames=("tile_b",))
def decoder_forward(inp, kparams, *, tile_b=2048):
    B = inp.shape[0]

    # Lane-dense batch tile: multiple of 128, amortizes per-step overhead, but
    # clamped so the ("parallel",) batch grid keeps >= 2 tiles (v7x: 2 TCs/chip).
    two_tile = _round_up(-(-B // 2), 128)
    tile_b = max(128, min(tile_b, max(two_tile, 128)))
    b_pad = _round_up(B, tile_b)

    # Transpose once so the batch lands on the 128-lane axis; cast matmul operands
    # to bf16; zero-pad features to K_IN and batch to b_pad (fuses under jit).
    x = inp.T.astype(jnp.bfloat16)                       # (35, B): latent rows 0:32, xyz 32:35
    x = jnp.pad(x, ((0, K_IN - x.shape[0]), (0, b_pad - B)))

    grid = (b_pad // tile_b,)
    in_specs = [pl.BlockSpec((K_IN, tile_b), lambda i: (0, i))] + [
        pl.BlockSpec(p.shape, lambda i: (0, 0)) for p in kparams   # resident params
    ]

    out_t = pl.pallas_call(
        decoder_kernel,
        out_shape=jax.ShapeDtypeStruct((OUT_DIM, b_pad), jnp.float32),
        grid=grid,
        in_specs=in_specs,
        out_specs=pl.BlockSpec((OUT_DIM, tile_b), lambda i: (0, i)),
        scratch_shapes=[pltpu.VMEM((6 * DIMS[0], tile_b), jnp.float32)],
        compiler_params=pltpu.CompilerParams(
            dimension_semantics=("parallel",)),
    )(x, *kparams)

    return out_t[:, :B].T                                # back to (B, OUT_DIM)


# ---------------- plain-JAX reference (module semantics, f32) -------------------

def decoder_reference(inp, params):
    D = DIMS[0]
    latent = inp[:, :-3]
    xyz = inp[:, -3:]
    h = xyz
    n_dec = len(params["dec"])
    for layer, (w, b) in enumerate(params["dec"]):
        h = h @ w + b
        if layer < n_dec - 1:
            mw0, mb0, mw1, mb1 = params["film"][layer]
            m = latent @ mw0 + mb0
            m = jnp.where(m > 0, m, 0.2 * m)              # LeakyReLU(0.2)
            gb = m @ mw1 + mb1
            gammas = gb[:, :D] + 1.0
            betas = gb[:, D:]
            h = jnp.maximum(gammas * h + betas, 0.0)      # FiLM ReLU
            h = jnp.maximum(h, 0.0)                       # decoder ReLU (no-op)
    out0 = jnp.tanh(h[:, :1])
    rest = h[:, 1:] * 255.0
    return jnp.concatenate([out0, rest], axis=-1)


# ---------------- main -----------------------------------------------------------

if __name__ == "__main__":
    key = jax.random.PRNGKey(0)
    k_inp, k_par = jax.random.split(key)

    B = 2000                                  # exercises batch padding; grid of 2 tiles
    inp = jax.random.normal(k_inp, (B, LATENT_SIZE + XYZ), dtype=jnp.float32)
    params = make_params(k_par)
    kparams = prepare_kernel_params(params)   # one-time weight re-layout / fusion

    out = jax.block_until_ready(decoder_forward(inp, kparams, tile_b=2048))
    ref = jax.block_until_ready(decoder_reference(inp, params))

    assert out.shape == (B, OUT_DIM)
    # Per-channel relative error (color channels are *255-scaled; kernel uses bf16
    # matmul operands with f32 accumulation, so compare on a relative scale).
    chan_scale = jnp.maximum(jnp.max(jnp.abs(ref), axis=0), 1.0)      # (4,)
    rel_err = float(jnp.max(jnp.abs(out - ref) / chan_scale))
    assert rel_err < 2e-2, f"max per-channel relative error too large: {rel_err}"

    print("KERNEL_OK")
</pallas_src>

<mosaic_0001>
module attributes {stable_mosaic.version = 11 : i64} {
  func.func @decoder_kernel(%arg0: i32, %arg1: memref<48x1024xbf16, #tpu.memory_space<vmem>>, %arg2: memref<128x48xbf16, #tpu.memory_space<vmem>>, %arg3: memref<128x1xf32, #tpu.memory_space<vmem>>, %arg4: memref<192x96xbf16, #tpu.memory_space<vmem>>, %arg5: memref<192x1xf32, #tpu.memory_space<vmem>>, %arg6: memref<32x32xbf16, #tpu.memory_space<vmem>>, %arg7: memref<32x1xf32, #tpu.memory_space<vmem>>, %arg8: memref<32x32xbf16, #tpu.memory_space<vmem>>, %arg9: memref<32x1xf32, #tpu.memory_space<vmem>>, %arg10: memref<4x32xbf16, #tpu.memory_space<vmem>>, %arg11: memref<4x1xf32, #tpu.memory_space<vmem>>, %arg12: memref<4x1024xf32, #tpu.memory_space<vmem>>, %arg13: memref<192x1024xf32, #tpu.memory_space<vmem>>) attributes {dimension_semantics = [#tpu.dimension_semantics<parallel>], iteration_bounds = array<i64: 2>, scalar_prefetch = 0 : i64, scratch_operands = 1 : i64, tpu.core_type = #tpu.core_type<tc>, window_params = [{transform_indices = @transform_0, window_bounds = array<i64: 48, 1024>}, {pipeline_mode = #tpu.pipeline_mode<synchronous>, transform_indices = @transform_1, window_bounds = array<i64: 128, 48>}, {pipeline_mode = #tpu.pipeline_mode<synchronous>, transform_indices = @transform_2, window_bounds = array<i64: 128, 1>}, {pipeline_mode = #tpu.pipeline_mode<synchronous>, transform_indices = @transform_3, window_bounds = array<i64: 192, 96>}, {pipeline_mode = #tpu.pipeline_mode<synchronous>, transform_indices = @transform_4, window_bounds = array<i64: 192, 1>}, {pipeline_mode = #tpu.pipeline_mode<synchronous>, transform_indices = @transform_5, window_bounds = array<i64: 32, 32>}, {pipeline_mode = #tpu.pipeline_mode<synchronous>, transform_indices = @transform_6, window_bounds = array<i64: 32, 1>}, {pipeline_mode = #tpu.pipeline_mode<synchronous>, transform_indices = @transform_7, window_bounds = array<i64: 32, 32>}, {pipeline_mode = #tpu.pipeline_mode<synchronous>, transform_indices = @transform_8, window_bounds = array<i64: 32, 1>}, {pipeline_mode = #tpu.pipeline_mode<synchronous>, transform_indices = @transform_9, window_bounds = array<i64: 4, 32>}, {pipeline_mode = #tpu.pipeline_mode<synchronous>, transform_indices = @transform_10, window_bounds = array<i64: 4, 1>}, {transform_indices = @transform_11, window_bounds = array<i64: 4, 1024>}]} {
    %c0 = arith.constant 0 : index
    %c0_0 = arith.constant 0 : index
    %0 = vector.load %arg1[%c0, %c0_0] : memref<48x1024xbf16, #tpu.memory_space<vmem>>, vector<48x1024xbf16>
    %c0_1 = arith.constant 0 : index
    %c0_2 = arith.constant 0 : index
    %1 = vector.load %arg2[%c0_1, %c0_2] : memref<128x48xbf16, #tpu.memory_space<vmem>>, vector<128x48xbf16>
    %cst = arith.constant dense<0.000000e+00> : vector<128x1024xf32>
    %2 = tpu.matmul %1, %0, %cst {dimension_numbers = #tpu.dot_dimension_numbers<[1], [0], [0], [1], [0, 0, 1, 1], [], []>} : vector<128x48xbf16>, vector<48x1024xbf16>, vector<128x1024xf32> -> vector<128x1024xf32>
    %c0_3 = arith.constant 0 : index
    %c0_4 = arith.constant 0 : index
    %3 = vector.load %arg3[%c0_3, %c0_4] : memref<128x1xf32, #tpu.memory_space<vmem>>, vector<128x1xf32>
    %4 = vector.broadcast %3 : vector<128x1xf32> to vector<128x1024xf32>
    %5 = arith.addf %2, %4 : vector<128x1024xf32>
    %6 = vector.extract_strided_slice %5 {offsets = [0, 0], sizes = [32, 1024], strides = [1, 1]} : vector<128x1024xf32> to vector<32x1024xf32>
    %7 = vector.extract_strided_slice %5 {offsets = [32, 0], sizes = [96, 1024], strides = [1, 1]} : vector<128x1024xf32> to vector<96x1024xf32>
    %cst_5 = arith.constant 0.000000e+00 : f32
    %8 = vector.broadcast %cst_5 : f32 to vector<96x1024xf32>
    %9 = arith.cmpf ogt, %7, %8 : vector<96x1024xf32>
    %cst_6 = arith.constant 2.000000e-01 : f32
    %10 = vector.broadcast %cst_6 : f32 to vector<96x1024xf32>
    %11 = arith.mulf %10, %7 : vector<96x1024xf32>
    %12 = arith.select %9, %7, %11 : vector<96x1024xi1>, vector<96x1024xf32>
    %c0_7 = arith.constant 0 : index
    %c0_8 = arith.constant 0 : index
    %13 = vector.load %arg4[%c0_7, %c0_8] : memref<192x96xbf16, #tpu.memory_space<vmem>>, vector<192x96xbf16>
    %14 = arith.truncf %12 : vector<96x1024xf32> to vector<96x1024xbf16>
    %cst_9 = arith.constant dense<0.000000e+00> : vector<192x1024xf32>
    %15 = tpu.matmul %13, %14, %cst_9 {dimension_numbers = #tpu.dot_dimension_numbers<[1], [0], [0], [1], [0, 0, 1, 1], [], []>} : vector<192x96xbf16>, vector<96x1024xbf16>, vector<192x1024xf32> -> vector<192x1024xf32>
    %c0_10 = arith.constant 0 : index
    %c0_11 = arith.constant 0 : index
    %16 = vector.load %arg5[%c0_10, %c0_11] : memref<192x1xf32, #tpu.memory_space<vmem>>, vector<192x1xf32>
    %17 = vector.broadcast %16 : vector<192x1xf32> to vector<192x1024xf32>
    %18 = arith.addf %15, %17 : vector<192x1024xf32>
    %c0_12 = arith.constant 0 : index
    %c0_13 = arith.constant 0 : index
    %19 = vector.load %arg13[%c0_12, %c0_13] : memref<192x1024xf32, #tpu.memory_space<vmem>>, vector<192x1024xf32>
    tpu.vector_store %arg13[%c0_12, %c0_13], %18 {strides = array<i32>} : memref<192x1024xf32, #tpu.memory_space<vmem>>, vector<192x1024xf32>,
    %c0_14 = arith.constant 0 : index
    %c0_15 = arith.constant 0 : index
    %20 = vector.load %arg13[%c0_14, %c0_15] : memref<192x1024xf32, #tpu.memory_space<vmem>>, vector<32x1024xf32>
    %c32 = arith.constant 32 : index
    %c0_16 = arith.constant 0 : index
    %21 = vector.load %arg13[%c32, %c0_16] : memref<192x1024xf32, #tpu.memory_space<vmem>>, vector<32x1024xf32>
    %22 = arith.mulf %20, %6 : vector<32x1024xf32>
    %23 = arith.addf %22, %21 : vector<32x1024xf32>
    %cst_17 = arith.constant 0.000000e+00 : f32
    %24 = vector.broadcast %cst_17 : f32 to vector<32x1024xf32>
    %25 = arith.maximumf %23, %24 : vector<32x1024xf32>
    %c0_18 = arith.constant 0 : index
    %c0_19 = arith.constant 0 : index
    %26 = vector.load %arg6[%c0_18, %c0_19] : memref<32x32xbf16, #tpu.memory_space<vmem>>, vector<32x32xbf16>
    %27 = arith.truncf %25 : vector<32x1024xf32> to vector<32x1024xbf16>
    %cst_20 = arith.constant dense<0.000000e+00> : vector<32x1024xf32>
    %28 = tpu.matmul %26, %27, %cst_20 {dimension_numbers = #tpu.dot_dimension_numbers<[1], [0], [0], [1], [0, 0, 1, 1], [], []>} : vector<32x32xbf16>, vector<32x1024xbf16>, vector<32x1024xf32> -> vector<32x1024xf32>
    %c0_21 = arith.constant 0 : index
    %c0_22 = arith.constant 0 : index
    %29 = vector.load %arg7[%c0_21, %c0_22] : memref<32x1xf32, #tpu.memory_space<vmem>>, vector<32x1xf32>
    %30 = vector.broadcast %29 : vector<32x1xf32> to vector<32x1024xf32>
    %31 = arith.addf %28, %30 : vector<32x1024xf32>
    %c64 = arith.constant 64 : index
    %c0_23 = arith.constant 0 : index
    %32 = vector.load %arg13[%c64, %c0_23] : memref<192x1024xf32, #tpu.memory_space<vmem>>, vector<32x1024xf32>
    %c96 = arith.constant 96 : index
    %c0_24 = arith.constant 0 : index
    %33 = vector.load %arg13[%c96, %c0_24] : memref<192x1024xf32, #tpu.memory_space<vmem>>, vector<32x1024xf32>
    %34 = arith.mulf %32, %31 : vector<32x1024xf32>
    %35 = arith.addf %34, %33 : vector<32x1024xf32>
    %cst_25 = arith.constant 0.000000e+00 : f32
    %36 = vector.broadcast %cst_25 : f32 to vector<32x1024xf32>
    %37 = arith.maximumf %35, %36 : vector<32x1024xf32>
    %c0_26 = arith.constant 0 : index
    %c0_27 = arith.constant 0 : index
    %38 = vector.load %arg8[%c0_26, %c0_27] : memref<32x32xbf16, #tpu.memory_space<vmem>>, vector<32x32xbf16>
    %39 = arith.truncf %37 : vector<32x1024xf32> to vector<32x1024xbf16>
    %cst_28 = arith.constant dense<0.000000e+00> : vector<32x1024xf32>
    %40 = tpu.matmul %38, %39, %cst_28 {dimension_numbers = #tpu.dot_dimension_numbers<[1], [0], [0], [1], [0, 0, 1, 1], [], []>} : vector<32x32xbf16>, vector<32x1024xbf16>, vector<32x1024xf32> -> vector<32x1024xf32>
    %c0_29 = arith.constant 0 : index
    %c0_30 = arith.constant 0 : index
    %41 = vector.load %arg9[%c0_29, %c0_30] : memref<32x1xf32, #tpu.memory_space<vmem>>, vector<32x1xf32>
    %42 = vector.broadcast %41 : vector<32x1xf32> to vector<32x1024xf32>
    %43 = arith.addf %40, %42 : vector<32x1024xf32>
    %c128 = arith.constant 128 : index
    %c0_31 = arith.constant 0 : index
    %44 = vector.load %arg13[%c128, %c0_31] : memref<192x1024xf32, #tpu.memory_space<vmem>>, vector<32x1024xf32>
    %c160 = arith.constant 160 : index
    %c0_32 = arith.constant 0 : index
    %45 = vector.load %arg13[%c160, %c0_32] : memref<192x1024xf32, #tpu.memory_space<vmem>>, vector<32x1024xf32>
    %46 = arith.mulf %44, %43 : vector<32x1024xf32>
    %47 = arith.addf %46, %45 : vector<32x1024xf32>
    %cst_33 = arith.constant 0.000000e+00 : f32
    %48 = vector.broadcast %cst_33 : f32 to vector<32x1024xf32>
    %49 = arith.maximumf %47, %48 : vector<32x1024xf32>
    %c0_34 = arith.constant 0 : index
    %c0_35 = arith.constant 0 : index
    %50 = vector.load %arg10[%c0_34, %c0_35] : memref<4x32xbf16, #tpu.memory_space<vmem>>, vector<4x32xbf16>
    %51 = arith.truncf %49 : vector<32x1024xf32> to vector<32x1024xbf16>
    %cst_36 = arith.constant dense<0.000000e+00> : vector<4x1024xf32>
    %52 = tpu.matmul %50, %51, %cst_36 {dimension_numbers = #tpu.dot_dimension_numbers<[1], [0], [0], [1], [0, 0, 1, 1], [], []>} : vector<4x32xbf16>, vector<32x1024xbf16>, vector<4x1024xf32> -> vector<4x1024xf32>
    %c0_37 = arith.constant 0 : index
    %c0_38 = arith.constant 0 : index
    %53 = vector.load %arg11[%c0_37, %c0_38] : memref<4x1xf32, #tpu.memory_space<vmem>>, vector<4x1xf32>
    %54 = vector.broadcast %53 : vector<4x1xf32> to vector<4x1024xf32>
    %55 = arith.addf %52, %54 : vector<4x1024xf32>
    %56 = vector.extract_strided_slice %55 {offsets = [0, 0], sizes = [1, 1024], strides = [1, 1]} : vector<4x1024xf32> to vector<1x1024xf32>
    %57 = math.tanh %56 : vector<1x1024xf32>
    %58 = tpu.iota {dimensions = array<i32: 0>} : vector<4x1024xi32>
    %c0_i32 = arith.constant 0 : i32
    %59 = vector.broadcast %c0_i32 : i32 to vector<4x1024xi32>
    %60 = arith.cmpi eq, %58, %59 : vector<4x1024xi32>
    %61 = vector.shape_cast %57 : vector<1x1024xf32> to vector<1x1024xf32>
    %62 = vector.broadcast %61 : vector<1x1024xf32> to vector<4x1024xf32>
    %63 = arith.select %60, %62, %55 : vector<4x1024xi1>, vector<4x1024xf32>
    %c0_39 = arith.constant 0 : index
    %c0_40 = arith.constant 0 : index
    %64 = vector.load %arg12[%c0_39, %c0_40] : memref<4x1024xf32, #tpu.memory_space<vmem>>, vector<4x1024xf32>
    tpu.vector_store %arg12[%c0_39, %c0_40], %63 {strides = array<i32>} : memref<4x1024xf32, #tpu.memory_space<vmem>>, vector<4x1024xf32>,
    return
  }
  func.func @transform_0(%arg0: i32) -> (i32, i32) {
    %c0_i32 = arith.constant 0 : i32
    %c0_i32_0 = arith.constant 0 : i32
    return %c0_i32, %arg0 : i32, i32
  }
  func.func @transform_1(%arg0: i32) -> (i32, i32) {
    %c0_i32 = arith.constant 0 : i32
    %c0_i32_0 = arith.constant 0 : i32
    %c0_i32_1 = arith.constant 0 : i32
    return %c0_i32, %c0_i32_0 : i32, i32
  }
  func.func @transform_2(%arg0: i32) -> (i32, i32) {
    %c0_i32 = arith.constant 0 : i32
    %c0_i32_0 = arith.constant 0 : i32
    %c0_i32_1 = arith.constant 0 : i32
    return %c0_i32, %c0_i32_0 : i32, i32
  }
  func.func @transform_3(%arg0: i32) -> (i32, i32) {
    %c0_i32 = arith.constant 0 : i32
    %c0_i32_0 = arith.constant 0 : i32
    %c0_i32_1 = arith.constant 0 : i32
    return %c0_i32, %c0_i32_0 : i32, i32
  }
  func.func @transform_4(%arg0: i32) -> (i32, i32) {
    %c0_i32 = arith.constant 0 : i32
    %c0_i32_0 = arith.constant 0 : i32
    %c0_i32_1 = arith.constant 0 : i32
    return %c0_i32, %c0_i32_0 : i32, i32
  }
  func.func @transform_5(%arg0: i32) -> (i32, i32) {
    %c0_i32 = arith.constant 0 : i32
    %c0_i32_0 = arith.constant 0 : i32
    %c0_i32_1 = arith.constant 0 : i32
    return %c0_i32, %c0_i32_0 : i32, i32
  }
  func.func @transform_6(%arg0: i32) -> (i32, i32) {
    %c0_i32 = arith.constant 0 : i32
    %c0_i32_0 = arith.constant 0 : i32
    %c0_i32_1 = arith.constant 0 : i32
    return %c0_i32, %c0_i32_0 : i32, i32
  }
  func.func @transform_7(%arg0: i32) -> (i32, i32) {
    %c0_i32 = arith.constant 0 : i32
    %c0_i32_0 = arith.constant 0 : i32
    %c0_i32_1 = arith.constant 0 : i32
    return %c0_i32, %c0_i32_0 : i32, i32
  }
  func.func @transform_8(%arg0: i32) -> (i32, i32) {
    %c0_i32 = arith.constant 0 : i32
    %c0_i32_0 = arith.constant 0 : i32
    %c0_i32_1 = arith.constant 0 : i32
    return %c0_i32, %c0_i32_0 : i32, i32
  }
  func.func @transform_9(%arg0: i32) -> (i32, i32) {
    %c0_i32 = arith.constant 0 : i32
    %c0_i32_0 = arith.constant 0 : i32
    %c0_i32_1 = arith.constant 0 : i32
    return %c0_i32, %c0_i32_0 : i32, i32
  }
  func.func @transform_10(%arg0: i32) -> (i32, i32) {
    %c0_i32 = arith.constant 0 : i32
    %c0_i32_0 = arith.constant 0 : i32
    %c0_i32_1 = arith.constant 0 : i32
    return %c0_i32, %c0_i32_0 : i32, i32
  }
  func.func @transform_11(%arg0: i32) -> (i32, i32) {
    %c0_i32 = arith.constant 0 : i32
    %c0_i32_0 = arith.constant 0 : i32
    return %c0_i32, %arg0 : i32, i32
  }
}

</mosaic_0001>

<llo_original>
// kernel: decoder_forward.1
$region0: #{decoder_forward.1}
  #allocation0 [shape = 'u32[]', space=smem, size = 0x4, offset = 0x4, fixed_abs, tag = 'smem constant byte address 0x4 - core index']
  #allocation1 [shape = 'u32[144,128]{1,0:T(1,128)}', space=vmem, size = 0x12000, scoped, tag = 'internal scratch']
  #allocation2 [shape = 'f32[192,1024]{1,0:T(8,128)}', space=vmem, size = 0xc0000, scoped, tag = 'scratch operand']
  %s0 = inlined_call_operand.vmem [shape: bf16[48,2048], index: 0, kind: input, shape index: {}]
  %s1 = inlined_call_operand.vmem [shape: bf16[128,48], index: 1, kind: input, shape index: {}]
  %s2 = inlined_call_operand.vmem [shape: f32[128,1], index: 2, kind: input, shape index: {}]
  %s3 = inlined_call_operand.vmem [shape: bf16[192,96], index: 3, kind: input, shape index: {}]
  %s4 = inlined_call_operand.vmem [shape: f32[192,1], index: 4, kind: input, shape index: {}]
  %s5 = inlined_call_operand.vmem [shape: bf16[32,32], index: 5, kind: input, shape index: {}]
  %s6 = inlined_call_operand.vmem [shape: f32[32,1], index: 6, kind: input, shape index: {}]
  %s7 = inlined_call_operand.vmem [shape: bf16[32,32], index: 7, kind: input, shape index: {}]
  %s8 = inlined_call_operand.vmem [shape: f32[32,1], index: 8, kind: input, shape index: {}]
  %s9 = inlined_call_operand.vmem [shape: bf16[4,32], index: 9, kind: input, shape index: {}]
  %s10 = inlined_call_operand.vmem [shape: f32[4,1], index: 10, kind: input, shape index: {}]
  %s11 = inlined_call_operand.vmem [shape: f32[4,2048], index: 11, kind: output, shape index: {}]
  %s12 = sld [smem:[#allocation0]]
  $region100: #{decoder_forward.1} parent=0
    _
  %s14 = ssub.s32 1, %s12
  %s15 = scalar_select 0, %s14, %s12
  $region1: #{decoder_forward.1} parent=0
    #allocation3 [shape = 'u8[196608]{0}', space=vmem, size = 0x30000, scoped, tag = 'input window, operand 0']
    loop: start=0, step=1, limit=4
    $region2: #{decoder_forward.1} parent=1 // loop_pre_header
      _
    $region3: #{decoder_forward.1} parent=1 // loop_header
      %s17 = sphi 0, %s21
      %p18 = scmp.ge.s32.totalorder %s17, 4
      %s27 = sphi 0, %s29
      %s30 = sphi 0, %s27
      %s31 = sphi 0, %s30
      %s47 = sphi 0, %s31
      %s51 = sphi 0, %s51
      %s53 = sphi 0, %s51
      %s54 = sphi 0, %s53
      %s68 = sphi 0, %s54
      %s72 = sphi 0, %s72
      %s74 = sphi 0, %s72
      %s75 = sphi 0, %s74
      %s89 = sphi 0, %s75
      %s93 = sphi 0, %s93
      %s95 = sphi 0, %s93
      %s96 = sphi 0, %s95
      %s110 = sphi 0, %s96
      %s114 = sphi 0, %s114
      %s116 = sphi 0, %s114
      %s117 = sphi 0, %s116
      %s131 = sphi 0, %s117
      %s135 = sphi 0, %s135
      %s137 = sphi 0, %s135
      %s138 = sphi 0, %s137
      %s152 = sphi 0, %s138
      %s156 = sphi 0, %s156
      %s158 = sphi 0, %s156
      %s159 = sphi 0, %s158
      %s173 = sphi 0, %s159
      %s177 = sphi 0, %s177
      %s179 = sphi 0, %s177
      %s180 = sphi 0, %s179
      %s194 = sphi 0, %s180
      %s198 = sphi 0, %s198
      %s200 = sphi 0, %s198
      %s201 = sphi 0, %s200
      %s215 = sphi 0, %s201
      %s219 = sphi 0, %s219
      %s221 = sphi 0, %s219
      %s222 = sphi 0, %s221
      %s236 = sphi 0, %s222
      %s240 = sphi 0, %s240
      %s242 = sphi 0, %s240
      %s243 = sphi 0, %s242
      %s257 = sphi 0, %s243
      %s263 = sphi 0, %s265
      %s266 = sphi 0, %s263
      %s267 = sphi 0, %s266
      %s283 = sphi 0, %s267
    $region4: #{decoder_forward.1} parent=1 // loop_header_branch
      %20 = sbr.rel (%p18) target = $region8
    $region5: #{decoder_forward.1} parent=1 // loop_body
      %s22 = ssub.s32 %s17, 1
      %s23 = ssub.s32 %s17, 2
      %s24 = sadd.s32 %s17, 1
      %s25 = ssub.s32 %s17, %s24
      %p26 = scmp.eq.s32.totalorder %s25, 0
      %s28 = sadd.s32 %s27, 1
      %s29 = scalar_select %p26, %s27, %s28
      %p32 = pneg %p26
      %p33 = scmp.eq.s32.totalorder %s17, 1
      %p34 = por %p32, %p33
      %p35 = scmp.ne.s32.totalorder %s27, %s30
      %p36 = scmp.eq.s32.totalorder %s17, 0
      %p37 = por %p35, %p36
      %p38 = scmp.ne.s32.totalorder %s27, %s30
      %p39 = scmp.eq.s32.totalorder %s22, 1
      %p40 = por %p38, %p39
      %p41 = scmp.ne.s32.totalorder %s30, %s31
      %p42 = scmp.eq.s32.totalorder %s22, 0
      %p43 = por %p41, %p42
      %p44 = scmp.ne.s32.totalorder %s30, %s31
      %p45 = scmp.eq.s32.totalorder %s23, 1
      %p46 = por %p44, %p45
      %p48 = scmp.ne.s32.totalorder %s31, %s47
      %p49 = scmp.eq.s32.totalorder %s23, 0
      %p50 = por %p48, %p49
      %s52 = sadd.s32 %s51, 1
      %p55 = scmp.eq.s32.totalorder %s17, 1
      %p56 = scmp.ne.s32.totalorder %s51, %s53
      %p57 = scmp.eq.s32.totalorder %s17, 0
      %p58 = por %p56, %p57
      %p59 = scmp.ne.s32.totalorder %s51, %s53
      %p60 = scmp.eq.s32.totalorder %s22, 1
      %p61 = por %p59, %p60
      %p62 = scmp.ne.s32.totalorder %s53, %s54
      %p63 = scmp.eq.s32.totalorder %s22, 0
      %p64 = por %p62, %p63
      %p65 = scmp.ne.s32.totalorder %s53, %s54
      %p66 = scmp.eq.s32.totalorder %s23, 1
      %p67 = por %p65, %p66
      %p69 = scmp.ne.s32.totalorder %s54, %s68
      %p70 = scmp.eq.s32.totalorder %s23, 0
      %p71 = por %p69, %p70
      %s73 = sadd.s32 %s72, 1
      %p76 = scmp.eq.s32.totalorder %s17, 1
      %p77 = scmp.ne.s32.totalorder %s72, %s74
      %p78 = scmp.eq.s32.totalorder %s17, 0
      %p79 = por %p77, %p78
      %p80 = scmp.ne.s32.totalorder %s72, %s74
      %p81 = scmp.eq.s32.totalorder %s22, 1
      %p82 = por %p80, %p81
      %p83 = scmp.ne.s32.totalorder %s74, %s75
      %p84 = scmp.eq.s32.totalorder %s22, 0
      %p85 = por %p83, %p84
      %p86 = scmp.ne.s32.totalorder %s74, %s75
      %p87 = scmp.eq.s32.totalorder %s23, 1
      %p88 = por %p86, %p87
      %p90 = scmp.ne.s32.totalorder %s75, %s89
      %p91 = scmp.eq.s32.totalorder %s23, 0
      %p92 = por %p90, %p91
      %s94 = sadd.s32 %s93, 1
      %p97 = scmp.eq.s32.totalorder %s17, 1
      %p98 = scmp.ne.s32.totalorder %s93, %s95
      %p99 = scmp.eq.s32.totalorder %s17, 0
      %p100 = por %p98, %p99
      %p101 = scmp.ne.s32.totalorder %s93, %s95
      %p102 = scmp.eq.s32.totalorder %s22, 1
      %p103 = por %p101, %p102
      %p104 = scmp.ne.s32.totalorder %s95, %s96
      %p105 = scmp.eq.s32.totalorder %s22, 0
      %p106 = por %p104, %p105
      %p107 = scmp.ne.s32.totalorder %s95, %s96
      %p108 = scmp.eq.s32.totalorder %s23, 1
      %p109 = por %p107, %p108
      %p111 = scmp.ne.s32.totalorder %s96, %s110
      %p112 = scmp.eq.s32.totalorder %s23, 0
      %p113 = por %p111, %p112
      %s115 = sadd.s32 %s114, 1
      %p118 = scmp.eq.s32.totalorder %s17, 1
      %p119 = scmp.ne.s32.totalorder %s114, %s116
      %p120 = scmp.eq.s32.totalorder %s17, 0
      %p121 = por %p119, %p120
      %p122 = scmp.ne.s32.totalorder %s114, %s116
      %p123 = scmp.eq.s32.totalorder %s22, 1
      %p124 = por %p122, %p123
      %p125 = scmp.ne.s32.totalorder %s116, %s117
      %p126 = scmp.eq.s32.totalorder %s22, 0
      %p127 = por %p125, %p126
      %p128 = scmp.ne.s32.totalorder %s116, %s117
      %p129 = scmp.eq.s32.totalorder %s23, 1
      %p130 = por %p128, %p129
      %p132 = scmp.ne.s32.totalorder %s117, %s131
      %p133 = scmp.eq.s32.totalorder %s23, 0
      %p134 = por %p132, %p133
      %s136 = sadd.s32 %s135, 1
      %p139 = scmp.eq.s32.totalorder %s17, 1
      %p140 = scmp.ne.s32.totalorder %s135, %s137
      %p141 = scmp.eq.s32.totalorder %s17, 0
      %p142 = por %p140, %p141
      %p143 = scmp.ne.s32.totalorder %s135, %s137
      %p144 = scmp.eq.s32.totalorder %s22, 1
      %p145 = por %p143, %p144
      %p146 = scmp.ne.s32.totalorder %s137, %s138
      %p147 = scmp.eq.s32.totalorder %s22, 0
      %p148 = por %p146, %p147
      %p149 = scmp.ne.s32.totalorder %s137, %s138
      %p150 = scmp.eq.s32.totalorder %s23, 1
      %p151 = por %p149, %p150
      %p153 = scmp.ne.s32.totalorder %s138, %s152
      %p154 = scmp.eq.s32.totalorder %s23, 0
      %p155 = por %p153, %p154
      %s157 = sadd.s32 %s156, 1
      %p160 = scmp.eq.s32.totalorder %s17, 1
      %p161 = scmp.ne.s32.totalorder %s156, %s158
      %p162 = scmp.eq.s32.totalorder %s17, 0
      %p163 = por %p161, %p162
      %p164 = scmp.ne.s32.totalorder %s156, %s158
      %p165 = scmp.eq.s32.totalorder %s22, 1
      %p166 = por %p164, %p165
      %p167 = scmp.ne.s32.totalorder %s158, %s159
      %p168 = scmp.eq.s32.totalorder %s22, 0
      %p169 = por %p167, %p168
      %p170 = scmp.ne.s32.totalorder %s158, %s159
      %p171 = scmp.eq.s32.totalorder %s23, 1
      %p172 = por %p170, %p171
      %p174 = scmp.ne.s32.totalorder %s159, %s173
      %p175 = scmp.eq.s32.totalorder %s23, 0
      %p176 = por %p174, %p175
      %s178 = sadd.s32 %s177, 1
      %p181 = scmp.eq.s32.totalorder %s17, 1
      %p182 = scmp.ne.s32.totalorder %s177, %s179
      %p183 = scmp.eq.s32.totalorder %s17, 0
      %p184 = por %p182, %p183
      %p185 = scmp.ne.s32.totalorder %s177, %s179
      %p186 = scmp.eq.s32.totalorder %s22, 1
      %p187 = por %p185, %p186
      %p188 = scmp.ne.s32.totalorder %s179, %s180
      %p189 = scmp.eq.s32.totalorder %s22, 0
      %p190 = por %p188, %p189
      %p191 = scmp.ne.s32.totalorder %s179, %s180
      %p192 = scmp.eq.s32.totalorder %s23, 1
      %p193 = por %p191, %p192
      %p195 = scmp.ne.s32.totalorder %s180, %s194
      %p196 = scmp.eq.s32.totalorder %s23, 0
      %p197 = por %p195, %p196
      %s199 = sadd.s32 %s198, 1
      %p202 = scmp.eq.s32.totalorder %s17, 1
      %p203 = scmp.ne.s32.totalorder %s198, %s200
      %p204 = scmp.eq.s32.totalorder %s17, 0
      %p205 = por %p203, %p204
      %p206 = scmp.ne.s32.totalorder %s198, %s200
      %p207 = scmp.eq.s32.totalorder %s22, 1
      %p208 = por %p206, %p207
      %p209 = scmp.ne.s32.totalorder %s200, %s201
      %p210 = scmp.eq.s32.totalorder %s22, 0
      %p211 = por %p209, %p210
      %p212 = scmp.ne.s32.totalorder %s200, %s201
      %p213 = scmp.eq.s32.totalorder %s23, 1
      %p214 = por %p212, %p213
      %p216 = scmp.ne.s32.totalorder %s201, %s215
      %p217 = scmp.eq.s32.totalorder %s23, 0
      %p218 = por %p216, %p217
      %s220 = sadd.s32 %s219, 1
      %p223 = scmp.eq.s32.totalorder %s17, 1
      %p224 = scmp.ne.s32.totalorder %s219, %s221
      %p225 = scmp.eq.s32.totalorder %s17, 0
      %p226 = por %p224, %p225
      %p227 = scmp.ne.s32.totalorder %s219, %s221
      %p228 = scmp.eq.s32.totalorder %s22, 1
      %p229 = por %p227, %p228
      %p230 = scmp.ne.s32.totalorder %s221, %s222
      %p231 = scmp.eq.s32.totalorder %s22, 0
      %p232 = por %p230, %p231
      %p233 = scmp.ne.s32.totalorder %s221, %s222
      %p234 = scmp.eq.s32.totalorder %s23, 1
      %p235 = por %p233, %p234
      %p237 = scmp.ne.s32.totalorder %s222, %s236
      %p238 = scmp.eq.s32.totalorder %s23, 0
      %p239 = por %p237, %p238
      %s241 = sadd.s32 %s240, 1
      %p244 = scmp.eq.s32.totalorder %s17, 1
      %p245 = scmp.ne.s32.totalorder %s240, %s242
      %p246 = scmp.eq.s32.totalorder %s17, 0
      %p247 = por %p245, %p246
      %p248 = scmp.ne.s32.totalorder %s240, %s242
      %p249 = scmp.eq.s32.totalorder %s22, 1
      %p250 = por %p248, %p249
      %p251 = scmp.ne.s32.totalorder %s242, %s243
      %p252 = scmp.eq.s32.totalorder %s22, 0
      %p253 = por %p251, %p252
      %p254 = scmp.ne.s32.totalorder %s242, %s243
      %p255 = scmp.eq.s32.totalorder %s23, 1
      %p256 = por %p254, %p255
      %p258 = scmp.ne.s32.totalorder %s243, %s257
      %p259 = scmp.eq.s32.totalorder %s23, 0
      %p260 = por %p258, %p259
      %s261 = ssub.s32 %s17, %s24
      %p262 = scmp.eq.s32.totalorder %s261, 0
      %s264 = sadd.s32 %s263, 1
      %s265 = scalar_select %p262, %s263, %s264
      %p268 = pneg %p262
      %p269 = scmp.eq.s32.totalorder %s17, 1
      %p270 = por %p268, %p269
      %p271 = scmp.ne.s32.totalorder %s263, %s266
      %p272 = scmp.eq.s32.totalorder %s17, 0
      %p273 = por %p271, %p272
      %p274 = scmp.ne.s32.totalorder %s263, %s266
      %p275 = scmp.eq.s32.totalorder %s22, 1
      %p276 = por %p274, %p275
      %p277 = scmp.ne.s32.totalorder %s266, %s267
      %p278 = scmp.eq.s32.totalorder %s22, 0
      %p279 = por %p277, %p278
      %p280 = scmp.ne.s32.totalorder %s266, %s267
      %p281 = scmp.eq.s32.totalorder %s23, 1
      %p282 = por %p280, %p281
      %p284 = scmp.ne.s32.totalorder %s267, %s283
      %p285 = scmp.eq.s32.totalorder %s23, 0
      %p286 = por %p284, %p285
      %p287 = scmp.le.s32.totalorder 1, %s17
      %p288 = scmp.lt.s32.totalorder %s17, 3
      %p289 = pnand %p287, %p288
      %p290 = pneg %p289
      // Predicated region
      $region9: #{decoder_forward.1} parent=5 // pred_check
        _
      $region10: #{decoder_forward.1} parent=5 // pred_check_branch
        %292 = sbr.rel (%p289) target = $region12
      $region11: #{decoder_forward.1} parent=5 // pred_region
        %s293 = ssub.s32 %s17, 1
        // Predicated region
        $region13: #{decoder_forward.1} parent=11 // pred_check
          %p294 = pneg %p64
        $region14: #{decoder_forward.1} parent=11 // pred_check_branch
          %296 = sbr.rel (%p294) target = $region16
        $region15: #{decoder_forward.1} parent=11 // pred_region
          _
        $region16: #{decoder_forward.1} parent=11 // pred_fallthru
          _
        // Predicated region
        $region17: #{decoder_forward.1} parent=11 // pred_check
          %p297 = pneg %p85
        $region18: #{decoder_forward.1} parent=11 // pred_check_branch
          %299 = sbr.rel (%p297) target = $region20
        $region19: #{decoder_forward.1} parent=11 // pred_region
          _
        $region20: #{decoder_forward.1} parent=11 // pred_fallthru
          _
        // Predicated region
        $region21: #{decoder_forward.1} parent=11 // pred_check
          %p300 = pneg %p106
        $region22: #{decoder_forward.1} parent=11 // pred_check_branch
          %302 = sbr.rel (%p300) target = $region24
        $region23: #{decoder_forward.1} parent=11 // pred_region
          _
        $region24: #{decoder_forward.1} parent=11 // pred_fallthru
          _
        // Predicated region
        $region25: #{decoder_forward.1} parent=11 // pred_check
          %p303 = pneg %p127
        $region26: #{decoder_forward.1} parent=11 // pred_check_branch
          %305 = sbr.rel (%p303) target = $region28
        $region27: #{decoder_forward.1} parent=11 // pred_region
          _
        $region28: #{decoder_forward.1} parent=11 // pred_fallthru
          _
        // Predicated region
        $region29: #{decoder_forward.1} parent=11 // pred_check
          %p306 = pneg %p148
        $region30: #{decoder_forward.1} parent=11 // pred_check_branch
          %308 = sbr.rel (%p306) target = $region32
        $region31: #{decoder_forward.1} parent=11 // pred_region
          _
        $region32: #{decoder_forward.1} parent=11 // pred_fallthru
          _
        // Predicated region
        $region33: #{decoder_forward.1} parent=11 // pred_check
          %p309 = pneg %p169
        $region34: #{decoder_forward.1} parent=11 // pred_check_branch
          %311 = sbr.rel (%p309) target = $region36
        $region35: #{decoder_forward.1} parent=11 // pred_region
          _
        $region36: #{decoder_forward.1} parent=11 // pred_fallthru
          _
        // Predicated region
        $region37: #{decoder_forward.1} parent=11 // pred_check
          %p312 = pneg %p190
        $region38: #{decoder_forward.1} parent=11 // pred_check_branch
          %314 = sbr.rel (%p312) target = $region40
        $region39: #{decoder_forward.1} parent=11 // pred_region
          _
        $region40: #{decoder_forward.1} parent=11 // pred_fallthru
          _
        // Predicated region
        $region41: #{decoder_forward.1} parent=11 // pred_check
          %p315 = pneg %p211
        $region42: #{decoder_forward.1} parent=11 // pred_check_branch
          %317 = sbr.rel (%p315) target = $region44
        $region43: #{decoder_forward.1} parent=11 // pred_region
          _
        $region44: #{decoder_forward.1} parent=11 // pred_fallthru
          _
        // Predicated region
        $region45: #{decoder_forward.1} parent=11 // pred_check
          %p318 = pneg %p232
        $region46: #{decoder_forward.1} parent=11 // pred_check_branch
          %320 = sbr.rel (%p318) target = $region48
        $region47: #{decoder_forward.1} parent=11 // pred_region
          _
        $region48: #{decoder_forward.1} parent=11 // pred_fallthru
          _
        // Predicated region
        $region49: #{decoder_forward.1} parent=11 // pred_check
          %p321 = pneg %p253
        $region50: #{decoder_forward.1} parent=11 // pred_check_branch
          %323 = sbr.rel (%p321) target = $region52
        $region51: #{decoder_forward.1} parent=11 // pred_region
          _
        $region52: #{decoder_forward.1} parent=11 // pred_fallthru
          _
      $region12: #{decoder_forward.1} parent=5 // pred_fallthru
        _
      %p324 = scmp.lt.s32.totalorder %s17, 2
      // Predicated region
      $region53: #{decoder_forward.1} parent=5 // pred_check
        %p325 = pneg %p324
      $region54: #{decoder_forward.1} parent=5 // pred_check_branch
        %327 = sbr.rel (%p325) target = $region56
      $region55: #{decoder_forward.1} parent=5 // pred_region
        // Predicated region
        $region57: #{decoder_forward.1} parent=55 // pred_check
          %p328 = pneg %p37
        $region58: #{decoder_forward.1} parent=55 // pred_check_branch
          %330 = sbr.rel (%p328) target = $region60
        $region59: #{decoder_forward.1} parent=55 // pred_region
          %s331 = sand.u32 %s27, 1
          %s332 = sand.u32 %s27, 1
          %s333 = smul.addr %s332, 192
          %s334 = scalar_lea.vmem [#allocation3], %s333
          %s335 = smul.u32 8, %s17
          %s336 = smul.addr %s335, 4
          %s337 = scalar_lea.vmem %s0, %s336
          // Predicated region
          $region61: #{decoder_forward.1} parent=59 // pred_check
            _
          $region62: #{decoder_forward.1} parent=59 // pred_check_branch
            %339 = sbr.rel (0) target = $region64
          $region63: #{decoder_forward.1} parent=59 // pred_region
            // Predicated region
            $region65: #{decoder_forward.1} parent=63 // pred_check
              _
            $region66: #{decoder_forward.1} parent=63 // pred_check_branch
              %341 = sbr.rel (0) target = $region68
            $region67: #{decoder_forward.1} parent=63 // pred_region
              loop: start=0, step=1, limit=1
              $region69: #{decoder_forward.1} parent=67 // loop_pre_header
                _
              $region70: #{decoder_forward.1} parent=67 // loop_header
                %s343 = sphi 0, %s347
                %p344 = scmp.ge.s32.totalorder %s343, 1
                %s348 = sphi %s337, %s337
                %s349 = sphi %s334, %s334
              $region71: #{decoder_forward.1} parent=67 // loop_header_branch
                %346 = sbr.rel (%p344) target = $region75
              $region72: #{decoder_forward.1} parent=67 // loop_body
                %v350 = vld [vmem:[%s348] sm:$0xff]
                %351 = vst [vmem:[%s349] sm:$0xff] %v350
                %v352 = vld [vmem:[%s348 + $0x8] sm:$0xff]
                %353 = vst [vmem:[%s349 + $0x8] sm:$0xff] %v352
                %v354 = vld [vmem:[%s348 + $0x10] sm:$0xff]
                %355 = vst [vmem:[%s349 + $0x10] sm:$0xff] %v354
                %v356 = vld [vmem:[%s348 + $0x18] sm:$0xff]
                %357 = vst [vmem:[%s349 + $0x18] sm:$0xff] %v356
                %v358 = vld [vmem:[%s348 + $0x40] sm:$0xff]
                %359 = vst [vmem:[%s349 + $0x20] sm:$0xff] %v358
                %v360 = vld [vmem:[%s348 + $0x48] sm:$0xff]
                %361 = vst [vmem:[%s349 + $0x28] sm:$0xff] %v360
                %v362 = vld [vmem:[%s348 + $0x50] sm:$0xff]
                %363 = vst [vmem:[%s349 + $0x30] sm:$0xff] %v362
                %v364 = vld [vmem:[%s348 + $0x58] sm:$0xff]
                %365 = vst [vmem:[%s349 + $0x38] sm:$0xff] %v364
                %v366 = vld [vmem:[%s348 + $0x80] sm:$0xff]
                %367 = vst [vmem:[%s349 + $0x40] sm:$0xff] %v366
                %v368 = vld [vmem:[%s348 + $0x88] sm:$0xff]
                %369 = vst [vmem:[%s349 + $0x48] sm:$0xff] %v368
                %v370 = vld [vmem:[%s348 + $0x90] sm:$0xff]
                %371 = vst [vmem:[%s349 + $0x50] sm:$0xff] %v370
                %v372 = vld [vmem:[%s348 + $0x98] sm:$0xff]
                %373 = vst [vmem:[%s349 + $0x58] sm:$0xff] %v372
                %v374 = vld [vmem:[%s348 + $0xc0] sm:$0xff]
                %375 = vst [vmem:[%s349 + $0x60] sm:$0xff] %v374
                %v376 = vld [vmem:[%s348 + $0xc8] sm:$0xff]
                %377 = vst [vmem:[%s349 + $0x68] sm:$0xff] %v376
                %v378 = vld [vmem:[%s348 + $0xd0] sm:$0xff]
                %379 = vst [vmem:[%s349 + $0x70] sm:$0xff] %v378
                %v380 = vld [vmem:[%s348 + $0xd8] sm:$0xff]
                %381 = vst [vmem:[%s349 + $0x78] sm:$0xff] %v380
                %v382 = vld [vmem:[%s348 + $0x100] sm:$0xff]
                %383 = vst [vmem:[%s349 + $0x80] sm:$0xff] %v382
                %v384 = vld [vmem:[%s348 + $0x108] sm:$0xff]
                %385 = vst [vmem:[%s349 + $0x88] sm:$0xff] %v384
                %v386 = vld [vmem:[%s348 + $0x110] sm:$0xff]
                %387 = vst [vmem:[%s349 + $0x90] sm:$0xff] %v386
                %v388 = vld [vmem:[%s348 + $0x118] sm:$0xff]
                %389 = vst [vmem:[%s349 + $0x98] sm:$0xff] %v388
                %v390 = vld [vmem:[%s348 + $0x140] sm:$0xff]
                %391 = vst [vmem:[%s349 + $0xa0] sm:$0xff] %v390
                %v392 = vld [vmem:[%s348 + $0x148] sm:$0xff]
                %393 = vst [vmem:[%s349 + $0xa8] sm:$0xff] %v392
                %v394 = vld [vmem:[%s348 + $0x150] sm:$0xff]
                %395 = vst [vmem:[%s349 + $0xb0] sm:$0xff] %v394
                %v396 = vld [vmem:[%s348 + $0x158] sm:$0xff]
                %397 = vst [vmem:[%s349 + $0xb8] sm:$0xff] %v396
              $region73: #{decoder_forward.1} parent=67 // loop_footer
                %s347 = sadd.s32 1, %s343
              $region74: #{decoder_forward.1} parent=67 // loop_footer_branch
                %342 = sbr.rel target = $region70
              $region75: #{decoder_forward.1} parent=67 // loop_exit
                _
            $region68: #{decoder_forward.1} parent=63 // pred_fallthru
              _
            // Predicated region
            $region76: #{decoder_forward.1} parent=63 // pred_check
              _
            $region77: #{decoder_forward.1} parent=63 // pred_check_branch
              %399 = sbr.rel target = $region79
            $region78: #{decoder_forward.1} parent=63 // pred_region
              _
            $region79: #{decoder_forward.1} parent=63 // pred_fallthru
              _
          $region64: #{decoder_forward.1} parent=59 // pred_fallthru
            _
          %400 = vnop
        $region60: #{decoder_forward.1} parent=55 // pred_fallthru
          _
      $region56: #{decoder_forward.1} parent=5 // pred_fallthru
        _
      %p401 = scmp.le.s32.totalorder 1, %s17
      %p402 = scmp.lt.s32.totalorder %s17, 3
      %p403 = pnand %p401, %p402
      %p404 = pneg %p403
      // Predicated region
      $region80: #{decoder_forward.1} parent=5 // pred_check
        _
      $region81: #{decoder_forward.1} parent=5 // pred_check_branch
        %406 = sbr.rel (%p403) target = $region83
      $region82: #{decoder_forward.1} parent=5 // pred_region
        %s407 = ssub.s32 %s17, 1
        %s408 = sand.u32 %s30, 1
        %s409 = sand.u32 %s30, 1
        %s410 = smul.addr %s409, 192
        %s411 = scalar_lea.vmem [#allocation3], %s410
        // Predicated region
        $region84: #{decoder_forward.1} parent=82 // pred_check
          %p412 = pneg %p43
        $region85: #{decoder_forward.1} parent=82 // pred_check_branch
          %414 = sbr.rel (%p412) target = $region87
        $region86: #{decoder_forward.1} parent=82 // pred_region
          _
        $region87: #{decoder_forward.1} parent=82 // pred_fallthru
          _
        %s415 = sand.u32 %s30, 1
        %s416 = sand.u32 %s30, 1
        %s417 = smul.addr %s416, 192
        %s418 = scalar_lea.vmem [#allocation3], %s417
        %p419 = pneg %p43
        %p420 = pneg %p40
        %p421 = pneg %p64
        %p422 = pneg %p61
        %p423 = pneg %p85
        %p424 = pneg %p82
        %p425 = pneg %p106
        %p426 = pneg %p103
        %p427 = pneg %p127
        %p428 = pneg %p124
        %p429 = pneg %p148
        %p430 = pneg %p145
        %p431 = pneg %p169
        %p432 = pneg %p166
        %p433 = pneg %p190
        %p434 = pneg %p187
        %p435 = pneg %p211
        %p436 = pneg %p208
        %p437 = pneg %p232
        %p438 = pneg %p229
        %p439 = pneg %p253
        %p440 = pneg %p250
        %p441 = pneg %p279
        %p442 = pneg %p276
        %s443 = smul.u32 8, %s22
        %p444 = scmp.lt.s32.totalorder %s443, 15
        %s445 = scalar_select %p444, %s443, 15
        %s446 = smul.addr %s445, 4
        %s447 = scalar_lea.vmem %s11, %s446
        %s448 = smul.u32 8, %s22
        %s449 = smul.u32 8, %s22
        %p450 = scmp.lt.s32.totalorder %s449, 15
        %s451 = scalar_select %p450, %s449, 15
        %s452 = smul.addr %s451, 4
        %s453 = scalar_lea.vmem %s11, %s452
        %s454 = smul.u32 8, %s22
        %v456 = vld [vmem:[%s411] sm:$0xff]
        %v457 = vld [vmem:[%s411 + $0x8] sm:$0xff]
        %v458 = vld [vmem:[%s411 + $0x10] sm:$0xff]
        %v459 = vld [vmem:[%s411 + $0x18] sm:$0xff]
        %v460 = vld [vmem:[%s411 + $0x20] sm:$0xff]
        %v461 = vld [vmem:[%s411 + $0x28] sm:$0xff]
        %v462 = vld [vmem:[%s411 + $0x30] sm:$0xff]
        %v463 = vld [vmem:[%s411 + $0x38] sm:$0xff]
        %v464 = vld [vmem:[%s411 + $0x40] sm:$0xff]
        %v465 = vld [vmem:[%s411 + $0x48] sm:$0xff]
        %v466 = vld [vmem:[%s411 + $0x50] sm:$0xff]
        %v467 = vld [vmem:[%s411 + $0x58] sm:$0xff]
        %v468 = vld [vmem:[%s411 + $0x60] sm:$0xff]
        %v469 = vld [vmem:[%s411 + $0x68] sm:$0xff]
        %v470 = vld [vmem:[%s411 + $0x70] sm:$0xff]
        %v471 = vld [vmem:[%s411 + $0x78] sm:$0xff]
        %v472 = vld [vmem:[%s411 + $0x80] sm:$0xff]
        %v473 = vld [vmem:[%s411 + $0x88] sm:$0xff]
        %v474 = vld [vmem:[%s411 + $0x90] sm:$0xff]
        %v475 = vld [vmem:[%s411 + $0x98] sm:$0xff]
        %v476 = vld [vmem:[%s411 + $0xa0] sm:$0xff]
        %v477 = vld [vmem:[%s411 + $0xa8] sm:$0xff]
        %v478 = vld [vmem:[%s411 + $0xb0] sm:$0xff]
        %v479 = vld [vmem:[%s411 + $0xb8] sm:$0xff]
        %v480 = vld [vmem:[%s1] sm:$0xf]
        %v481 = vld [vmem:[%s1 + $0x4] sm:$0xf]
        %v482 = vld [vmem:[%s1 + $0x8] sm:$0xf]
        %v483 = vld [vmem:[%s1 + $0xc] sm:$0xf]
        %v484 = vld [vmem:[%s1 + $0x10] sm:$0xf]
        %v485 = vld [vmem:[%s1 + $0x14] sm:$0xf]
        %v486 = vld [vmem:[%s1 + $0x18] sm:$0xf]
        %v487 = vld [vmem:[%s1 + $0x1c] sm:$0xf]
        %v488 = vld [vmem:[%s1 + $0x20] sm:$0xf]
        %v489 = vld [vmem:[%s1 + $0x24] sm:$0xf]
        %v490 = vld [vmem:[%s1 + $0x28] sm:$0xf]
        %v491 = vld [vmem:[%s1 + $0x2c] sm:$0xf]
        %v492 = vld [vmem:[%s1 + $0x30] sm:$0xf]
        %v493 = vld [vmem:[%s1 + $0x34] sm:$0xf]
        %v494 = vld [vmem:[%s1 + $0x38] sm:$0xf]
        %v495 = vld [vmem:[%s1 + $0x3c] sm:$0xf]
        %v496 = vld [vmem:[%s2] sm:$0xff]
        %v497 = vld [vmem:[%s2 + $0x8] sm:$0xff]
        %v498 = vld [vmem:[%s2 + $0x10] sm:$0xff]
        %v499 = vld [vmem:[%s2 + $0x18] sm:$0xff]
        %v500 = vld [vmem:[%s2 + $0x20] sm:$0xff]
        %v501 = vld [vmem:[%s2 + $0x28] sm:$0xff]
        %v502 = vld [vmem:[%s2 + $0x30] sm:$0xff]
        %v503 = vld [vmem:[%s2 + $0x38] sm:$0xff]
        %v504 = vld [vmem:[%s2 + $0x40] sm:$0xff]
        %v505 = vld [vmem:[%s2 + $0x48] sm:$0xff]
        %v506 = vld [vmem:[%s2 + $0x50] sm:$0xff]
        %v507 = vld [vmem:[%s2 + $0x58] sm:$0xff]
        %v508 = vld [vmem:[%s2 + $0x60] sm:$0xff]
        %v509 = vld [vmem:[%s2 + $0x68] sm:$0xff]
        %v510 = vld [vmem:[%s2 + $0x70] sm:$0xff]
        %v511 = vld [vmem:[%s2 + $0x78] sm:$0xff]
        %513 = vset.pattern.permute.xlu0 0
        %514 = vperm.xlu0 %513, %v496
        %v515 = vpop.permute.xlu0 %514
        %518 = vset.pattern.permute.xlu0 0
        %519 = vperm.xlu0 %518, %v497
        %v520 = vpop.permute.xlu0 %519
        %523 = vset.pattern.permute.xlu0 0
        %524 = vperm.xlu0 %523, %v498
        %v525 = vpop.permute.xlu0 %524
        %528 = vset.pattern.permute.xlu0 0
        %529 = vperm.xlu0 %528, %v499
        %v530 = vpop.permute.xlu0 %529
        %533 = vset.pattern.permute.xlu0 0
        %534 = vperm.xlu0 %533, %v500
        %v535 = vpop.permute.xlu0 %534
        %538 = vset.pattern.permute.xlu0 0
        %539 = vperm.xlu0 %538, %v501
        %v540 = vpop.permute.xlu0 %539
        %543 = vset.pattern.permute.xlu0 0
        %544 = vperm.xlu0 %543, %v502
        %v545 = vpop.permute.xlu0 %544
        %548 = vset.pattern.permute.xlu0 0
        %549 = vperm.xlu0 %548, %v503
        %v550 = vpop.permute.xlu0 %549
        %553 = vset.pattern.permute.xlu0 0
        %554 = vperm.xlu0 %553, %v504
        %v555 = vpop.permute.xlu0 %554
        %558 = vset.pattern.permute.xlu0 0
        %559 = vperm.xlu0 %558, %v505
        %v560 = vpop.permute.xlu0 %559
        %563 = vset.pattern.permute.xlu0 0
        %564 = vperm.xlu0 %563, %v506
        %v565 = vpop.permute.xlu0 %564
        %568 = vset.pattern.permute.xlu0 0
        %569 = vperm.xlu0 %568, %v507
        %v570 = vpop.permute.xlu0 %569
        %573 = vset.pattern.permute.xlu0 0
        %574 = vperm.xlu0 %573, %v508
        %v575 = vpop.permute.xlu0 %574
        %578 = vset.pattern.permute.xlu0 0
        %579 = vperm.xlu0 %578, %v509
        %v580 = vpop.permute.xlu0 %579
        %583 = vset.pattern.permute.xlu0 0
        %584 = vperm.xlu0 %583, %v510
        %v585 = vpop.permute.xlu0 %584
        %588 = vset.pattern.permute.xlu0 0
        %589 = vperm.xlu0 %588, %v511
        %v590 = vpop.permute.xlu0 %589
        %v608 = vunpack.c.l.b16 %v480
        %v609 = vunpack.c.l.b16 %v481
        %v610 = vunpack.c.l.b16 %v482
        %v611 = vunpack.c.l.b16 %v483
        %v612 = vunpack.c.l.b16 %v484
        %v613 = vunpack.c.l.b16 %v485
        %v614 = vunpack.c.l.b16 %v486
        %v615 = vunpack.c.l.b16 %v487
        %v616 = vunpack.c.l.b16 %v488
        %v617 = vunpack.c.l.b16 %v489
        %v618 = vunpack.c.l.b16 %v490
        %v619 = vunpack.c.l.b16 %v491
        %v620 = vunpack.c.l.b16 %v492
        %v621 = vunpack.c.l.b16 %v493
        %v622 = vunpack.c.l.b16 %v494
        %v623 = vunpack.c.l.b16 %v495
        %v624 = vpack.c.b16 %v609, %v608
        %v625 = vpack.c.b16 %v611, %v610
        %v626 = vpack.c.b16 %v613, %v612
        %v627 = vpack.c.b16 %v615, %v614
        %v628 = vpack.c.b16 %v617, %v616
        %v629 = vpack.c.b16 %v619, %v618
        %v630 = vpack.c.b16 %v621, %v620
        %v631 = vpack.c.b16 %v623, %v622
        %v656 = vunpack.c.l.b16 %v456
        %v657 = vunpack.c.h.b16 %v456
        %v658 = vunpack.c.l.b16 %v457
        %v659 = vunpack.c.h.b16 %v457
        %v660 = vunpack.c.l.b16 %v458
        %v661 = vunpack.c.h.b16 %v458
        %v662 = vunpack.c.l.b16 %v459
        %v663 = vunpack.c.h.b16 %v459
        %v664 = vunpack.c.l.b16 %v460
        %v665 = vunpack.c.h.b16 %v460
        %v666 = vunpack.c.l.b16 %v461
        %v667 = vunpack.c.h.b16 %v461
        %v668 = vunpack.c.l.b16 %v462
        %v669 = vunpack.c.h.b16 %v462
        %v670 = vunpack.c.l.b16 %v463
        %v671 = vunpack.c.h.b16 %v463
        %v672 = vunpack.c.l.b16 %v464
        %v673 = vunpack.c.h.b16 %v464
        %v674 = vunpack.c.l.b16 %v465
        %v675 = vunpack.c.h.b16 %v465
        %v676 = vunpack.c.l.b16 %v466
        %v677 = vunpack.c.h.b16 %v466
        %v678 = vunpack.c.l.b16 %v467
        %v679 = vunpack.c.h.b16 %v467
        %v680 = vunpack.c.l.b16 %v468
        %v681 = vunpack.c.h.b16 %v468
        %v682 = vunpack.c.l.b16 %v469
        %v683 = vunpack.c.h.b16 %v469
        %v684 = vunpack.c.l.b16 %v470
        %v685 = vunpack.c.h.b16 %v470
        %v686 = vunpack.c.l.b16 %v471
        %v687 = vunpack.c.h.b16 %v471
        %v688 = vunpack.c.l.b16 %v472
        %v689 = vunpack.c.h.b16 %v472
        %v690 = vunpack.c.l.b16 %v473
        %v691 = vunpack.c.h.b16 %v473
        %v692 = vunpack.c.l.b16 %v474
        %v693 = vunpack.c.h.b16 %v474
        %v694 = vunpack.c.l.b16 %v475
        %v695 = vunpack.c.h.b16 %v475
        %v696 = vunpack.c.l.b16 %v476
        %v697 = vunpack.c.h.b16 %v476
        %v698 = vunpack.c.l.b16 %v477
        %v699 = vunpack.c.h.b16 %v477
        %v700 = vunpack.c.l.b16 %v478
        %v701 = vunpack.c.h.b16 %v478
        %v702 = vunpack.c.l.b16 %v479
        %v703 = vunpack.c.h.b16 %v479
        %v704 = vpack.c.b16 %v664, %v656
        %v705 = vpack.c.b16 %v665, %v657
        %v706 = vpack.c.b16 %v666, %v658
        %v707 = vpack.c.b16 %v667, %v659
        %v708 = vpack.c.b16 %v668, %v660
        %v709 = vpack.c.b16 %v669, %v661
        %v710 = vpack.c.b16 %v670, %v662
        %v711 = vpack.c.b16 %v671, %v663
        %v712 = vpack.c.b16 %v680, %v672
        %v713 = vpack.c.b16 %v681, %v673
        %v714 = vpack.c.b16 %v682, %v674
        %v715 = vpack.c.b16 %v683, %v675
        %v716 = vpack.c.b16 %v684, %v676
        %v717 = vpack.c.b16 %v685, %v677
        %v718 = vpack.c.b16 %v686, %v678
        %v719 = vpack.c.b16 %v687, %v679
        %v720 = vpack.c.b16 %v696, %v688
        %v721 = vpack.c.b16 %v697, %v689
        %v722 = vpack.c.b16 %v698, %v690
        %v723 = vpack.c.b16 %v699, %v691
        %v724 = vpack.c.b16 %v700, %v692
        %v725 = vpack.c.b16 %v701, %v693
        %v726 = vpack.c.b16 %v702, %v694
        %v727 = vpack.c.b16 %v703, %v695
        %vm752 = vcmask 392192
        %v754 = vsel %vm752, %v624, 0
        %v757 = vsel %vm752, %v625, 0
        %v760 = vsel %vm752, %v626, 0
        %v763 = vsel %vm752, %v627, 0
        %v766 = vsel %vm752, %v628, 0
        %v769 = vsel %vm752, %v629, 0
        %v772 = vsel %vm752, %v630, 0
        %v775 = vsel %vm752, %v631, 0
        %777 = vmatprep.subr.bf16.mxu0 %v705
        %778 = vmatpush1.bf16.msra.mxu0 %v704
        %779 = vmatprep.subr.bf16.mxu0 %v713
        %780 = vmatpush1.bf16.msra.mxu0 %v712
        %781 = vmatprep.subr.bf16.mxu0 %v721
        %782 = vmatpush1.bf16.msra.mxu0 %v720
        %783 = vmatprep.subr.bf16.mxu0 0
        %784 = vmatpush1.bf16.msra.mxu0 0
        %785 = vmatprep.subr.bf16.mxu0 0
        %786 = vmatpush1.bf16.msra.mxu0 0
        %787 = vmatprep.subr.bf16.mxu0 0
        %788 = vmatpush1.bf16.msra.mxu0 0
        %789 = vmatprep.subr.bf16.mxu0 0
        %790 = vmatpush1.bf16.msra.mxu0 0
        %791 = vmatprep.subr.bf16.mxu0 0
        %792 = vmatpush1.bf16.msra.mxu0 0
        %793 = vmatprep.subr.bf16.mxu0 0
        %794 = vmatpush1.bf16.msra.mxu0 0
        %795 = vmatprep.subr.bf16.mxu0 0
        %796 = vmatpush1.bf16.msra.mxu0 0
        %797 = vmatprep.subr.bf16.mxu0 0
        %798 = vmatpush1.bf16.msra.mxu0 0
        %799 = vmatprep.subr.bf16.mxu0 0
        %800 = vmatpush1.bf16.msra.mxu0 0
        %801 = vmatprep.subr.bf16.mxu0 0
        %802 = vmatpush1.bf16.msra.mxu0 0
        %803 = vmatprep.subr.bf16.mxu0 0
        %804 = vmatpush1.bf16.msra.mxu0 0
        %805 = vmatprep.subr.bf16.mxu0 0
        %806 = vmatpush1.bf16.msra.mxu0 0
        %807 = vmatprep.subr.bf16.mxu0 0
        %808 = vmatpush1.bf16.msra.mxu0 0
        %809 = vmatprep.mubr.bf16.mxu0 0
        %810 = vmatmul.mubr.bf16.gmra.mrb[0].mxu0 %v754
        %v811 = vpop.f32.mrb[0].mxu0
        %v812 = vadd.f32 %v515, %v811
        %v813 = vpop.f32.mrb[0].mxu0
        %v814 = vadd.f32 %v515, %v813
        %v815 = vpop.f32.mrb[0].mxu0
        %v816 = vadd.f32 %v520, %v815
        %v817 = vpop.f32.mrb[0].mxu0
        %v818 = vadd.f32 %v520, %v817
        %819 = vmatprep.mubr.bf16.mxu0 0
        %820 = vmatmul.mubr.bf16.gmra.mrb[0].mxu0 %v757
        %v821 = vpop.f32.mrb[0].mxu0
        %v822 = vadd.f32 %v525, %v821
        %v823 = vpop.f32.mrb[0].mxu0
        %v824 = vadd.f32 %v525, %v823
        %v825 = vpop.f32.mrb[0].mxu0
        %v826 = vadd.f32 %v530, %v825
        %v827 = vpop.f32.mrb[0].mxu0
        %v828 = vadd.f32 %v530, %v827
        %829 = vmatprep.mubr.bf16.mxu0 0
        %830 = vmatmul.mubr.bf16.gmra.mrb[0].mxu0 %v760
        %v831 = vpop.f32.mrb[0].mxu0
        %v832 = vadd.f32 %v535, %v831
        %v833 = vpop.f32.mrb[0].mxu0
        %v834 = vadd.f32 %v535, %v833
        %v835 = vpop.f32.mrb[0].mxu0
        %v836 = vadd.f32 %v540, %v835
        %v837 = vpop.f32.mrb[0].mxu0
        %v838 = vadd.f32 %v540, %v837
        %839 = vmatprep.mubr.bf16.mxu0 0
        %840 = vmatmul.mubr.bf16.gmra.mrb[0].mxu0 %v763
        %v841 = vpop.f32.mrb[0].mxu0
        %v842 = vadd.f32 %v545, %v841
        %v843 = vpop.f32.mrb[0].mxu0
        %v844 = vadd.f32 %v545, %v843
        %v845 = vpop.f32.mrb[0].mxu0
        %v846 = vadd.f32 %v550, %v845
        %v847 = vpop.f32.mrb[0].mxu0
        %v848 = vadd.f32 %v550, %v847
        %849 = vmatprep.mubr.bf16.mxu0 0
        %850 = vmatmul.mubr.bf16.gmra.mrb[0].mxu0 %v766
        %v851 = vpop.f32.mrb[0].mxu0
        %v852 = vadd.f32 %v555, %v851
        %v853 = vpop.f32.mrb[0].mxu0
        %v854 = vadd.f32 %v555, %v853
        %v855 = vpop.f32.mrb[0].mxu0
        %v856 = vadd.f32 %v560, %v855
        %v857 = vpop.f32.mrb[0].mxu0
        %v858 = vadd.f32 %v560, %v857
        %859 = vmatprep.mubr.bf16.mxu0 0
        %860 = vmatmul.mubr.bf16.gmra.mrb[0].mxu0 %v769
        %v861 = vpop.f32.mrb[0].mxu0
        %v862 = vadd.f32 %v565, %v861
        %v863 = vpop.f32.mrb[0].mxu0
        %v864 = vadd.f32 %v565, %v863
        %v865 = vpop.f32.mrb[0].mxu0
        %v866 = vadd.f32 %v570, %v865
        %v867 = vpop.f32.mrb[0].mxu0
        %v868 = vadd.f32 %v570, %v867
        %869 = vmatprep.mubr.bf16.mxu0 0
        %870 = vmatmul.mubr.bf16.gmra.mrb[0].mxu0 %v772
        %v871 = vpop.f32.mrb[0].mxu0
        %v872 = vadd.f32 %v575, %v871
        %v873 = vpop.f32.mrb[0].mxu0
        %v874 = vadd.f32 %v575, %v873
        %v875 = vpop.f32.mrb[0].mxu0
        %v876 = vadd.f32 %v580, %v875
        %v877 = vpop.f32.mrb[0].mxu0
        %v878 = vadd.f32 %v580, %v877
        %879 = vmatprep.mubr.bf16.mxu0 0
        %880 = vmatmul.mubr.bf16.gmra.mrb[0].mxu0 %v775
        %v881 = vpop.f32.mrb[0].mxu0
        %v882 = vadd.f32 %v585, %v881
        %v883 = vpop.f32.mrb[0].mxu0
        %v884 = vadd.f32 %v585, %v883
        %v885 = vpop.f32.mrb[0].mxu0
        %v886 = vadd.f32 %v590, %v885
        %v887 = vpop.f32.mrb[0].mxu0
        %v888 = vadd.f32 %v590, %v887
        %889 = vdwg.mxu0
        %890 = vmatprep.subr.bf16.mxu0 %v707
        %891 = vmatpush1.bf16.msra.mxu0 %v706
        %892 = vmatprep.subr.bf16.mxu0 %v715
        %893 = vmatpush1.bf16.msra.mxu0 %v714
        %894 = vmatprep.subr.bf16.mxu0 %v723
        %895 = vmatpush1.bf16.msra.mxu0 %v722
        %896 = vmatprep.subr.bf16.mxu0 0
        %897 = vmatpush1.bf16.msra.mxu0 0
        %898 = vmatprep.subr.bf16.mxu0 0
        %899 = vmatpush1.bf16.msra.mxu0 0
        %900 = vmatprep.subr.bf16.mxu0 0
        %901 = vmatpush1.bf16.msra.mxu0 0
        %902 = vmatprep.subr.bf16.mxu0 0
        %903 = vmatpush1.bf16.msra.mxu0 0
        %904 = vmatprep.subr.bf16.mxu0 0
        %905 = vmatpush1.bf16.msra.mxu0 0
        %906 = vmatprep.subr.bf16.mxu0 0
        %907 = vmatpush1.bf16.msra.mxu0 0
        %908 = vmatprep.subr.bf16.mxu0 0
        %909 = vmatpush1.bf16.msra.mxu0 0
        %910 = vmatprep.subr.bf16.mxu0 0
        %911 = vmatpush1.bf16.msra.mxu0 0
        %912 = vmatprep.subr.bf16.mxu0 0
        %913 = vmatpush1.bf16.msra.mxu0 0
        %914 = vmatprep.subr.bf16.mxu0 0
        %915 = vmatpush1.bf16.msra.mxu0 0
        %916 = vmatprep.subr.bf16.mxu0 0
        %917 = vmatpush1.bf16.msra.mxu0 0
        %918 = vmatprep.subr.bf16.mxu0 0
        %919 = vmatpush1.bf16.msra.mxu0 0
        %920 = vmatprep.subr.bf16.mxu0 0
        %921 = vmatpush1.bf16.msra.mxu0 0
        %922 = vmatprep.mubr.bf16.mxu0 0
        %923 = vmatmul.mubr.bf16.gmra.mrb[0].mxu0 %v754
        %v924 = vpop.f32.mrb[0].mxu0
        %v925 = vadd.f32 %v515, %v924
        %v926 = vpop.f32.mrb[0].mxu0
        %v927 = vadd.f32 %v515, %v926
        %v928 = vpop.f32.mrb[0].mxu0
        %v929 = vadd.f32 %v520, %v928
        %v930 = vpop.f32.mrb[0].mxu0
        %v931 = vadd.f32 %v520, %v930
        %932 = vmatprep.mubr.bf16.mxu0 0
        %933 = vmatmul.mubr.bf16.gmra.mrb[0].mxu0 %v757
        %v934 = vpop.f32.mrb[0].mxu0
        %v935 = vadd.f32 %v525, %v934
        %v936 = vpop.f32.mrb[0].mxu0
        %v937 = vadd.f32 %v525, %v936
        %v938 = vpop.f32.mrb[0].mxu0
        %v939 = vadd.f32 %v530, %v938
        %v940 = vpop.f32.mrb[0].mxu0
        %v941 = vadd.f32 %v530, %v940
        %942 = vmatprep.mubr.bf16.mxu0 0
        %943 = vmatmul.mubr.bf16.gmra.mrb[0].mxu0 %v760
        %v944 = vpop.f32.mrb[0].mxu0
        %v945 = vadd.f32 %v535, %v944
        %v946 = vpop.f32.mrb[0].mxu0
        %v947 = vadd.f32 %v535, %v946
        %v948 = vpop.f32.mrb[0].mxu0
        %v949 = vadd.f32 %v540, %v948
        %v950 = vpop.f32.mrb[0].mxu0
        %v951 = vadd.f32 %v540, %v950
        %952 = vmatprep.mubr.bf16.mxu0 0
        %953 = vmatmul.mubr.bf16.gmra.mrb[0].mxu0 %v763
        %v954 = vpop.f32.mrb[0].mxu0
        %v955 = vadd.f32 %v545, %v954
        %v956 = vpop.f32.mrb[0].mxu0
        %v957 = vadd.f32 %v545, %v956
        %v958 = vpop.f32.mrb[0].mxu0
        %v959 = vadd.f32 %v550, %v958
        %v960 = vpop.f32.mrb[0].mxu0
        %v961 = vadd.f32 %v550, %v960
        %962 = vmatprep.mubr.bf16.mxu0 0
        %963 = vmatmul.mubr.bf16.gmra.mrb[0].mxu0 %v766
        %v964 = vpop.f32.mrb[0].mxu0
        %v965 = vadd.f32 %v555, %v964
        %v966 = vpop.f32.mrb[0].mxu0
        %v967 = vadd.f32 %v555, %v966
        %v968 = vpop.f32.mrb[0].mxu0
        %v969 = vadd.f32 %v560, %v968
        %v970 = vpop.f32.mrb[0].mxu0
        %v971 = vadd.f32 %v560, %v970
        %972 = vmatprep.mubr.bf16.mxu0 0
        %973 = vmatmul.mubr.bf16.gmra.mrb[0].mxu0 %v769
        %v974 = vpop.f32.mrb[0].mxu0
        %v975 = vadd.f32 %v565, %v974
        %v976 = vpop.f32.mrb[0].mxu0
        %v977 = vadd.f32 %v565, %v976
        %v978 = vpop.f32.mrb[0].mxu0
        %v979 = vadd.f32 %v570, %v978
        %v980 = vpop.f32.mrb[0].mxu0
        %v981 = vadd.f32 %v570, %v980
        %982 = vmatprep.mubr.bf16.mxu0 0
        %983 = vmatmul.mubr.bf16.gmra.mrb[0].mxu0 %v772
        %v984 = vpop.f32.mrb[0].mxu0
        %v985 = vadd.f32 %v575, %v984
        %v986 = vpop.f32.mrb[0].mxu0
        %v987 = vadd.f32 %v575, %v986
        %v988 = vpop.f32.mrb[0].mxu0
        %v989 = vadd.f32 %v580, %v988
        %v990 = vpop.f32.mrb[0].mxu0
        %v991 = vadd.f32 %v580, %v990
        %992 = vmatprep.mubr.bf16.mxu0 0
        %993 = vmatmul.mubr.bf16.gmra.mrb[0].mxu0 %v775
        %v994 = vpop.f32.mrb[0].mxu0
        %v995 = vadd.f32 %v585, %v994
        %v996 = vpop.f32.mrb[0].mxu0
        %v997 = vadd.f32 %v585, %v996
        %v998 = vpop.f32.mrb[0].mxu0
        %v999 = vadd.f32 %v590, %v998
        %v1000 = vpop.f32.mrb[0].mxu0
        %v1001 = vadd.f32 %v590, %v1000
        %1002 = vdwg.mxu0
        %1003 = vmatprep.subr.bf16.mxu0 %v709
        %1004 = vmatpush1.bf16.msra.mxu0 %v708
        %1005 = vmatprep.subr.bf16.mxu0 %v717
        %1006 = vmatpush1.bf16.msra.mxu0 %v716
        %1007 = vmatprep.subr.bf16.mxu0 %v725
        %1008 = vmatpush1.bf16.msra.mxu0 %v724
        %1009 = vmatprep.subr.bf16.mxu0 0
        %1010 = vmatpush1.bf16.msra.mxu0 0
        %1011 = vmatprep.subr.bf16.mxu0 0
        %1012 = vmatpush1.bf16.msra.mxu0 0
        %1013 = vmatprep.subr.bf16.mxu0 0
        %1014 = vmatpush1.bf16.msra.mxu0 0
        %1015 = vmatprep.subr.bf16.mxu0 0
        %1016 = vmatpush1.bf16.msra.mxu0 0
        %1017 = vmatprep.subr.bf16.mxu0 0
        %1018 = vmatpush1.bf16.msra.mxu0 0
        %1019 = vmatprep.subr.bf16.mxu0 0
        %1020 = vmatpush1.bf16.msra.mxu0 0
        %1021 = vmatprep.subr.bf16.mxu0 0
        %1022 = vmatpush1.bf16.msra.mxu0 0
        %1023 = vmatprep.subr.bf16.mxu0 0
        %1024 = vmatpush1.bf16.msra.mxu0 0
        %1025 = vmatprep.subr.bf16.mxu0 0
        %1026 = vmatpush1.bf16.msra.mxu0 0
        %1027 = vmatprep.subr.bf16.mxu0 0
        %1028 = vmatpush1.bf16.msra.mxu0 0
        %1029 = vmatprep.subr.bf16.mxu0 0
        %1030 = vmatpush1.bf16.msra.mxu0 0
        %1031 = vmatprep.subr.bf16.mxu0 0
        %1032 = vmatpush1.bf16.msra.mxu0 0
        %1033 = vmatprep.subr.bf16.mxu0 0
        %1034 = vmatpush1.bf16.msra.mxu0 0
        %1035 = vmatprep.mubr.bf16.mxu0 0
        %1036 = vmatmul.mubr.bf16.gmra.mrb[0].mxu0 %v754
        %v1037 = vpop.f32.mrb[0].mxu0
        %v1038 = vadd.f32 %v515, %v1037
        %v1039 = vpop.f32.mrb[0].mxu0
        %v1040 = vadd.f32 %v515, %v1039
        %v1041 = vpop.f32.mrb[0].mxu0
        %v1042 = vadd.f32 %v520, %v1041
        %v1043 = vpop.f32.mrb[0].mxu0
        %v1044 = vadd.f32 %v520, %v1043
        %1045 = vmatprep.mubr.bf16.mxu0 0
        %1046 = vmatmul.mubr.bf16.gmra.mrb[0].mxu0 %v757
        %v1047 = vpop.f32.mrb[0].mxu0
        %v1048 = vadd.f32 %v525, %v1047
        %v1049 = vpop.f32.mrb[0].mxu0
        %v1050 = vadd.f32 %v525, %v1049
        %v1051 = vpop.f32.mrb[0].mxu0
        %v1052 = vadd.f32 %v530, %v1051
        %v1053 = vpop.f32.mrb[0].mxu0
        %v1054 = vadd.f32 %v530, %v1053
        %1055 = vmatprep.mubr.bf16.mxu0 0
        %1056 = vmatmul.mubr.bf16.gmra.mrb[0].mxu0 %v760
        %v1057 = vpop.f32.mrb[0].mxu0
        %v1058 = vadd.f32 %v535, %v1057
        %v1059 = vpop.f32.mrb[0].mxu0
        %v1060 = vadd.f32 %v535, %v1059
        %v1061 = vpop.f32.mrb[0].mxu0
        %v1062 = vadd.f32 %v540, %v1061
        %v1063 = vpop.f32.mrb[0].mxu0
        %v1064 = vadd.f32 %v540, %v1063
        %1065 = vmatprep.mubr.bf16.mxu0 0
        %1066 = vmatmul.mubr.bf16.gmra.mrb[0].mxu0 %v763
        %v1067 = vpop.f32.mrb[0].mxu0
        %v1068 = vadd.f32 %v545, %v1067
        %v1069 = vpop.f32.mrb[0].mxu0
        %v1070 = vadd.f32 %v545, %v1069
        %v1071 = vpop.f32.mrb[0].mxu0
        %v1072 = vadd.f32 %v550, %v1071
        %v1073 = vpop.f32.mrb[0].mxu0
        %v1074 = vadd.f32 %v550, %v1073
        %1075 = vmatprep.mubr.bf16.mxu0 0
        %1076 = vmatmul.mubr.bf16.gmra.mrb[0].mxu0 %v766
        %v1077 = vpop.f32.mrb[0].mxu0
        %v1078 = vadd.f32 %v555, %v1077
        %v1079 = vpop.f32.mrb[0].mxu0
        %v1080 = vadd.f32 %v555, %v1079
        %v1081 = vpop.f32.mrb[0].mxu0
        %v1082 = vadd.f32 %v560, %v1081
        %v1083 = vpop.f32.mrb[0].mxu0
        %v1084 = vadd.f32 %v560, %v1083
        %1085 = vmatprep.mubr.bf16.mxu0 0
        %1086 = vmatmul.mubr.bf16.gmra.mrb[0].mxu0 %v769
        %v1087 = vpop.f32.mrb[0].mxu0
        %v1088 = vadd.f32 %v565, %v1087
        %v1089 = vpop.f32.mrb[0].mxu0
        %v1090 = vadd.f32 %v565, %v1089
        %v1091 = vpop.f32.mrb[0].mxu0
        %v1092 = vadd.f32 %v570, %v1091
        %v1093 = vpop.f32.mrb[0].mxu0
        %v1094 = vadd.f32 %v570, %v1093
        %1095 = vmatprep.mubr.bf16.mxu0 0
        %1096 = vmatmul.mubr.bf16.gmra.mrb[0].mxu0 %v772
        %v1097 = vpop.f32.mrb[0].mxu0
        %v1098 = vadd.f32 %v575, %v1097
        %v1099 = vpop.f32.mrb[0].mxu0
        %v1100 = vadd.f32 %v575, %v1099
        %v1101 = vpop.f32.mrb[0].mxu0
        %v1102 = vadd.f32 %v580, %v1101
        %v1103 = vpop.f32.mrb[0].mxu0
        %v1104 = vadd.f32 %v580, %v1103
        %1105 = vmatprep.mubr.bf16.mxu0 0
        %1106 = vmatmul.mubr.bf16.gmra.mrb[0].mxu0 %v775
        %v1107 = vpop.f32.mrb[0].mxu0
        %v1108 = vadd.f32 %v585, %v1107
        %v1109 = vpop.f32.mrb[0].mxu0
        %v1110 = vadd.f32 %v585, %v1109
        %v1111 = vpop.f32.mrb[0].mxu0
        %v1112 = vadd.f32 %v590, %v1111
        %v1113 = vpop.f32.mrb[0].mxu0
        %v1114 = vadd.f32 %v590, %v1113
        %1115 = vdwg.mxu0
        %1116 = vmatprep.subr.bf16.mxu0 %v711
        %1117 = vmatpush1.bf16.msra.mxu0 %v710
        %1118 = vmatprep.subr.bf16.mxu0 %v719
        %1119 = vmatpush1.bf16.msra.mxu0 %v718
        %1120 = vmatprep.subr.bf16.mxu0 %v727
        %1121 = vmatpush1.bf16.msra.mxu0 %v726
        %1122 = vmatprep.subr.bf16.mxu0 0
        %1123 = vmatpush1.bf16.msra.mxu0 0
        %1124 = vmatprep.subr.bf16.mxu0 0
        %1125 = vmatpush1.bf16.msra.mxu0 0
        %1126 = vmatprep.subr.bf16.mxu0 0
        %1127 = vmatpush1.bf16.msra.mxu0 0
        %1128 = vmatprep.subr.bf16.mxu0 0
        %1129 = vmatpush1.bf16.msra.mxu0 0
        %1130 = vmatprep.subr.bf16.mxu0 0
        %1131 = vmatpush1.bf16.msra.mxu0 0
        %1132 = vmatprep.subr.bf16.mxu0 0
        %1133 = vmatpush1.bf16.msra.mxu0 0
        %1134 = vmatprep.subr.bf16.mxu0 0
        %1135 = vmatpush1.bf16.msra.mxu0 0
        %1136 = vmatprep.subr.bf16.mxu0 0
        %1137 = vmatpush1.bf16.msra.mxu0 0
        %1138 = vmatprep.subr.bf16.mxu0 0
        %1139 = vmatpush1.bf16.msra.mxu0 0
        %1140 = vmatprep.subr.bf16.mxu0 0
        %1141 = vmatpush1.bf16.msra.mxu0 0
        %1142 = vmatprep.subr.bf16.mxu0 0
        %1143 = vmatpush1.bf16.msra.mxu0 0
        %1144 = vmatprep.subr.bf16.mxu0 0
        %1145 = vmatpush1.bf16.msra.mxu0 0
        %1146 = vmatprep.subr.bf16.mxu0 0
        %1147 = vmatpush1.bf16.msra.mxu0 0
        %1148 = vmatprep.mubr.bf16.mxu0 0
        %1149 = vmatmul.mubr.bf16.gmra.mrb[0].mxu0 %v754
        %v1150 = vpop.f32.mrb[0].mxu0
        %v1151 = vadd.f32 %v515, %v1150
        %v1152 = vpop.f32.mrb[0].mxu0
        %v1153 = vadd.f32 %v515, %v1152
        %v1154 = vpop.f32.mrb[0].mxu0
        %v1155 = vadd.f32 %v520, %v1154
        %v1156 = vpop.f32.mrb[0].mxu0
        %v1157 = vadd.f32 %v520, %v1156
        %1158 = vmatprep.mubr.bf16.mxu0 0
        %1159 = vmatmul.mubr.bf16.gmra.mrb[0].mxu0 %v757
        %v1160 = vpop.f32.mrb[0].mxu0
        %v1161 = vadd.f32 %v525, %v1160
        %v1162 = vpop.f32.mrb[0].mxu0
        %v1163 = vadd.f32 %v525, %v1162
        %v1164 = vpop.f32.mrb[0].mxu0
        %v1165 = vadd.f32 %v530, %v1164
        %v1166 = vpop.f32.mrb[0].mxu0
        %v1167 = vadd.f32 %v530, %v1166
        %1168 = vmatprep.mubr.bf16.mxu0 0
        %1169 = vmatmul.mubr.bf16.gmra.mrb[0].mxu0 %v760
        %v1170 = vpop.f32.mrb[0].mxu0
        %v1171 = vadd.f32 %v535, %v1170
        %v1172 = vpop.f32.mrb[0].mxu0
        %v1173 = vadd.f32 %v535, %v1172
        %v1174 = vpop.f32.mrb[0].mxu0
        %v1175 = vadd.f32 %v540, %v1174
        %v1176 = vpop.f32.mrb[0].mxu0
        %v1177 = vadd.f32 %v540, %v1176
        %1178 = vmatprep.mubr.bf16.mxu0 0
        %1179 = vmatmul.mubr.bf16.gmra.mrb[0].mxu0 %v763
        %v1180 = vpop.f32.mrb[0].mxu0
        %v1181 = vadd.f32 %v545, %v1180
        %v1182 = vpop.f32.mrb[0].mxu0
        %v1183 = vadd.f32 %v545, %v1182
        %v1184 = vpop.f32.mrb[0].mxu0
        %v1185 = vadd.f32 %v550, %v1184
        %v1186 = vpop.f32.mrb[0].mxu0
        %v1187 = vadd.f32 %v550, %v1186
        %1188 = vmatprep.mubr.bf16.mxu0 0
        %1189 = vmatmul.mubr.bf16.gmra.mrb[0].mxu0 %v766
        %v1190 = vpop.f32.mrb[0].mxu0
        %v1191 = vadd.f32 %v555, %v1190
        %v1192 = vpop.f32.mrb[0].mxu0
        %v1193 = vadd.f32 %v555, %v1192
        %v1194 = vpop.f32.mrb[0].mxu0
        %v1195 = vadd.f32 %v560, %v1194
        %v1196 = vpop.f32.mrb[0].mxu0
        %v1197 = vadd.f32 %v560, %v1196
        %1198 = vmatprep.mubr.bf16.mxu0 0
        %1199 = vmatmul.mubr.bf16.gmra.mrb[0].mxu0 %v769
        %v1200 = vpop.f32.mrb[0].mxu0
        %v1201 = vadd.f32 %v565, %v1200
        %v1202 = vpop.f32.mrb[0].mxu0
        %v1203 = vadd.f32 %v565, %v1202
        %v1204 = vpop.f32.mrb[0].mxu0
        %v1205 = vadd.f32 %v570, %v1204
        %v1206 = vpop.f32.mrb[0].mxu0
        %v1207 = vadd.f32 %v570, %v1206
        %1208 = vmatprep.mubr.bf16.mxu0 0
        %1209 = vmatmul.mubr.bf16.gmra.mrb[0].mxu0 %v772
        %v1210 = vpop.f32.mrb[0].mxu0
        %v1211 = vadd.f32 %v575, %v1210
        %v1212 = vpop.f32.mrb[0].mxu0
        %v1213 = vadd.f32 %v575, %v1212
        %v1214 = vpop.f32.mrb[0].mxu0
        %v1215 = vadd.f32 %v580, %v1214
        %v1216 = vpop.f32.mrb[0].mxu0
        %v1217 = vadd.f32 %v580, %v1216
        %1218 = vmatprep.mubr.bf16.mxu0 0
        %1219 = vmatmul.mubr.bf16.gmra.mrb[0].mxu0 %v775
        %v1220 = vpop.f32.mrb[0].mxu0
        %v1221 = vadd.f32 %v585, %v1220
        %v1222 = vpop.f32.mrb[0].mxu0
        %v1223 = vadd.f32 %v585, %v1222
        %v1224 = vpop.f32.mrb[0].mxu0
        %v1225 = vadd.f32 %v590, %v1224
        %v1226 = vpop.f32.mrb[0].mxu0
        %v1227 = vadd.f32 %v590, %v1226
        %1228 = vdwg.mxu0
        %vm1229 = vcmp.gt.f32.partialorder %v832, 0.0
        %vm1230 = vcmp.gt.f32.partialorder %v834, 0.0
        %vm1231 = vcmp.gt.f32.partialorder %v945, 0.0
        %vm1232 = vcmp.gt.f32.partialorder %v947, 0.0
        %vm1233 = vcmp.gt.f32.partialorder %v1058, 0.0
        %vm1234 = vcmp.gt.f32.partialorder %v1060, 0.0
        %vm1235 = vcmp.gt.f32.partialorder %v1171, 0.0
        %vm1236 = vcmp.gt.f32.partialorder %v1173, 0.0
        %vm1237 = vcmp.gt.f32.partialorder %v836, 0.0
        %vm1238 = vcmp.gt.f32.partialorder %v838, 0.0
        %vm1239 = vcmp.gt.f32.partialorder %v949, 0.0
        %vm1240 = vcmp.gt.f32.partialorder %v951, 0.0
        %vm1241 = vcmp.gt.f32.partialorder %v1062, 0.0
        %vm1242 = vcmp.gt.f32.partialorder %v1064, 0.0
        %vm1243 = vcmp.gt.f32.partialorder %v1175, 0.0
        %vm1244 = vcmp.gt.f32.partialorder %v1177, 0.0
        %vm1245 = vcmp.gt.f32.partialorder %v842, 0.0
        %vm1246 = vcmp.gt.f32.partialorder %v844, 0.0
        %vm1247 = vcmp.gt.f32.partialorder %v955, 0.0
        %vm1248 = vcmp.gt.f32.partialorder %v957, 0.0
        %vm1249 = vcmp.gt.f32.partialorder %v1068, 0.0
        %vm1250 = vcmp.gt.f32.partialorder %v1070, 0.0
        %vm1251 = vcmp.gt.f32.partialorder %v1181, 0.0
        %vm1252 = vcmp.gt.f32.partialorder %v1183, 0.0
        %vm1253 = vcmp.gt.f32.partialorder %v846, 0.0
        %vm1254 = vcmp.gt.f32.partialorder %v848, 0.0
        %vm1255 = vcmp.gt.f32.partialorder %v959, 0.0
        %vm1256 = vcmp.gt.f32.partialorder %v961, 0.0
        %vm1257 = vcmp.gt.f32.partialorder %v1072, 0.0
        %vm1258 = vcmp.gt.f32.partialorder %v1074, 0.0
        %vm1259 = vcmp.gt.f32.partialorder %v1185, 0.0
        %vm1260 = vcmp.gt.f32.partialorder %v1187, 0.0
        %vm1261 = vcmp.gt.f32.partialorder %v852, 0.0
        %vm1262 = vcmp.gt.f32.partialorder %v854, 0.0
        %vm1263 = vcmp.gt.f32.partialorder %v965, 0.0
        %vm1264 = vcmp.gt.f32.partialorder %v967, 0.0
        %vm1265 = vcmp.gt.f32.partialorder %v1078, 0.0
        %vm1266 = vcmp.gt.f32.partialorder %v1080, 0.0
        %vm1267 = vcmp.gt.f32.partialorder %v1191, 0.0
        %vm1268 = vcmp.gt.f32.partialorder %v1193, 0.0
        %vm1269 = vcmp.gt.f32.partialorder %v856, 0.0
        %vm1270 = vcmp.gt.f32.partialorder %v858, 0.0
        %vm1271 = vcmp.gt.f32.partialorder %v969, 0.0
        %vm1272 = vcmp.gt.f32.partialorder %v971, 0.0
        %vm1273 = vcmp.gt.f32.partialorder %v1082, 0.0
        %vm1274 = vcmp.gt.f32.partialorder %v1084, 0.0
        %vm1275 = vcmp.gt.f32.partialorder %v1195, 0.0
        %vm1276 = vcmp.gt.f32.partialorder %v1197, 0.0
        %vm1277 = vcmp.gt.f32.partialorder %v862, 0.0
        %vm1278 = vcmp.gt.f32.partialorder %v864, 0.0
        %vm1279 = vcmp.gt.f32.partialorder %v975, 0.0
        %vm1280 = vcmp.gt.f32.partialorder %v977, 0.0
        %vm1281 = vcmp.gt.f32.partialorder %v1088, 0.0
        %vm1282 = vcmp.gt.f32.partialorder %v1090, 0.0
        %vm1283 = vcmp.gt.f32.partialorder %v1201, 0.0
        %vm1284 = vcmp.gt.f32.partialorder %v1203, 0.0
        %vm1285 = vcmp.gt.f32.partialorder %v866, 0.0
        %vm1286 = vcmp.gt.f32.partialorder %v868, 0.0
        %vm1287 = vcmp.gt.f32.partialorder %v979, 0.0
        %vm1288 = vcmp.gt.f32.partialorder %v981, 0.0
        %vm1289 = vcmp.gt.f32.partialorder %v1092, 0.0
        %vm1290 = vcmp.gt.f32.partialorder %v1094, 0.0
        %vm1291 = vcmp.gt.f32.partialorder %v1205, 0.0
        %vm1292 = vcmp.gt.f32.partialorder %v1207, 0.0
        %vm1293 = vcmp.gt.f32.partialorder %v872, 0.0
        %vm1294 = vcmp.gt.f32.partialorder %v874, 0.0
        %vm1295 = vcmp.gt.f32.partialorder %v985, 0.0
        %vm1296 = vcmp.gt.f32.partialorder %v987, 0.0
        %vm1297 = vcmp.gt.f32.partialorder %v1098, 0.0
        %vm1298 = vcmp.gt.f32.partialorder %v1100, 0.0
        %vm1299 = vcmp.gt.f32.partialorder %v1211, 0.0
        %vm1300 = vcmp.gt.f32.partialorder %v1213, 0.0
        %vm1301 = vcmp.gt.f32.partialorder %v876, 0.0
        %vm1302 = vcmp.gt.f32.partialorder %v878, 0.0
        %vm1303 = vcmp.gt.f32.partialorder %v989, 0.0
        %vm1304 = vcmp.gt.f32.partialorder %v991, 0.0
        %vm1305 = vcmp.gt.f32.partialorder %v1102, 0.0
        %vm1306 = vcmp.gt.f32.partialorder %v1104, 0.0
        %vm1307 = vcmp.gt.f32.partialorder %v1215, 0.0
        %vm1308 = vcmp.gt.f32.partialorder %v1217, 0.0
        %vm1309 = vcmp.gt.f32.partialorder %v882, 0.0
        %vm1310 = vcmp.gt.f32.partialorder %v884, 0.0
        %vm1311 = vcmp.gt.f32.partialorder %v995, 0.0
        %vm1312 = vcmp.gt.f32.partialorder %v997, 0.0
        %vm1313 = vcmp.gt.f32.partialorder %v1108, 0.0
        %vm1314 = vcmp.gt.f32.partialorder %v1110, 0.0
        %vm1315 = vcmp.gt.f32.partialorder %v1221, 0.0
        %vm1316 = vcmp.gt.f32.partialorder %v1223, 0.0
        %vm1317 = vcmp.gt.f32.partialorder %v886, 0.0
        %vm1318 = vcmp.gt.f32.partialorder %v888, 0.0
        %vm1319 = vcmp.gt.f32.partialorder %v999, 0.0
        %vm1320 = vcmp.gt.f32.partialorder %v1001, 0.0
        %vm1321 = vcmp.gt.f32.partialorder %v1112, 0.0
        %vm1322 = vcmp.gt.f32.partialorder %v1114, 0.0
        %vm1323 = vcmp.gt.f32.partialorder %v1225, 0.0
        %vm1324 = vcmp.gt.f32.partialorder %v1227, 0.0
        %v1325 = vmul.f32 %v832, 0.2
        %v1326 = vmul.f32 %v834, 0.2
        %v1327 = vmul.f32 %v945, 0.2
        %v1328 = vmul.f32 %v947, 0.2
        %v1329 = vmul.f32 %v1058, 0.2
        %v1330 = vmul.f32 %v1060, 0.2
        %v1331 = vmul.f32 %v1171, 0.2
        %v1332 = vmul.f32 %v1173, 0.2
        %v1333 = vmul.f32 %v836, 0.2
        %v1334 = vmul.f32 %v838, 0.2
        %v1335 = vmul.f32 %v949, 0.2
        %v1336 = vmul.f32 %v951, 0.2
        %v1337 = vmul.f32 %v1062, 0.2
        %v1338 = vmul.f32 %v1064, 0.2
        %v1339 = vmul.f32 %v1175, 0.2
        %v1340 = vmul.f32 %v1177, 0.2
        %v1341 = vmul.f32 %v842, 0.2
        %v1342 = vmul.f32 %v844, 0.2
        %v1343 = vmul.f32 %v955, 0.2
        %v1344 = vmul.f32 %v957, 0.2
        %v1345 = vmul.f32 %v1068, 0.2
        %v1346 = vmul.f32 %v1070, 0.2
        %v1347 = vmul.f32 %v1181, 0.2
        %v1348 = vmul.f32 %v1183, 0.2
        %v1349 = vmul.f32 %v846, 0.2
        %v1350 = vmul.f32 %v848, 0.2
        %v1351 = vmul.f32 %v959, 0.2
        %v1352 = vmul.f32 %v961, 0.2
        %v1353 = vmul.f32 %v1072, 0.2
        %v1354 = vmul.f32 %v1074, 0.2
        %v1355 = vmul.f32 %v1185, 0.2
        %v1356 = vmul.f32 %v1187, 0.2
        %v1357 = vmul.f32 %v852, 0.2
        %v1358 = vmul.f32 %v854, 0.2
        %v1359 = vmul.f32 %v965, 0.2
        %v1360 = vmul.f32 %v967, 0.2
        %v1361 = vmul.f32 %v1078, 0.2
        %v1362 = vmul.f32 %v1080, 0.2
        %v1363 = vmul.f32 %v1191, 0.2
        %v1364 = vmul.f32 %v1193, 0.2
        %v1365 = vmul.f32 %v856, 0.2
        %v1366 = vmul.f32 %v858, 0.2
        %v1367 = vmul.f32 %v969, 0.2
        %v1368 = vmul.f32 %v971, 0.2
        %v1369 = vmul.f32 %v1082, 0.2
        %v1370 = vmul.f32 %v1084, 0.2
        %v1371 = vmul.f32 %v1195, 0.2
        %v1372 = vmul.f32 %v1197, 0.2
        %v1373 = vmul.f32 %v862, 0.2
        %v1374 = vmul.f32 %v864, 0.2
        %v1375 = vmul.f32 %v975, 0.2
        %v1376 = vmul.f32 %v977, 0.2
        %v1377 = vmul.f32 %v1088, 0.2
        %v1378 = vmul.f32 %v1090, 0.2
        %v1379 = vmul.f32 %v1201, 0.2
        %v1380 = vmul.f32 %v1203, 0.2
        %v1381 = vmul.f32 %v866, 0.2
        %v1382 = vmul.f32 %v868, 0.2
        %v1383 = vmul.f32 %v979, 0.2
        %v1384 = vmul.f32 %v981, 0.2
        %v1385 = vmul.f32 %v1092, 0.2
        %v1386 = vmul.f32 %v1094, 0.2
        %v1387 = vmul.f32 %v1205, 0.2
        %v1388 = vmul.f32 %v1207, 0.2
        %v1389 = vmul.f32 %v872, 0.2
        %v1390 = vmul.f32 %v874, 0.2
        %v1391 = vmul.f32 %v985, 0.2
        %v1392 = vmul.f32 %v987, 0.2
        %v1393 = vmul.f32 %v1098, 0.2
        %v1394 = vmul.f32 %v1100, 0.2
        %v1395 = vmul.f32 %v1211, 0.2
        %v1396 = vmul.f32 %v1213, 0.2
        %v1397 = vmul.f32 %v876, 0.2
        %v1398 = vmul.f32 %v878, 0.2
        %v1399 = vmul.f32 %v989, 0.2
        %v1400 = vmul.f32 %v991, 0.2
        %v1401 = vmul.f32 %v1102, 0.2
        %v1402 = vmul.f32 %v1104, 0.2
        %v1403 = vmul.f32 %v1215, 0.2
        %v1404 = vmul.f32 %v1217, 0.2
        %v1405 = vmul.f32 %v882, 0.2
        %v1406 = vmul.f32 %v884, 0.2
        %v1407 = vmul.f32 %v995, 0.2
        %v1408 = vmul.f32 %v997, 0.2
        %v1409 = vmul.f32 %v1108, 0.2
        %v1410 = vmul.f32 %v1110, 0.2
        %v1411 = vmul.f32 %v1221, 0.2
        %v1412 = vmul.f32 %v1223, 0.2
        %v1413 = vmul.f32 %v886, 0.2
        %v1414 = vmul.f32 %v888, 0.2
        %v1415 = vmul.f32 %v999, 0.2
        %v1416 = vmul.f32 %v1001, 0.2
        %v1417 = vmul.f32 %v1112, 0.2
        %v1418 = vmul.f32 %v1114, 0.2
        %v1419 = vmul.f32 %v1225, 0.2
        %v1420 = vmul.f32 %v1227, 0.2
        %v1421 = vsel %vm1229, %v832, %v1325
        %v1422 = vsel %vm1230, %v834, %v1326
        %v1423 = vsel %vm1231, %v945, %v1327
        %v1424 = vsel %vm1232, %v947, %v1328
        %v1425 = vsel %vm1233, %v1058, %v1329
        %v1426 = vsel %vm1234, %v1060, %v1330
        %v1427 = vsel %vm1235, %v1171, %v1331
        %v1428 = vsel %vm1236, %v1173, %v1332
        %v1429 = vsel %vm1237, %v836, %v1333
        %v1430 = vsel %vm1238, %v838, %v1334
        %v1431 = vsel %vm1239, %v949, %v1335
        %v1432 = vsel %vm1240, %v951, %v1336
        %v1433 = vsel %vm1241, %v1062, %v1337
        %v1434 = vsel %vm1242, %v1064, %v1338
        %v1435 = vsel %vm1243, %v1175, %v1339
        %v1436 = vsel %vm1244, %v1177, %v1340
        %v1437 = vsel %vm1245, %v842, %v1341
        %v1438 = vsel %vm1246, %v844, %v1342
        %v1439 = vsel %vm1247, %v955, %v1343
        %v1440 = vsel %vm1248, %v957, %v1344
        %v1441 = vsel %vm1249, %v1068, %v1345
        %v1442 = vsel %vm1250, %v1070, %v1346
        %v1443 = vsel %vm1251, %v1181, %v1347
        %v1444 = vsel %vm1252, %v1183, %v1348
        %v1445 = vsel %vm1253, %v846, %v1349
        %v1446 = vsel %vm1254, %v848, %v1350
        %v1447 = vsel %vm1255, %v959, %v1351
        %v1448 = vsel %vm1256, %v961, %v1352
        %v1449 = vsel %vm1257, %v1072, %v1353
        %v1450 = vsel %vm1258, %v1074, %v1354
        %v1451 = vsel %vm1259, %v1185, %v1355
        %v1452 = vsel %vm1260, %v1187, %v1356
        %v1453 = vsel %vm1261, %v852, %v1357
        %v1454 = vsel %vm1262, %v854, %v1358
        %v1455 = vsel %vm1263, %v965, %v1359
        %v1456 = vsel %vm1264, %v967, %v1360
        %v1457 = vsel %vm1265, %v1078, %v1361
        %v1458 = vsel %vm1266, %v1080, %v1362
        %v1459 = vsel %vm1267, %v1191, %v1363
        %v1460 = vsel %vm1268, %v1193, %v1364
        %v1461 = vsel %vm1269, %v856, %v1365
        %v1462 = vsel %vm1270, %v858, %v1366
        %v1463 = vsel %vm1271, %v969, %v1367
        %v1464 = vsel %vm1272, %v971, %v1368
        %v1465 = vsel %vm1273, %v1082, %v1369
        %v1466 = vsel %vm1274, %v1084, %v1370
        %v1467 = vsel %vm1275, %v1195, %v1371
        %v1468 = vsel %vm1276, %v1197, %v1372
        %v1469 = vsel %vm1277, %v862, %v1373
        %v1470 = vsel %vm1278, %v864, %v1374
        %v1471 = vsel %vm1279, %v975, %v1375
        %v1472 = vsel %vm1280, %v977, %v1376
        %v1473 = vsel %vm1281, %v1088, %v1377
        %v1474 = vsel %vm1282, %v1090, %v1378
        %v1475 = vsel %vm1283, %v1201, %v1379
        %v1476 = vsel %vm1284, %v1203, %v1380
        %v1477 = vsel %vm1285, %v866, %v1381
        %v1478 = vsel %vm1286, %v868, %v1382
        %v1479 = vsel %vm1287, %v979, %v1383
        %v1480 = vsel %vm1288, %v981, %v1384
        %v1481 = vsel %vm1289, %v1092, %v1385
        %v1482 = vsel %vm1290, %v1094, %v1386
        %v1483 = vsel %vm1291, %v1205, %v1387
        %v1484 = vsel %vm1292, %v1207, %v1388
        %v1485 = vsel %vm1293, %v872, %v1389
        %v1486 = vsel %vm1294, %v874, %v1390
        %v1487 = vsel %vm1295, %v985, %v1391
        %v1488 = vsel %vm1296, %v987, %v1392
        %v1489 = vsel %vm1297, %v1098, %v1393
        %v1490 = vsel %vm1298, %v1100, %v1394
        %v1491 = vsel %vm1299, %v1211, %v1395
        %v1492 = vsel %vm1300, %v1213, %v1396
        %v1493 = vsel %vm1301, %v876, %v1397
        %v1494 = vsel %vm1302, %v878, %v1398
        %v1495 = vsel %vm1303, %v989, %v1399
        %v1496 = vsel %vm1304, %v991, %v1400
        %v1497 = vsel %vm1305, %v1102, %v1401
        %v1498 = vsel %vm1306, %v1104, %v1402
        %v1499 = vsel %vm1307, %v1215, %v1403
        %v1500 = vsel %vm1308, %v1217, %v1404
        %v1501 = vsel %vm1309, %v882, %v1405
        %v1502 = vsel %vm1310, %v884, %v1406
        %v1503 = vsel %vm1311, %v995, %v1407
        %v1504 = vsel %vm1312, %v997, %v1408
        %v1505 = vsel %vm1313, %v1108, %v1409
        %v1506 = vsel %vm1314, %v1110, %v1410
        %v1507 = vsel %vm1315, %v1221, %v1411
        %v1508 = vsel %vm1316, %v1223, %v1412
        %v1509 = vsel %vm1317, %v886, %v1413
        %v1510 = vsel %vm1318, %v888, %v1414
        %v1511 = vsel %vm1319, %v999, %v1415
        %v1512 = vsel %vm1320, %v1001, %v1416
        %v1513 = vsel %vm1321, %v1112, %v1417
        %v1514 = vsel %vm1322, %v1114, %v1418
        %v1515 = vsel %vm1323, %v1225, %v1419
        %v1516 = vsel %vm1324, %v1227, %v1420
        %v1517 = vld [vmem:[%s3] sm:$0xf]
        %v1518 = vld [vmem:[%s3 + $0x4] sm:$0xf]
        %v1519 = vld [vmem:[%s3 + $0x8] sm:$0xf]
        %v1520 = vld [vmem:[%s3 + $0xc] sm:$0xf]
        %v1521 = vld [vmem:[%s3 + $0x10] sm:$0xf]
        %v1522 = vld [vmem:[%s3 + $0x14] sm:$0xf]
        %v1523 = vld [vmem:[%s3 + $0x18] sm:$0xf]
        %v1524 = vld [vmem:[%s3 + $0x1c] sm:$0xf]
        %v1525 = vld [vmem:[%s3 + $0x20] sm:$0xf]
        %v1526 = vld [vmem:[%s3 + $0x24] sm:$0xf]
        %v1527 = vld [vmem:[%s3 + $0x28] sm:$0xf]
        %v1528 = vld [vmem:[%s3 + $0x2c] sm:$0xf]
        %v1529 = vld [vmem:[%s3 + $0x30] sm:$0xf]
        %v1530 = vld [vmem:[%s3 + $0x34] sm:$0xf]
        %v1531 = vld [vmem:[%s3 + $0x38] sm:$0xf]
        %v1532 = vld [vmem:[%s3 + $0x3c] sm:$0xf]
        %v1533 = vld [vmem:[%s3 + $0x40] sm:$0xf]
        %v1534 = vld [vmem:[%s3 + $0x44] sm:$0xf]
        %v1535 = vld [vmem:[%s3 + $0x48] sm:$0xf]
        %v1536 = vld [vmem:[%s3 + $0x4c] sm:$0xf]
        %v1537 = vld [vmem:[%s3 + $0x50] sm:$0xf]
        %v1538 = vld [vmem:[%s3 + $0x54] sm:$0xf]
        %v1539 = vld [vmem:[%s3 + $0x58] sm:$0xf]
        %v1540 = vld [vmem:[%s3 + $0x5c] sm:$0xf]
        %v1541 = vpack.c.bf16 %v1429, %v1421
        %v1542 = vpack.c.bf16 %v1430, %v1422
        %v1543 = vpack.c.bf16 %v1431, %v1423
        %v1544 = vpack.c.bf16 %v1432, %v1424
        %v1545 = vpack.c.bf16 %v1433, %v1425
        %v1546 = vpack.c.bf16 %v1434, %v1426
        %v1547 = vpack.c.bf16 %v1435, %v1427
        %v1548 = vpack.c.bf16 %v1436, %v1428
        %v1549 = vpack.c.bf16 %v1445, %v1437
        %v1550 = vpack.c.bf16 %v1446, %v1438
        %v1551 = vpack.c.bf16 %v1447, %v1439
        %v1552 = vpack.c.bf16 %v1448, %v1440
        %v1553 = vpack.c.bf16 %v1449, %v1441
        %v1554 = vpack.c.bf16 %v1450, %v1442
        %v1555 = vpack.c.bf16 %v1451, %v1443
        %v1556 = vpack.c.bf16 %v1452, %v1444
        %v1557 = vpack.c.bf16 %v1461, %v1453
        %v1558 = vpack.c.bf16 %v1462, %v1454
        %v1559 = vpack.c.bf16 %v1463, %v1455
        %v1560 = vpack.c.bf16 %v1464, %v1456
        %v1561 = vpack.c.bf16 %v1465, %v1457
        %v1562 = vpack.c.bf16 %v1466, %v1458
        %v1563 = vpack.c.bf16 %v1467, %v1459
        %v1564 = vpack.c.bf16 %v1468, %v1460
        %v1565 = vpack.c.bf16 %v1477, %v1469
        %v1566 = vpack.c.bf16 %v1478, %v1470
        %v1567 = vpack.c.bf16 %v1479, %v1471
        %v1568 = vpack.c.bf16 %v1480, %v1472
        %v1569 = vpack.c.bf16 %v1481, %v1473
        %v1570 = vpack.c.bf16 %v1482, %v1474
        %v1571 = vpack.c.bf16 %v1483, %v1475
        %v1572 = vpack.c.bf16 %v1484, %v1476
        %v1573 = vpack.c.bf16 %v1493, %v1485
        %v1574 = vpack.c.bf16 %v1494, %v1486
        %v1575 = vpack.c.bf16 %v1495, %v1487
        %v1576 = vpack.c.bf16 %v1496, %v1488
        %v1577 = vpack.c.bf16 %v1497, %v1489
        %v1578 = vpack.c.bf16 %v1498, %v1490
        %v1579 = vpack.c.bf16 %v1499, %v1491
        %v1580 = vpack.c.bf16 %v1500, %v1492
        %v1581 = vpack.c.bf16 %v1509, %v1501
        %v1582 = vpack.c.bf16 %v1510, %v1502
        %v1583 = vpack.c.bf16 %v1511, %v1503
        %v1584 = vpack.c.bf16 %v1512, %v1504
        %v1585 = vpack.c.bf16 %v1513, %v1505
        %v1586 = vpack.c.bf16 %v1514, %v1506
        %v1587 = vpack.c.bf16 %v1515, %v1507
        %v1588 = vpack.c.bf16 %v1516, %v1508
        %v1589 = vld [vmem:[%s4] sm:$0xff]
        %v1590 = vld [vmem:[%s4 + $0x8] sm:$0xff]
        %v1591 = vld [vmem:[%s4 + $0x10] sm:$0xff]
        %v1592 = vld [vmem:[%s4 + $0x18] sm:$0xff]
        %v1593 = vld [vmem:[%s4 + $0x20] sm:$0xff]
        %v1594 = vld [vmem:[%s4 + $0x28] sm:$0xff]
        %v1595 = vld [vmem:[%s4 + $0x30] sm:$0xff]
        %v1596 = vld [vmem:[%s4 + $0x38] sm:$0xff]
        %v1597 = vld [vmem:[%s4 + $0x40] sm:$0xff]
        %v1598 = vld [vmem:[%s4 + $0x48] sm:$0xff]
        %v1599 = vld [vmem:[%s4 + $0x50] sm:$0xff]
        %v1600 = vld [vmem:[%s4 + $0x58] sm:$0xff]
        %v1601 = vld [vmem:[%s4 + $0x60] sm:$0xff]
        %v1602 = vld [vmem:[%s4 + $0x68] sm:$0xff]
        %v1603 = vld [vmem:[%s4 + $0x70] sm:$0xff]
        %v1604 = vld [vmem:[%s4 + $0x78] sm:$0xff]
        %v1605 = vld [vmem:[%s4 + $0x80] sm:$0xff]
        %v1606 = vld [vmem:[%s4 + $0x88] sm:$0xff]
        %v1607 = vld [vmem:[%s4 + $0x90] sm:$0xff]
        %v1608 = vld [vmem:[%s4 + $0x98] sm:$0xff]
        %v1609 = vld [vmem:[%s4 + $0xa0] sm:$0xff]
        %v1610 = vld [vmem:[%s4 + $0xa8] sm:$0xff]
        %v1611 = vld [vmem:[%s4 + $0xb0] sm:$0xff]
        %v1612 = vld [vmem:[%s4 + $0xb8] sm:$0xff]
        %1614 = vset.pattern.permute.xlu0 0
        %1615 = vperm.xlu0 %1614, %v1589
        %v1616 = vpop.permute.xlu0 %1615
        %1619 = vset.pattern.permute.xlu0 0
        %1620 = vperm.xlu0 %1619, %v1590
        %v1621 = vpop.permute.xlu0 %1620
        %1624 = vset.pattern.permute.xlu0 0
        %1625 = vperm.xlu0 %1624, %v1591
        %v1626 = vpop.permute.xlu0 %1625
        %1629 = vset.pattern.permute.xlu0 0
        %1630 = vperm.xlu0 %1629, %v1592
        %v1631 = vpop.permute.xlu0 %1630
        %1634 = vset.pattern.permute.xlu0 0
        %1635 = vperm.xlu0 %1634, %v1593
        %v1636 = vpop.permute.xlu0 %1635
        %1639 = vset.pattern.permute.xlu0 0
        %1640 = vperm.xlu0 %1639, %v1594
        %v1641 = vpop.permute.xlu0 %1640
        %1644 = vset.pattern.permute.xlu0 0
        %1645 = vperm.xlu0 %1644, %v1595
        %v1646 = vpop.permute.xlu0 %1645
        %1649 = vset.pattern.permute.xlu0 0
        %1650 = vperm.xlu0 %1649, %v1596
        %v1651 = vpop.permute.xlu0 %1650
        %1654 = vset.pattern.permute.xlu0 0
        %1655 = vperm.xlu0 %1654, %v1597
        %v1656 = vpop.permute.xlu0 %1655
        %1659 = vset.pattern.permute.xlu0 0
        %1660 = vperm.xlu0 %1659, %v1598
        %v1661 = vpop.permute.xlu0 %1660
        %1664 = vset.pattern.permute.xlu0 0
        %1665 = vperm.xlu0 %1664, %v1599
        %v1666 = vpop.permute.xlu0 %1665
        %1669 = vset.pattern.permute.xlu0 0
        %1670 = vperm.xlu0 %1669, %v1600
        %v1671 = vpop.permute.xlu0 %1670
        %1674 = vset.pattern.permute.xlu0 0
        %1675 = vperm.xlu0 %1674, %v1601
        %v1676 = vpop.permute.xlu0 %1675
        %1679 = vset.pattern.permute.xlu0 0
        %1680 = vperm.xlu0 %1679, %v1602
        %v1681 = vpop.permute.xlu0 %1680
        %1684 = vset.pattern.permute.xlu0 0
        %1685 = vperm.xlu0 %1684, %v1603
        %v1686 = vpop.permute.xlu0 %1685
        %1689 = vset.pattern.permute.xlu0 0
        %1690 = vperm.xlu0 %1689, %v1604
        %v1691 = vpop.permute.xlu0 %1690
        %1694 = vset.pattern.permute.xlu0 0
        %1695 = vperm.xlu0 %1694, %v1605
        %v1696 = vpop.permute.xlu0 %1695
        %1699 = vset.pattern.permute.xlu0 0
        %1700 = vperm.xlu0 %1699, %v1606
        %v1701 = vpop.permute.xlu0 %1700
        %1704 = vset.pattern.permute.xlu0 0
        %1705 = vperm.xlu0 %1704, %v1607
        %v1706 = vpop.permute.xlu0 %1705
        %1709 = vset.pattern.permute.xlu0 0
        %1710 = vperm.xlu0 %1709, %v1608
        %v1711 = vpop.permute.xlu0 %1710
        %1714 = vset.pattern.permute.xlu0 0
        %1715 = vperm.xlu0 %1714, %v1609
        %v1716 = vpop.permute.xlu0 %1715
        %1719 = vset.pattern.permute.xlu0 0
        %1720 = vperm.xlu0 %1719, %v1610
        %v1721 = vpop.permute.xlu0 %1720
        %1724 = vset.pattern.permute.xlu0 0
        %1725 = vperm.xlu0 %1724, %v1611
        %v1726 = vpop.permute.xlu0 %1725
        %1729 = vset.pattern.permute.xlu0 0
        %1730 = vperm.xlu0 %1729, %v1612
        %v1731 = vpop.permute.xlu0 %1730
        %v1757 = vunpack.c.l.b16 %v1517
        %v1758 = vunpack.c.l.b16 %v1518
        %v1759 = vunpack.c.l.b16 %v1519
        %v1760 = vunpack.c.l.b16 %v1520
        %v1761 = vunpack.c.l.b16 %v1521
        %v1762 = vunpack.c.l.b16 %v1522
        %v1763 = vunpack.c.l.b16 %v1523
        %v1764 = vunpack.c.l.b16 %v1524
        %v1765 = vunpack.c.l.b16 %v1525
        %v1766 = vunpack.c.l.b16 %v1526
        %v1767 = vunpack.c.l.b16 %v1527
        %v1768 = vunpack.c.l.b16 %v1528
        %v1769 = vunpack.c.l.b16 %v1529
        %v1770 = vunpack.c.l.b16 %v1530
        %v1771 = vunpack.c.l.b16 %v1531
        %v1772 = vunpack.c.l.b16 %v1532
        %v1773 = vunpack.c.l.b16 %v1533
        %v1774 = vunpack.c.l.b16 %v1534
        %v1775 = vunpack.c.l.b16 %v1535
        %v1776 = vunpack.c.l.b16 %v1536
        %v1777 = vunpack.c.l.b16 %v1537
        %v1778 = vunpack.c.l.b16 %v1538
        %v1779 = vunpack.c.l.b16 %v1539
        %v1780 = vunpack.c.l.b16 %v1540
        %v1781 = vpack.c.b16 %v1758, %v1757
        %v1782 = vpack.c.b16 %v1760, %v1759
        %v1783 = vpack.c.b16 %v1762, %v1761
        %v1784 = vpack.c.b16 %v1764, %v1763
        %v1785 = vpack.c.b16 %v1766, %v1765
        %v1786 = vpack.c.b16 %v1768, %v1767
        %v1787 = vpack.c.b16 %v1770, %v1769
        %v1788 = vpack.c.b16 %v1772, %v1771
        %v1789 = vpack.c.b16 %v1774, %v1773
        %v1790 = vpack.c.b16 %v1776, %v1775
        %v1791 = vpack.c.b16 %v1778, %v1777
        %v1792 = vpack.c.b16 %v1780, %v1779
        %vm1793 = vcmask 785408
        %v1795 = vsel %vm1793, %v1781, 0
        %v1798 = vsel %vm1793, %v1782, 0
        %v1801 = vsel %vm1793, %v1783, 0
        %v1804 = vsel %vm1793, %v1784, 0
        %v1807 = vsel %vm1793, %v1785, 0
        %v1810 = vsel %vm1793, %v1786, 0
        %v1813 = vsel %vm1793, %v1787, 0
        %v1816 = vsel %vm1793, %v1788, 0
        %v1819 = vsel %vm1793, %v1789, 0
        %v1822 = vsel %vm1793, %v1790, 0
        %v1825 = vsel %vm1793, %v1791, 0
        %v1828 = vsel %vm1793, %v1792, 0
        %1830 = vmatprep.subr.bf16.mxu0 %v1542
        %1831 = vmatpush1.bf16.msra.mxu0 %v1541
        %1832 = vmatprep.subr.bf16.mxu0 %v1550
        %1833 = vmatpush1.bf16.msra.mxu0 %v1549
        %1834 = vmatprep.subr.bf16.mxu0 %v1558
        %1835 = vmatpush1.bf16.msra.mxu0 %v1557
        %1836 = vmatprep.subr.bf16.mxu0 %v1566
        %1837 = vmatpush1.bf16.msra.mxu0 %v1565
        %1838 = vmatprep.subr.bf16.mxu0 %v1574
        %1839 = vmatpush1.bf16.msra.mxu0 %v1573
        %1840 = vmatprep.subr.bf16.mxu0 %v1582
        %1841 = vmatpush1.bf16.msra.mxu0 %v1581
        %1842 = vmatprep.subr.bf16.mxu0 0
        %1843 = vmatpush1.bf16.msra.mxu0 0
        %1844 = vmatprep.subr.bf16.mxu0 0
        %1845 = vmatpush1.bf16.msra.mxu0 0
        %1846 = vmatprep.subr.bf16.mxu0 0
        %1847 = vmatpush1.bf16.msra.mxu0 0
        %1848 = vmatprep.subr.bf16.mxu0 0
        %1849 = vmatpush1.bf16.msra.mxu0 0
        %1850 = vmatprep.subr.bf16.mxu0 0
        %1851 = vmatpush1.bf16.msra.mxu0 0
        %1852 = vmatprep.subr.bf16.mxu0 0
        %1853 = vmatpush1.bf16.msra.mxu0 0
        %1854 = vmatprep.subr.bf16.mxu0 0
        %1855 = vmatpush1.bf16.msra.mxu0 0
        %1856 = vmatprep.subr.bf16.mxu0 0
        %1857 = vmatpush1.bf16.msra.mxu0 0
        %1858 = vmatprep.subr.bf16.mxu0 0
        %1859 = vmatpush1.bf16.msra.mxu0 0
        %1860 = vmatprep.subr.bf16.mxu0 0
        %1861 = vmatpush1.bf16.msra.mxu0 0
        %1862 = vmatprep.mubr.bf16.mxu0 0
        %1863 = vmatmul.mubr.bf16.gmra.mrb[0].mxu0 %v1795
        %v1864 = vpop.f32.mrb[0].mxu0
        %v1865 = vadd.f32 %v1616, %v1864
        %v1866 = vpop.f32.mrb[0].mxu0
        %v1867 = vadd.f32 %v1616, %v1866
        %v1868 = vpop.f32.mrb[0].mxu0
        %v1869 = vadd.f32 %v1621, %v1868
        %v1870 = vpop.f32.mrb[0].mxu0
        %v1871 = vadd.f32 %v1621, %v1870
        %1872 = vmatprep.mubr.bf16.mxu0 0
        %1873 = vmatmul.mubr.bf16.gmra.mrb[0].mxu0 %v1798
        %v1874 = vpop.f32.mrb[0].mxu0
        %v1875 = vadd.f32 %v1626, %v1874
        %v1876 = vpop.f32.mrb[0].mxu0
        %v1877 = vadd.f32 %v1626, %v1876
        %v1878 = vpop.f32.mrb[0].mxu0
        %v1879 = vadd.f32 %v1631, %v1878
        %v1880 = vpop.f32.mrb[0].mxu0
        %v1881 = vadd.f32 %v1631, %v1880
        %1882 = vmatprep.mubr.bf16.mxu0 0
        %1883 = vmatmul.mubr.bf16.gmra.mrb[0].mxu0 %v1801
        %v1884 = vpop.f32.mrb[0].mxu0
        %v1885 = vadd.f32 %v1636, %v1884
        %v1886 = vpop.f32.mrb[0].mxu0
        %v1887 = vadd.f32 %v1636, %v1886
        %v1888 = vpop.f32.mrb[0].mxu0
        %v1889 = vadd.f32 %v1641, %v1888
        %v1890 = vpop.f32.mrb[0].mxu0
        %v1891 = vadd.f32 %v1641, %v1890
        %1892 = vmatprep.mubr.bf16.mxu0 0
        %1893 = vmatmul.mubr.bf16.gmra.mrb[0].mxu0 %v1804
        %v1894 = vpop.f32.mrb[0].mxu0
        %v1895 = vadd.f32 %v1646, %v1894
        %v1896 = vpop.f32.mrb[0].mxu0
        %v1897 = vadd.f32 %v1646, %v1896
        %v1898 = vpop.f32.mrb[0].mxu0
        %v1899 = vadd.f32 %v1651, %v1898
        %v1900 = vpop.f32.mrb[0].mxu0
        %v1901 = vadd.f32 %v1651, %v1900
        %1902 = vmatprep.mubr.bf16.mxu0 0
        %1903 = vmatmul.mubr.bf16.gmra.mrb[0].mxu0 %v1807
        %v1904 = vpop.f32.mrb[0].mxu0
        %v1905 = vadd.f32 %v1656, %v1904
        %v1906 = vpop.f32.mrb[0].mxu0
        %v1907 = vadd.f32 %v1656, %v1906
        %v1908 = vpop.f32.mrb[0].mxu0
        %v1909 = vadd.f32 %v1661, %v1908
        %v1910 = vpop.f32.mrb[0].mxu0
        %v1911 = vadd.f32 %v1661, %v1910
        %1912 = vmatprep.mubr.bf16.mxu0 0
        %1913 = vmatmul.mubr.bf16.gmra.mrb[0].mxu0 %v1810
        %v1914 = vpop.f32.mrb[0].mxu0
        %v1915 = vadd.f32 %v1666, %v1914
        %v1916 = vpop.f32.mrb[0].mxu0
        %v1917 = vadd.f32 %v1666, %v1916
        %v1918 = vpop.f32.mrb[0].mxu0
        %v1919 = vadd.f32 %v1671, %v1918
        %v1920 = vpop.f32.mrb[0].mxu0
        %v1921 = vadd.f32 %v1671, %v1920
        %1922 = vmatprep.mubr.bf16.mxu0 0
        %1923 = vmatmul.mubr.bf16.gmra.mrb[0].mxu0 %v1813
        %v1924 = vpop.f32.mrb[0].mxu0
        %v1925 = vadd.f32 %v1676, %v1924
        %v1926 = vpop.f32.mrb[0].mxu0
        %v1927 = vadd.f32 %v1676, %v1926
        %v1928 = vpop.f32.mrb[0].mxu0
        %v1929 = vadd.f32 %v1681, %v1928
        %v1930 = vpop.f32.mrb[0].mxu0
        %v1931 = vadd.f32 %v1681, %v1930
        %1932 = vmatprep.mubr.bf16.mxu0 0
        %1933 = vmatmul.mubr.bf16.gmra.mrb[0].mxu0 %v1816
        %v1934 = vpop.f32.mrb[0].mxu0
        %v1935 = vadd.f32 %v1686, %v1934
        %v1936 = vpop.f32.mrb[0].mxu0
        %v1937 = vadd.f32 %v1686, %v1936
        %v1938 = vpop.f32.mrb[0].mxu0
        %v1939 = vadd.f32 %v1691, %v1938
        %v1940 = vpop.f32.mrb[0].mxu0
        %v1941 = vadd.f32 %v1691, %v1940
        %1942 = vmatprep.mubr.bf16.mxu0 0
        %1943 = vmatmul.mubr.bf16.gmra.mrb[0].mxu0 %v1819
        %v1944 = vpop.f32.mrb[0].mxu0
        %v1945 = vadd.f32 %v1696, %v1944
        %v1946 = vpop.f32.mrb[0].mxu0
        %v1947 = vadd.f32 %v1696, %v1946
        %v1948 = vpop.f32.mrb[0].mxu0
        %v1949 = vadd.f32 %v1701, %v1948
        %v1950 = vpop.f32.mrb[0].mxu0
        %v1951 = vadd.f32 %v1701, %v1950
        %1952 = vmatprep.mubr.bf16.mxu0 0
        %1953 = vmatmul.mubr.bf16.gmra.mrb[0].mxu0 %v1822
        %v1954 = vpop.f32.mrb[0].mxu0
        %v1955 = vadd.f32 %v1706, %v1954
        %v1956 = vpop.f32.mrb[0].mxu0
        %v1957 = vadd.f32 %v1706, %v1956
        %v1958 = vpop.f32.mrb[0].mxu0
        %v1959 = vadd.f32 %v1711, %v1958
        %v1960 = vpop.f32.mrb[0].mxu0
        %v1961 = vadd.f32 %v1711, %v1960
        %1962 = vmatprep.mubr.bf16.mxu0 0
        %1963 = vmatmul.mubr.bf16.gmra.mrb[0].mxu0 %v1825
        %v1964 = vpop.f32.mrb[0].mxu0
        %v1965 = vadd.f32 %v1716, %v1964
        %v1966 = vpop.f32.mrb[0].mxu0
        %v1967 = vadd.f32 %v1716, %v1966
        %v1968 = vpop.f32.mrb[0].mxu0
        %v1969 = vadd.f32 %v1721, %v1968
        %v1970 = vpop.f32.mrb[0].mxu0
        %v1971 = vadd.f32 %v1721, %v1970
        %1972 = vmatprep.mubr.bf16.mxu0 0
        %1973 = vmatmul.mubr.bf16.gmra.mrb[0].mxu0 %v1828
        %v1974 = vpop.f32.mrb[0].mxu0
        %v1975 = vadd.f32 %v1726, %v1974
        %v1976 = vpop.f32.mrb[0].mxu0
        %v1977 = vadd.f32 %v1726, %v1976
        %v1978 = vpop.f32.mrb[0].mxu0
        %v1979 = vadd.f32 %v1731, %v1978
        %v1980 = vpop.f32.mrb[0].mxu0
        %v1981 = vadd.f32 %v1731, %v1980
        %1982 = vdwg.mxu0
        %1983 = vmatprep.subr.bf16.mxu0 %v1544
        %1984 = vmatpush1.bf16.msra.mxu0 %v1543
        %1985 = vmatprep.subr.bf16.mxu0 %v1552
        %1986 = vmatpush1.bf16.msra.mxu0 %v1551
        %1987 = vmatprep.subr.bf16.mxu0 %v1560
        %1988 = vmatpush1.bf16.msra.mxu0 %v1559
        %1989 = vmatprep.subr.bf16.mxu0 %v1568
        %1990 = vmatpush1.bf16.msra.mxu0 %v1567
        %1991 = vmatprep.subr.bf16.mxu0 %v1576
        %1992 = vmatpush1.bf16.msra.mxu0 %v1575
        %1993 = vmatprep.subr.bf16.mxu0 %v1584
        %1994 = vmatpush1.bf16.msra.mxu0 %v1583
        %1995 = vmatprep.subr.bf16.mxu0 0
        %1996 = vmatpush1.bf16.msra.mxu0 0
        %1997 = vmatprep.subr.bf16.mxu0 0
        %1998 = vmatpush1.bf16.msra.mxu0 0
        %1999 = vmatprep.subr.bf16.mxu0 0
        %2000 = vmatpush1.bf16.msra.mxu0 0
        %2001 = vmatprep.subr.bf16.mxu0 0
        %2002 = vmatpush1.bf16.msra.mxu0 0
        %2003 = vmatprep.subr.bf16.mxu0 0
        %2004 = vmatpush1.bf16.msra.mxu0 0
        %2005 = vmatprep.subr.bf16.mxu0 0
        %2006 = vmatpush1.bf16.msra.mxu0 0
        %2007 = vmatprep.subr.bf16.mxu0 0
        %2008 = vmatpush1.bf16.msra.mxu0 0
        %2009 = vmatprep.subr.bf16.mxu0 0
        %2010 = vmatpush1.bf16.msra.mxu0 0
        %2011 = vmatprep.subr.bf16.mxu0 0
        %2012 = vmatpush1.bf16.msra.mxu0 0
        %2013 = vmatprep.subr.bf16.mxu0 0
        %2014 = vmatpush1.bf16.msra.mxu0 0
        %2015 = vmatprep.mubr.bf16.mxu0 0
        %2016 = vmatmul.mubr.bf16.gmra.mrb[0].mxu0 %v1795
        %v2017 = vpop.f32.mrb[0].mxu0
        %v2018 = vadd.f32 %v1616, %v2017
        %v2019 = vpop.f32.mrb[0].mxu0
        %v2020 = vadd.f32 %v1616, %v2019
        %v2021 = vpop.f32.mrb[0].mxu0
        %v2022 = vadd.f32 %v1621, %v2021
        %v2023 = vpop.f32.mrb[0].mxu0
        %v2024 = vadd.f32 %v1621, %v2023
        %2025 = vmatprep.mubr.bf16.mxu0 0
        %2026 = vmatmul.mubr.bf16.gmra.mrb[0].mxu0 %v1798
        %v2027 = vpop.f32.mrb[0].mxu0
        %v2028 = vadd.f32 %v1626, %v2027
        %v2029 = vpop.f32.mrb[0].mxu0
        %v2030 = vadd.f32 %v1626, %v2029
        %v2031 = vpop.f32.mrb[0].mxu0
        %v2032 = vadd.f32 %v1631, %v2031
        %v2033 = vpop.f32.mrb[0].mxu0
        %v2034 = vadd.f32 %v1631, %v2033
        %2035 = vmatprep.mubr.bf16.mxu0 0
        %2036 = vmatmul.mubr.bf16.gmra.mrb[0].mxu0 %v1801
        %v2037 = vpop.f32.mrb[0].mxu0
        %v2038 = vadd.f32 %v1636, %v2037
        %v2039 = vpop.f32.mrb[0].mxu0
        %v2040 = vadd.f32 %v1636, %v2039
        %v2041 = vpop.f32.mrb[0].mxu0
        %v2042 = vadd.f32 %v1641, %v2041
        %v2043 = vpop.f32.mrb[0].mxu0
        %v2044 = vadd.f32 %v1641, %v2043
        %2045 = vmatprep.mubr.bf16.mxu0 0
        %2046 = vmatmul.mubr.bf16.gmra.mrb[0].mxu0 %v1804
        %v2047 = vpop.f32.mrb[0].mxu0
        %v2048 = vadd.f32 %v1646, %v2047
        %v2049 = vpop.f32.mrb[0].mxu0
        %v2050 = vadd.f32 %v1646, %v2049
        %v2051 = vpop.f32.mrb[0].mxu0
        %v2052 = vadd.f32 %v1651, %v2051
        %v2053 = vpop.f32.mrb[0].mxu0
        %v2054 = vadd.f32 %v1651, %v2053
        %2055 = vmatprep.mubr.bf16.mxu0 0
        %2056 = vmatmul.mubr.bf16.gmra.mrb[0].mxu0 %v1807
        %v2057 = vpop.f32.mrb[0].mxu0
        %v2058 = vadd.f32 %v1656, %v2057
        %v2059 = vpop.f32.mrb[0].mxu0
        %v2060 = vadd.f32 %v1656, %v2059
        %v2061 = vpop.f32.mrb[0].mxu0
        %v2062 = vadd.f32 %v1661, %v2061
        %v2063 = vpop.f32.mrb[0].mxu0
        %v2064 = vadd.f32 %v1661, %v2063
        %2065 = vmatprep.mubr.bf16.mxu0 0
        %2066 = vmatmul.mubr.bf16.gmra.mrb[0].mxu0 %v1810
        %v2067 = vpop.f32.mrb[0].mxu0
        %v2068 = vadd.f32 %v1666, %v2067
        %v2069 = vpop.f32.mrb[0].mxu0
        %v2070 = vadd.f32 %v1666, %v2069
        %v2071 = vpop.f32.mrb[0].mxu0
        %v2072 = vadd.f32 %v1671, %v2071
        %v2073 = vpop.f32.mrb[0].mxu0
        %v2074 = vadd.f32 %v1671, %v2073
        %2075 = vmatprep.mubr.bf16.mxu0 0
        %2076 = vmatmul.mubr.bf16.gmra.mrb[0].mxu0 %v1813
        %v2077 = vpop.f32.mrb[0].mxu0
        %v2078 = vadd.f32 %v1676, %v2077
        %v2079 = vpop.f32.mrb[0].mxu0
        %v2080 = vadd.f32 %v1676, %v2079
        %v2081 = vpop.f32.mrb[0].mxu0
        %v2082 = vadd.f32 %v1681, %v2081
        %v2083 = vpop.f32.mrb[0].mxu0
        %v2084 = vadd.f32 %v1681, %v2083
        %2085 = vmatprep.mubr.bf16.mxu0 0
        %2086 = vmatmul.mubr.bf16.gmra.mrb[0].mxu0 %v1816
        %v2087 = vpop.f32.mrb[0].mxu0
        %v2088 = vadd.f32 %v1686, %v2087
        %v2089 = vpop.f32.mrb[0].mxu0
        %v2090 = vadd.f32 %v1686, %v2089
        %v2091 = vpop.f32.mrb[0].mxu0
        %v2092 = vadd.f32 %v1691, %v2091
        %v2093 = vpop.f32.mrb[0].mxu0
        %v2094 = vadd.f32 %v1691, %v2093
        %2095 = vmatprep.mubr.bf16.mxu0 0
        %2096 = vmatmul.mubr.bf16.gmra.mrb[0].mxu0 %v1819
        %v2097 = vpop.f32.mrb[0].mxu0
        %v2098 = vadd.f32 %v1696, %v2097
        %v2099 = vpop.f32.mrb[0].mxu0
        %v2100 = vadd.f32 %v1696, %v2099
        %v2101 = vpop.f32.mrb[0].mxu0
        %v2102 = vadd.f32 %v1701, %v2101
        %v2103 = vpop.f32.mrb[0].mxu0
        %v2104 = vadd.f32 %v1701, %v2103
        %2105 = vmatprep.mubr.bf16.mxu0 0
        %2106 = vmatmul.mubr.bf16.gmra.mrb[0].mxu0 %v1822
        %v2107 = vpop.f32.mrb[0].mxu0
        %v2108 = vadd.f32 %v1706, %v2107
        %v2109 = vpop.f32.mrb[0].mxu0
        %v2110 = vadd.f32 %v1706, %v2109
        %v2111 = vpop.f32.mrb[0].mxu0
        %v2112 = vadd.f32 %v1711, %v2111
        %v2113 = vpop.f32.mrb[0].mxu0
        %v2114 = vadd.f32 %v1711, %v2113
        %2115 = vmatprep.mubr.bf16.mxu0 0
        %2116 = vmatmul.mubr.bf16.gmra.mrb[0].mxu0 %v1825
        %v2117 = vpop.f32.mrb[0].mxu0
        %v2118 = vadd.f32 %v1716, %v2117
        %v2119 = vpop.f32.mrb[0].mxu0
        %v2120 = vadd.f32 %v1716, %v2119
        %v2121 = vpop.f32.mrb[0].mxu0
        %v2122 = vadd.f32 %v1721, %v2121
        %v2123 = vpop.f32.mrb[0].mxu0
        %v2124 = vadd.f32 %v1721, %v2123
        %2125 = vmatprep.mubr.bf16.mxu0 0
        %2126 = vmatmul.mubr.bf16.gmra.mrb[0].mxu0 %v1828
        %v2127 = vpop.f32.mrb[0].mxu0
        %v2128 = vadd.f32 %v1726, %v2127
        %v2129 = vpop.f32.mrb[0].mxu0
        %v2130 = vadd.f32 %v1726, %v2129
        %v2131 = vpop.f32.mrb[0].mxu0
        %v2132 = vadd.f32 %v1731, %v2131
        %v2133 = vpop.f32.mrb[0].mxu0
        %v2134 = vadd.f32 %v1731, %v2133
        %2135 = vdwg.mxu0
        %2136 = vmatprep.subr.bf16.mxu0 %v1546
        %2137 = vmatpush1.bf16.msra.mxu0 %v1545
        %2138 = vmatprep.subr.bf16.mxu0 %v1554
        %2139 = vmatpush1.bf16.msra.mxu0 %v1553
        %2140 = vmatprep.subr.bf16.mxu0 %v1562
        %2141 = vmatpush1.bf16.msra.mxu0 %v1561
        %2142 = vmatprep.subr.bf16.mxu0 %v1570
        %2143 = vmatpush1.bf16.msra.mxu0 %v1569
        %2144 = vmatprep.subr.bf16.mxu0 %v1578
        %2145 = vmatpush1.bf16.msra.mxu0 %v1577
        %2146 = vmatprep.subr.bf16.mxu0 %v1586
        %2147 = vmatpush1.bf16.msra.mxu0 %v1585
        %2148 = vmatprep.subr.bf16.mxu0 0
        %2149 = vmatpush1.bf16.msra.mxu0 0
        %2150 = vmatprep.subr.bf16.mxu0 0
        %2151 = vmatpush1.bf16.msra.mxu0 0
        %2152 = vmatprep.subr.bf16.mxu0 0
        %2153 = vmatpush1.bf16.msra.mxu0 0
        %2154 = vmatprep.subr.bf16.mxu0 0
        %2155 = vmatpush1.bf16.msra.mxu0 0
        %2156 = vmatprep.subr.bf16.mxu0 0
        %2157 = vmatpush1.bf16.msra.mxu0 0
        %2158 = vmatprep.subr.bf16.mxu0 0
        %2159 = vmatpush1.bf16.msra.mxu0 0
        %2160 = vmatprep.subr.bf16.mxu0 0
        %2161 = vmatpush1.bf16.msra.mxu0 0
        %2162 = vmatprep.subr.bf16.mxu0 0
        %2163 = vmatpush1.bf16.msra.mxu0 0
        %2164 = vmatprep.subr.bf16.mxu0 0
        %2165 = vmatpush1.bf16.msra.mxu0 0
        %2166 = vmatprep.subr.bf16.mxu0 0
        %2167 = vmatpush1.bf16.msra.mxu0 0
        %2168 = vmatprep.mubr.bf16.mxu0 0
        %2169 = vmatmul.mubr.bf16.gmra.mrb[0].mxu0 %v1795
        %v2170 = vpop.f32.mrb[0].mxu0
        %v2171 = vadd.f32 %v1616, %v2170
        %v2172 = vpop.f32.mrb[0].mxu0
        %v2173 = vadd.f32 %v1616, %v2172
        %v2174 = vpop.f32.mrb[0].mxu0
        %v2175 = vadd.f32 %v1621, %v2174
        %v2176 = vpop.f32.mrb[0].mxu0
        %v2177 = vadd.f32 %v1621, %v2176
        %2178 = vmatprep.mubr.bf16.mxu0 0
        %2179 = vmatmul.mubr.bf16.gmra.mrb[0].mxu0 %v1798
        %v2180 = vpop.f32.mrb[0].mxu0
        %v2181 = vadd.f32 %v1626, %v2180
        %v2182 = vpop.f32.mrb[0].mxu0
        %v2183 = vadd.f32 %v1626, %v2182
        %v2184 = vpop.f32.mrb[0].mxu0
        %v2185 = vadd.f32 %v1631, %v2184
        %v2186 = vpop.f32.mrb[0].mxu0
        %v2187 = vadd.f32 %v1631, %v2186
        %2188 = vmatprep.mubr.bf16.mxu0 0
        %2189 = vmatmul.mubr.bf16.gmra.mrb[0].mxu0 %v1801
        %v2190 = vpop.f32.mrb[0].mxu0
        %v2191 = vadd.f32 %v1636, %v2190
        %v2192 = vpop.f32.mrb[0].mxu0
        %v2193 = vadd.f32 %v1636, %v2192
        %v2194 = vpop.f32.mrb[0].mxu0
        %v2195 = vadd.f32 %v1641, %v2194
        %v2196 = vpop.f32.mrb[0].mxu0
        %v2197 = vadd.f32 %v1641, %v2196
        %2198 = vmatprep.mubr.bf16.mxu0 0
        %2199 = vmatmul.mubr.bf16.gmra.mrb[0].mxu0 %v1804
        %v2200 = vpop.f32.mrb[0].mxu0
        %v2201 = vadd.f32 %v1646, %v2200
        %v2202 = vpop.f32.mrb[0].mxu0
        %v2203 = vadd.f32 %v1646, %v2202
        %v2204 = vpop.f32.mrb[0].mxu0
        %v2205 = vadd.f32 %v1651, %v2204
        %v2206 = vpop.f32.mrb[0].mxu0
        %v2207 = vadd.f32 %v1651, %v2206
        %2208 = vmatprep.mubr.bf16.mxu0 0
        %2209 = vmatmul.mubr.bf16.gmra.mrb[0].mxu0 %v1807
        %v2210 = vpop.f32.mrb[0].mxu0
        %v2211 = vadd.f32 %v1656, %v2210
        %v2212 = vpop.f32.mrb[0].mxu0
        %v2213 = vadd.f32 %v1656, %v2212
        %v2214 = vpop.f32.mrb[0].mxu0
        %v2215 = vadd.f32 %v1661, %v2214
        %v2216 = vpop.f32.mrb[0].mxu0
        %v2217 = vadd.f32 %v1661, %v2216
        %2218 = vmatprep.mubr.bf16.mxu0 0
        %2219 = vmatmul.mubr.bf16.gmra.mrb[0].mxu0 %v1810
        %v2220 = vpop.f32.mrb[0].mxu0
        %v2221 = vadd.f32 %v1666, %v2220
        %v2222 = vpop.f32.mrb[0].mxu0
        %v2223 = vadd.f32 %v1666, %v2222
        %v2224 = vpop.f32.mrb[0].mxu0
        %v2225 = vadd.f32 %v1671, %v2224
        %v2226 = vpop.f32.mrb[0].mxu0
        %v2227 = vadd.f32 %v1671, %v2226
        %2228 = vmatprep.mubr.bf16.mxu0 0
        %2229 = vmatmul.mubr.bf16.gmra.mrb[0].mxu0 %v1813
        %v2230 = vpop.f32.mrb[0].mxu0
        %v2231 = vadd.f32 %v1676, %v2230
        %v2232 = vpop.f32.mrb[0].mxu0
        %v2233 = vadd.f32 %v1676, %v2232
        %v2234 = vpop.f32.mrb[0].mxu0
        %v2235 = vadd.f32 %v1681, %v2234
        %v2236 = vpop.f32.mrb[0].mxu0
        %v2237 = vadd.f32 %v1681, %v2236
        %2238 = vmatprep.mubr.bf16.mxu0 0
        %2239 = vmatmul.mubr.bf16.gmra.mrb[0].mxu0 %v1816
        %v2240 = vpop.f32.mrb[0].mxu0
        %v2241 = vadd.f32 %v1686, %v2240
        %v2242 = vpop.f32.mrb[0].mxu0
        %v2243 = vadd.f32 %v1686, %v2242
        %v2244 = vpop.f32.mrb[0].mxu0
        %v2245 = vadd.f32 %v1691, %v2244
        %v2246 = vpop.f32.mrb[0].mxu0
        %v2247 = vadd.f32 %v1691, %v2246
        %2248 = vmatprep.mubr.bf16.mxu0 0
        %2249 = vmatmul.mubr.bf16.gmra.mrb[0].mxu0 %v1819
        %v2250 = vpop.f32.mrb[0].mxu0
        %v2251 = vadd.f32 %v1696, %v2250
        %v2252 = vpop.f32.mrb[0].mxu0
        %v2253 = vadd.f32 %v1696, %v2252
        %v2254 = vpop.f32.mrb[0].mxu0
        %v2255 = vadd.f32 %v1701, %v2254
        %v2256 = vpop.f32.mrb[0].mxu0
        %v2257 = vadd.f32 %v1701, %v2256
        %2258 = vmatprep.mubr.bf16.mxu0 0
        %2259 = vmatmul.mubr.bf16.gmra.mrb[0].mxu0 %v1822
        %v2260 = vpop.f32.mrb[0].mxu0
        %v2261 = vadd.f32 %v1706, %v2260
        %v2262 = vpop.f32.mrb[0].mxu0
        %v2263 = vadd.f32 %v1706, %v2262
        %v2264 = vpop.f32.mrb[0].mxu0
        %v2265 = vadd.f32 %v1711, %v2264
        %v2266 = vpop.f32.mrb[0].mxu0
        %v2267 = vadd.f32 %v1711, %v2266
        %2268 = vmatprep.mubr.bf16.mxu0 0
        %2269 = vmatmul.mubr.bf16.gmra.mrb[0].mxu0 %v1825
        %v2270 = vpop.f32.mrb[0].mxu0
        %v2271 = vadd.f32 %v1716, %v2270
        %v2272 = vpop.f32.mrb[0].mxu0
        %v2273 = vadd.f32 %v1716, %v2272
        %v2274 = vpop.f32.mrb[0].mxu0
        %v2275 = vadd.f32 %v1721, %v2274
        %v2276 = vpop.f32.mrb[0].mxu0
        %v2277 = vadd.f32 %v1721, %v2276
        %2278 = vmatprep.mubr.bf16.mxu0 0
        %2279 = vmatmul.mubr.bf16.gmra.mrb[0].mxu0 %v1828
        %v2280 = vpop.f32.mrb[0].mxu0
        %v2281 = vadd.f32 %v1726, %v2280
        %v2282 = vpop.f32.mrb[0].mxu0
        %v2283 = vadd.f32 %v1726, %v2282
        %v2284 = vpop.f32.mrb[0].mxu0
        %v2285 = vadd.f32 %v1731, %v2284
        %v2286 = vpop.f32.mrb[0].mxu0
        %v2287 = vadd.f32 %v1731, %v2286
        %2288 = vdwg.mxu0
        %2289 = vmatprep.subr.bf16.mxu0 %v1548
        %2290 = vmatpush1.bf16.msra.mxu0 %v1547
        %2291 = vmatprep.subr.bf16.mxu0 %v1556
        %2292 = vmatpush1.bf16.msra.mxu0 %v1555
        %2293 = vmatprep.subr.bf16.mxu0 %v1564
        %2294 = vmatpush1.bf16.msra.mxu0 %v1563
        %2295 = vmatprep.subr.bf16.mxu0 %v1572
        %2296 = vmatpush1.bf16.msra.mxu0 %v1571
        %2297 = vmatprep.subr.bf16.mxu0 %v1580
        %2298 = vmatpush1.bf16.msra.mxu0 %v1579
        %2299 = vmatprep.subr.bf16.mxu0 %v1588
        %2300 = vmatpush1.bf16.msra.mxu0 %v1587
        %2301 = vmatprep.subr.bf16.mxu0 0
        %2302 = vmatpush1.bf16.msra.mxu0 0
        %2303 = vmatprep.subr.bf16.mxu0 0
        %2304 = vmatpush1.bf16.msra.mxu0 0
        %2305 = vmatprep.subr.bf16.mxu0 0
        %2306 = vmatpush1.bf16.msra.mxu0 0
        %2307 = vmatprep.subr.bf16.mxu0 0
        %2308 = vmatpush1.bf16.msra.mxu0 0
        %2309 = vmatprep.subr.bf16.mxu0 0
        %2310 = vmatpush1.bf16.msra.mxu0 0
        %2311 = vmatprep.subr.bf16.mxu0 0
        %2312 = vmatpush1.bf16.msra.mxu0 0
        %2313 = vmatprep.subr.bf16.mxu0 0
        %2314 = vmatpush1.bf16.msra.mxu0 0
        %2315 = vmatprep.subr.bf16.mxu0 0
        %2316 = vmatpush1.bf16.msra.mxu0 0
        %2317 = vmatprep.subr.bf16.mxu0 0
        %2318 = vmatpush1.bf16.msra.mxu0 0
        %2319 = vmatprep.subr.bf16.mxu0 0
        %2320 = vmatpush1.bf16.msra.mxu0 0
        %2321 = vmatprep.mubr.bf16.mxu0 0
        %2322 = vmatmul.mubr.bf16.gmra.mrb[0].mxu0 %v1795
        %v2323 = vpop.f32.mrb[0].mxu0
        %v2324 = vadd.f32 %v1616, %v2323
        %v2325 = vpop.f32.mrb[0].mxu0
        %v2326 = vadd.f32 %v1616, %v2325
        %v2327 = vpop.f32.mrb[0].mxu0
        %v2328 = vadd.f32 %v1621, %v2327
        %v2329 = vpop.f32.mrb[0].mxu0
        %v2330 = vadd.f32 %v1621, %v2329
        %2331 = vmatprep.mubr.bf16.mxu0 0
        %2332 = vmatmul.mubr.bf16.gmra.mrb[0].mxu0 %v1798
        %v2333 = vpop.f32.mrb[0].mxu0
        %v2334 = vadd.f32 %v1626, %v2333
        %v2335 = vpop.f32.mrb[0].mxu0
        %v2336 = vadd.f32 %v1626, %v2335
        %v2337 = vpop.f32.mrb[0].mxu0
        %v2338 = vadd.f32 %v1631, %v2337
        %v2339 = vpop.f32.mrb[0].mxu0
        %v2340 = vadd.f32 %v1631, %v2339
        %2341 = vmatprep.mubr.bf16.mxu0 0
        %2342 = vmatmul.mubr.bf16.gmra.mrb[0].mxu0 %v1801
        %v2343 = vpop.f32.mrb[0].mxu0
        %v2344 = vadd.f32 %v1636, %v2343
        %v2345 = vpop.f32.mrb[0].mxu0
        %v2346 = vadd.f32 %v1636, %v2345
        %v2347 = vpop.f32.mrb[0].mxu0
        %v2348 = vadd.f32 %v1641, %v2347
        %v2349 = vpop.f32.mrb[0].mxu0
        %v2350 = vadd.f32 %v1641, %v2349
        %2351 = vmatprep.mubr.bf16.mxu0 0
        %2352 = vmatmul.mubr.bf16.gmra.mrb[0].mxu0 %v1804
        %v2353 = vpop.f32.mrb[0].mxu0
        %v2354 = vadd.f32 %v1646, %v2353
        %v2355 = vpop.f32.mrb[0].mxu0
        %v2356 = vadd.f32 %v1646, %v2355
        %v2357 = vpop.f32.mrb[0].mxu0
        %v2358 = vadd.f32 %v1651, %v2357
        %v2359 = vpop.f32.mrb[0].mxu0
        %v2360 = vadd.f32 %v1651, %v2359
        %2361 = vmatprep.mubr.bf16.mxu0 0
        %2362 = vmatmul.mubr.bf16.gmra.mrb[0].mxu0 %v1807
        %v2363 = vpop.f32.mrb[0].mxu0
        %v2364 = vadd.f32 %v1656, %v2363
        %v2365 = vpop.f32.mrb[0].mxu0
        %v2366 = vadd.f32 %v1656, %v2365
        %v2367 = vpop.f32.mrb[0].mxu0
        %v2368 = vadd.f32 %v1661, %v2367
        %v2369 = vpop.f32.mrb[0].mxu0
        %v2370 = vadd.f32 %v1661, %v2369
        %2371 = vmatprep.mubr.bf16.mxu0 0
        %2372 = vmatmul.mubr.bf16.gmra.mrb[0].mxu0 %v1810
        %v2373 = vpop.f32.mrb[0].mxu0
        %v2374 = vadd.f32 %v1666, %v2373
        %v2375 = vpop.f32.mrb[0].mxu0
        %v2376 = vadd.f32 %v1666, %v2375
        %v2377 = vpop.f32.mrb[0].mxu0
        %v2378 = vadd.f32 %v1671, %v2377
        %v2379 = vpop.f32.mrb[0].mxu0
        %v2380 = vadd.f32 %v1671, %v2379
        %2381 = vmatprep.mubr.bf16.mxu0 0
        %2382 = vmatmul.mubr.bf16.gmra.mrb[0].mxu0 %v1813
        %v2383 = vpop.f32.mrb[0].mxu0
        %v2384 = vadd.f32 %v1676, %v2383
        %v2385 = vpop.f32.mrb[0].mxu0
        %v2386 = vadd.f32 %v1676, %v2385
        %v2387 = vpop.f32.mrb[0].mxu0
        %v2388 = vadd.f32 %v1681, %v2387
        %v2389 = vpop.f32.mrb[0].mxu0
        %v2390 = vadd.f32 %v1681, %v2389
        %2391 = vmatprep.mubr.bf16.mxu0 0
        %2392 = vmatmul.mubr.bf16.gmra.mrb[0].mxu0 %v1816
        %v2393 = vpop.f32.mrb[0].mxu0
        %v2394 = vadd.f32 %v1686, %v2393
        %v2395 = vpop.f32.mrb[0].mxu0
        %v2396 = vadd.f32 %v1686, %v2395
        %v2397 = vpop.f32.mrb[0].mxu0
        %v2398 = vadd.f32 %v1691, %v2397
        %v2399 = vpop.f32.mrb[0].mxu0
        %v2400 = vadd.f32 %v1691, %v2399
        %2401 = vmatprep.mubr.bf16.mxu0 0
        %2402 = vmatmul.mubr.bf16.gmra.mrb[0].mxu0 %v1819
        %v2403 = vpop.f32.mrb[0].mxu0
        %v2404 = vadd.f32 %v1696, %v2403
        %v2405 = vpop.f32.mrb[0].mxu0
        %v2406 = vadd.f32 %v1696, %v2405
        %v2407 = vpop.f32.mrb[0].mxu0
        %v2408 = vadd.f32 %v1701, %v2407
        %v2409 = vpop.f32.mrb[0].mxu0
        %v2410 = vadd.f32 %v1701, %v2409
        %2411 = vmatprep.mubr.bf16.mxu0 0
        %2412 = vmatmul.mubr.bf16.gmra.mrb[0].mxu0 %v1822
        %v2413 = vpop.f32.mrb[0].mxu0
        %v2414 = vadd.f32 %v1706, %v2413
        %v2415 = vpop.f32.mrb[0].mxu0
        %v2416 = vadd.f32 %v1706, %v2415
        %v2417 = vpop.f32.mrb[0].mxu0
        %v2418 = vadd.f32 %v1711, %v2417
        %v2419 = vpop.f32.mrb[0].mxu0
        %v2420 = vadd.f32 %v1711, %v2419
        %2421 = vmatprep.mubr.bf16.mxu0 0
        %2422 = vmatmul.mubr.bf16.gmra.mrb[0].mxu0 %v1825
        %v2423 = vpop.f32.mrb[0].mxu0
        %v2424 = vadd.f32 %v1716, %v2423
        %v2425 = vpop.f32.mrb[0].mxu0
        %v2426 = vadd.f32 %v1716, %v2425
        %v2427 = vpop.f32.mrb[0].mxu0
        %v2428 = vadd.f32 %v1721, %v2427
        %v2429 = vpop.f32.mrb[0].mxu0
        %v2430 = vadd.f32 %v1721, %v2429
        %2431 = vmatprep.mubr.bf16.mxu0 0
        %2432 = vmatmul.mubr.bf16.gmra.mrb[0].mxu0 %v1828
        %v2433 = vpop.f32.mrb[0].mxu0
        %v2434 = vadd.f32 %v1726, %v2433
        %v2435 = vpop.f32.mrb[0].mxu0
        %v2436 = vadd.f32 %v1726, %v2435
        %v2437 = vpop.f32.mrb[0].mxu0
        %v2438 = vadd.f32 %v1731, %v2437
        %v2439 = vpop.f32.mrb[0].mxu0
        %v2440 = vadd.f32 %v1731, %v2439
        %2441 = vdwg.mxu0
        %2442 = vst [vmem:[#allocation2] sm:$0xff] %v1865
        %2443 = vst [vmem:[#allocation2 + $0x8] sm:$0xff] %v1867
        %2444 = vst [vmem:[#allocation2 + $0x10] sm:$0xff] %v2018
        %2445 = vst [vmem:[#allocation2 + $0x18] sm:$0xff] %v2020
        %2446 = vst [vmem:[#allocation2 + $0x20] sm:$0xff] %v2171
        %2447 = vst [vmem:[#allocation2 + $0x28] sm:$0xff] %v2173
        %2448 = vst [vmem:[#allocation2 + $0x30] sm:$0xff] %v2324
        %2449 = vst [vmem:[#allocation2 + $0x38] sm:$0xff] %v2326
        %2450 = vst [vmem:[#allocation2 + $0x40] sm:$0xff] %v1869
        %2451 = vst [vmem:[#allocation2 + $0x48] sm:$0xff] %v1871
        %2452 = vst [vmem:[#allocation2 + $0x50] sm:$0xff] %v2022
        %2453 = vst [vmem:[#allocation2 + $0x58] sm:$0xff] %v2024
        %2454 = vst [vmem:[#allocation2 + $0x60] sm:$0xff] %v2175
        %2455 = vst [vmem:[#allocation2 + $0x68] sm:$0xff] %v2177
        %2456 = vst [vmem:[#allocation2 + $0x70] sm:$0xff] %v2328
        %2457 = vst [vmem:[#allocation2 + $0x78] sm:$0xff] %v2330
        %2458 = vst [vmem:[#allocation2 + $0x80] sm:$0xff] %v1875
        %2459 = vst [vmem:[#allocation2 + $0x88] sm:$0xff] %v1877
        %2460 = vst [vmem:[#allocation2 + $0x90] sm:$0xff] %v2028
        %2461 = vst [vmem:[#allocation2 + $0x98] sm:$0xff] %v2030
        %2462 = vst [vmem:[#allocation2 + $0xa0] sm:$0xff] %v2181
        %2463 = vst [vmem:[#allocation2 + $0xa8] sm:$0xff] %v2183
        %2464 = vst [vmem:[#allocation2 + $0xb0] sm:$0xff] %v2334
        %2465 = vst [vmem:[#allocation2 + $0xb8] sm:$0xff] %v2336
        %2466 = vst [vmem:[#allocation2 + $0xc0] sm:$0xff] %v1879
        %2467 = vst [vmem:[#allocation2 + $0xc8] sm:$0xff] %v1881
        %2468 = vst [vmem:[#allocation2 + $0xd0] sm:$0xff] %v2032
        %2469 = vst [vmem:[#allocation2 + $0xd8] sm:$0xff] %v2034
        %2470 = vst [vmem:[#allocation2 + $0xe0] sm:$0xff] %v2185
        %2471 = vst [vmem:[#allocation2 + $0xe8] sm:$0xff] %v2187
        %2472 = vst [vmem:[#allocation2 + $0xf0] sm:$0xff] %v2338
        %2473 = vst [vmem:[#allocation2 + $0xf8] sm:$0xff] %v2340
        %2474 = vst [vmem:[#allocation2 + $0x100] sm:$0xff] %v1885
        %2475 = vst [vmem:[#allocation2 + $0x108] sm:$0xff] %v1887
        %2476 = vst [vmem:[#allocation2 + $0x110] sm:$0xff] %v2038
        %2477 = vst [vmem:[#allocation2 + $0x118] sm:$0xff] %v2040
        %2478 = vst [vmem:[#allocation2 + $0x120] sm:$0xff] %v2191
        %2479 = vst [vmem:[#allocation2 + $0x128] sm:$0xff] %v2193
        %2480 = vst [vmem:[#allocation2 + $0x130] sm:$0xff] %v2344
        %2481 = vst [vmem:[#allocation2 + $0x138] sm:$0xff] %v2346
        %2482 = vst [vmem:[#allocation2 + $0x140] sm:$0xff] %v1889
        %2483 = vst [vmem:[#allocation2 + $0x148] sm:$0xff] %v1891
        %2484 = vst [vmem:[#allocation2 + $0x150] sm:$0xff] %v2042
        %2485 = vst [vmem:[#allocation2 + $0x158] sm:$0xff] %v2044
        %2486 = vst [vmem:[#allocation2 + $0x160] sm:$0xff] %v2195
        %2487 = vst [vmem:[#allocation2 + $0x168] sm:$0xff] %v2197
        %2488 = vst [vmem:[#allocation2 + $0x170] sm:$0xff] %v2348
        %2489 = vst [vmem:[#allocation2 + $0x178] sm:$0xff] %v2350
        %2490 = vst [vmem:[#allocation2 + $0x180] sm:$0xff] %v1895
        %2491 = vst [vmem:[#allocation2 + $0x188] sm:$0xff] %v1897
        %2492 = vst [vmem:[#allocation2 + $0x190] sm:$0xff] %v2048
        %2493 = vst [vmem:[#allocation2 + $0x198] sm:$0xff] %v2050
        %2494 = vst [vmem:[#allocation2 + $0x1a0] sm:$0xff] %v2201
        %2495 = vst [vmem:[#allocation2 + $0x1a8] sm:$0xff] %v2203
        %2496 = vst [vmem:[#allocation2 + $0x1b0] sm:$0xff] %v2354
        %2497 = vst [vmem:[#allocation2 + $0x1b8] sm:$0xff] %v2356
        %2498 = vst [vmem:[#allocation2 + $0x1c0] sm:$0xff] %v1899
        %2499 = vst [vmem:[#allocation2 + $0x1c8] sm:$0xff] %v1901
        %2500 = vst [vmem:[#allocation2 + $0x1d0] sm:$0xff] %v2052
        %2501 = vst [vmem:[#allocation2 + $0x1d8] sm:$0xff] %v2054
        %2502 = vst [vmem:[#allocation2 + $0x1e0] sm:$0xff] %v2205
        %2503 = vst [vmem:[#allocation2 + $0x1e8] sm:$0xff] %v2207
        %2504 = vst [vmem:[#allocation2 + $0x1f0] sm:$0xff] %v2358
        %2505 = vst [vmem:[#allocation2 + $0x1f8] sm:$0xff] %v2360
        %2506 = vst [vmem:[#allocation2 + $0x200] sm:$0xff] %v1905
        %2507 = vst [vmem:[#allocation2 + $0x208] sm:$0xff] %v1907
        %2508 = vst [vmem:[#allocation2 + $0x210] sm:$0xff] %v2058
        %2509 = vst [vmem:[#allocation2 + $0x218] sm:$0xff] %v2060
        %2510 = vst [vmem:[#allocation2 + $0x220] sm:$0xff] %v2211
        %2511 = vst [vmem:[#allocation2 + $0x228] sm:$0xff] %v2213
        %2512 = vst [vmem:[#allocation2 + $0x230] sm:$0xff] %v2364
        %2513 = vst [vmem:[#allocation2 + $0x238] sm:$0xff] %v2366
        %2514 = vst [vmem:[#allocation2 + $0x240] sm:$0xff] %v1909
        %2515 = vst [vmem:[#allocation2 + $0x248] sm:$0xff] %v1911
        %2516 = vst [vmem:[#allocation2 + $0x250] sm:$0xff] %v2062
        %2517 = vst [vmem:[#allocation2 + $0x258] sm:$0xff] %v2064
        %2518 = vst [vmem:[#allocation2 + $0x260] sm:$0xff] %v2215
        %2519 = vst [vmem:[#allocation2 + $0x268] sm:$0xff] %v2217
        %2520 = vst [vmem:[#allocation2 + $0x270] sm:$0xff] %v2368
        %2521 = vst [vmem:[#allocation2 + $0x278] sm:$0xff] %v2370
        %2522 = vst [vmem:[#allocation2 + $0x280] sm:$0xff] %v1915
        %2523 = vst [vmem:[#allocation2 + $0x288] sm:$0xff] %v1917
        %2524 = vst [vmem:[#allocation2 + $0x290] sm:$0xff] %v2068
        %2525 = vst [vmem:[#allocation2 + $0x298] sm:$0xff] %v2070
        %2526 = vst [vmem:[#allocation2 + $0x2a0] sm:$0xff] %v2221
        %2527 = vst [vmem:[#allocation2 + $0x2a8] sm:$0xff] %v2223
        %2528 = vst [vmem:[#allocation2 + $0x2b0] sm:$0xff] %v2374
        %2529 = vst [vmem:[#allocation2 + $0x2b8] sm:$0xff] %v2376
        %2530 = vst [vmem:[#allocation2 + $0x2c0] sm:$0xff] %v1919
        %2531 = vst [vmem:[#allocation2 + $0x2c8] sm:$0xff] %v1921
        %2532 = vst [vmem:[#allocation2 + $0x2d0] sm:$0xff] %v2072
        %2533 = vst [vmem:[#allocation2 + $0x2d8] sm:$0xff] %v2074
        %2534 = vst [vmem:[#allocation2 + $0x2e0] sm:$0xff] %v2225
        %2535 = vst [vmem:[#allocation2 + $0x2e8] sm:$0xff] %v2227
        %2536 = vst [vmem:[#allocation2 + $0x2f0] sm:$0xff] %v2378
        %2537 = vst [vmem:[#allocation2 + $0x2f8] sm:$0xff] %v2380
        %2538 = vst [vmem:[#allocation2 + $0x300] sm:$0xff] %v1925
        %2539 = vst [vmem:[#allocation2 + $0x308] sm:$0xff] %v1927
        %2540 = vst [vmem:[#allocation2 + $0x310] sm:$0xff] %v2078
        %2541 = vst [vmem:[#allocation2 + $0x318] sm:$0xff] %v2080
        %2542 = vst [vmem:[#allocation2 + $0x320] sm:$0xff] %v2231
        %2543 = vst [vmem:[#allocation2 + $0x328] sm:$0xff] %v2233
        %2544 = vst [vmem:[#allocation2 + $0x330] sm:$0xff] %v2384
        %2545 = vst [vmem:[#allocation2 + $0x338] sm:$0xff] %v2386
        %2546 = vst [vmem:[#allocation2 + $0x340] sm:$0xff] %v1929
        %2547 = vst [vmem:[#allocation2 + $0x348] sm:$0xff] %v1931
        %2548 = vst [vmem:[#allocation2 + $0x350] sm:$0xff] %v2082
        %2549 = vst [vmem:[#allocation2 + $0x358] sm:$0xff] %v2084
        %2550 = vst [vmem:[#allocation2 + $0x360] sm:$0xff] %v2235
        %2551 = vst [vmem:[#allocation2 + $0x368] sm:$0xff] %v2237
        %2552 = vst [vmem:[#allocation2 + $0x370] sm:$0xff] %v2388
        %2553 = vst [vmem:[#allocation2 + $0x378] sm:$0xff] %v2390
        %2554 = vst [vmem:[#allocation2 + $0x380] sm:$0xff] %v1935
        %2555 = vst [vmem:[#allocation2 + $0x388] sm:$0xff] %v1937
        %2556 = vst [vmem:[#allocation2 + $0x390] sm:$0xff] %v2088
        %2557 = vst [vmem:[#allocation2 + $0x398] sm:$0xff] %v2090
        %2558 = vst [vmem:[#allocation2 + $0x3a0] sm:$0xff] %v2241
        %2559 = vst [vmem:[#allocation2 + $0x3a8] sm:$0xff] %v2243
        %2560 = vst [vmem:[#allocation2 + $0x3b0] sm:$0xff] %v2394
        %2561 = vst [vmem:[#allocation2 + $0x3b8] sm:$0xff] %v2396
        %2562 = vst [vmem:[#allocation2 + $0x3c0] sm:$0xff] %v1939
        %2563 = vst [vmem:[#allocation2 + $0x3c8] sm:$0xff] %v1941
        %2564 = vst [vmem:[#allocation2 + $0x3d0] sm:$0xff] %v2092
        %2565 = vst [vmem:[#allocation2 + $0x3d8] sm:$0xff] %v2094
        %2566 = vst [vmem:[#allocation2 + $0x3e0] sm:$0xff] %v2245
        %2567 = vst [vmem:[#allocation2 + $0x3e8] sm:$0xff] %v2247
        %2568 = vst [vmem:[#allocation2 + $0x3f0] sm:$0xff] %v2398
        %2569 = vst [vmem:[#allocation2 + $0x3f8] sm:$0xff] %v2400
        %2570 = vst [vmem:[#allocation2 + $0x400] sm:$0xff] %v1945
        %2571 = vst [vmem:[#allocation2 + $0x408] sm:$0xff] %v1947
        %2572 = vst [vmem:[#allocation2 + $0x410] sm:$0xff] %v2098
        %2573 = vst [vmem:[#allocation2 + $0x418] sm:$0xff] %v2100
        %2574 = vst [vmem:[#allocation2 + $0x420] sm:$0xff] %v2251
        %2575 = vst [vmem:[#allocation2 + $0x428] sm:$0xff] %v2253
        %2576 = vst [vmem:[#allocation2 + $0x430] sm:$0xff] %v2404
        %2577 = vst [vmem:[#allocation2 + $0x438] sm:$0xff] %v2406
        %2578 = vst [vmem:[#allocation2 + $0x440] sm:$0xff] %v1949
        %2579 = vst [vmem:[#allocation2 + $0x448] sm:$0xff] %v1951
        %2580 = vst [vmem:[#allocation2 + $0x450] sm:$0xff] %v2102
        %2581 = vst [vmem:[#allocation2 + $0x458] sm:$0xff] %v2104
        %2582 = vst [vmem:[#allocation2 + $0x460] sm:$0xff] %v2255
        %2583 = vst [vmem:[#allocation2 + $0x468] sm:$0xff] %v2257
        %2584 = vst [vmem:[#allocation2 + $0x470] sm:$0xff] %v2408
        %2585 = vst [vmem:[#allocation2 + $0x478] sm:$0xff] %v2410
        %2586 = vst [vmem:[#allocation2 + $0x480] sm:$0xff] %v1955
        %2587 = vst [vmem:[#allocation2 + $0x488] sm:$0xff] %v1957
        %2588 = vst [vmem:[#allocation2 + $0x490] sm:$0xff] %v2108
        %2589 = vst [vmem:[#allocation2 + $0x498] sm:$0xff] %v2110
        %2590 = vst [vmem:[#allocation2 + $0x4a0] sm:$0xff] %v2261
        %2591 = vst [vmem:[#allocation2 + $0x4a8] sm:$0xff] %v2263
        %2592 = vst [vmem:[#allocation2 + $0x4b0] sm:$0xff] %v2414
        %2593 = vst [vmem:[#allocation2 + $0x4b8] sm:$0xff] %v2416
        %2594 = vst [vmem:[#allocation2 + $0x4c0] sm:$0xff] %v1959
        %2595 = vst [vmem:[#allocation2 + $0x4c8] sm:$0xff] %v1961
        %2596 = vst [vmem:[#allocation2 + $0x4d0] sm:$0xff] %v2112
        %2597 = vst [vmem:[#allocation2 + $0x4d8] sm:$0xff] %v2114
        %2598 = vst [vmem:[#allocation2 + $0x4e0] sm:$0xff] %v2265
        %2599 = vst [vmem:[#allocation2 + $0x4e8] sm:$0xff] %v2267
        %2600 = vst [vmem:[#allocation2 + $0x4f0] sm:$0xff] %v2418
        %2601 = vst [vmem:[#allocation2 + $0x4f8] sm:$0xff] %v2420
        %2602 = vst [vmem:[#allocation2 + $0x500] sm:$0xff] %v1965
        %2603 = vst [vmem:[#allocation2 + $0x508] sm:$0xff] %v1967
        %2604 = vst [vmem:[#allocation2 + $0x510] sm:$0xff] %v2118
        %2605 = vst [vmem:[#allocation2 + $0x518] sm:$0xff] %v2120
        %2606 = vst [vmem:[#allocation2 + $0x520] sm:$0xff] %v2271
        %2607 = vst [vmem:[#allocation2 + $0x528] sm:$0xff] %v2273
        %2608 = vst [vmem:[#allocation2 + $0x530] sm:$0xff] %v2424
        %2609 = vst [vmem:[#allocation2 + $0x538] sm:$0xff] %v2426
        %2610 = vst [vmem:[#allocation2 + $0x540] sm:$0xff] %v1969
        %2611 = vst [vmem:[#allocation2 + $0x548] sm:$0xff] %v1971
        %2612 = vst [vmem:[#allocation2 + $0x550] sm:$0xff] %v2122
        %2613 = vst [vmem:[#allocation2 + $0x558] sm:$0xff] %v2124
        %2614 = vst [vmem:[#allocation2 + $0x560] sm:$0xff] %v2275
        %2615 = vst [vmem:[#allocation2 + $0x568] sm:$0xff] %v2277
        %2616 = vst [vmem:[#allocation2 + $0x570] sm:$0xff] %v2428
        %2617 = vst [vmem:[#allocation2 + $0x578] sm:$0xff] %v2430
        %2618 = vst [vmem:[#allocation2 + $0x580] sm:$0xff] %v1975
        %2619 = vst [vmem:[#allocation2 + $0x588] sm:$0xff] %v1977
        %2620 = vst [vmem:[#allocation2 + $0x590] sm:$0xff] %v2128
        %2621 = vst [vmem:[#allocation2 + $0x598] sm:$0xff] %v2130
        %2622 = vst [vmem:[#allocation2 + $0x5a0] sm:$0xff] %v2281
        %2623 = vst [vmem:[#allocation2 + $0x5a8] sm:$0xff] %v2283
        %2624 = vst [vmem:[#allocation2 + $0x5b0] sm:$0xff] %v2434
        %2625 = vst [vmem:[#allocation2 + $0x5b8] sm:$0xff] %v2436
        %2626 = vst [vmem:[#allocation2 + $0x5c0] sm:$0xff] %v1979
        %2627 = vst [vmem:[#allocation2 + $0x5c8] sm:$0xff] %v1981
        %2628 = vst [vmem:[#allocation2 + $0x5d0] sm:$0xff] %v2132
        %2629 = vst [vmem:[#allocation2 + $0x5d8] sm:$0xff] %v2134
        %2630 = vst [vmem:[#allocation2 + $0x5e0] sm:$0xff] %v2285
        %2631 = vst [vmem:[#allocation2 + $0x5e8] sm:$0xff] %v2287
        %2632 = vst [vmem:[#allocation2 + $0x5f0] sm:$0xff] %v2438
        %2633 = vst [vmem:[#allocation2 + $0x5f8] sm:$0xff] %v2440
        %v2634 = vld [vmem:[#allocation2] sm:$0xff]
        %v2635 = vld [vmem:[#allocation2 + $0x8] sm:$0xff]
        %v2636 = vld [vmem:[#allocation2 + $0x10] sm:$0xff]
        %v2637 = vld [vmem:[#allocation2 + $0x18] sm:$0xff]
        %v2638 = vld [vmem:[#allocation2 + $0x20] sm:$0xff]
        %v2639 = vld [vmem:[#allocation2 + $0x28] sm:$0xff]
        %v2640 = vld [vmem:[#allocation2 + $0x30] sm:$0xff]
        %v2641 = vld [vmem:[#allocation2 + $0x38] sm:$0xff]
        %v2642 = vld [vmem:[#allocation2 + $0x40] sm:$0xff]
        %v2643 = vld [vmem:[#allocation2 + $0x48] sm:$0xff]
        %v2644 = vld [vmem:[#allocation2 + $0x50] sm:$0xff]
        %v2645 = vld [vmem:[#allocation2 + $0x58] sm:$0xff]
        %v2646 = vld [vmem:[#allocation2 + $0x60] sm:$0xff]
        %v2647 = vld [vmem:[#allocation2 + $0x68] sm:$0xff]
        %v2648 = vld [vmem:[#allocation2 + $0x70] sm:$0xff]
        %v2649 = vld [vmem:[#allocation2 + $0x78] sm:$0xff]
        %v2650 = vld [vmem:[#allocation2 + $0x80] sm:$0xff]
        %v2651 = vld [vmem:[#allocation2 + $0x88] sm:$0xff]
        %v2652 = vld [vmem:[#allocation2 + $0x90] sm:$0xff]
        %v2653 = vld [vmem:[#allocation2 + $0x98] sm:$0xff]
        %v2654 = vld [vmem:[#allocation2 + $0xa0] sm:$0xff]
        %v2655 = vld [vmem:[#allocation2 + $0xa8] sm:$0xff]
        %v2656 = vld [vmem:[#allocation2 + $0xb0] sm:$0xff]
        %v2657 = vld [vmem:[#allocation2 + $0xb8] sm:$0xff]
        %v2658 = vld [vmem:[#allocation2 + $0xc0] sm:$0xff]
        %v2659 = vld [vmem:[#allocation2 + $0xc8] sm:$0xff]
        %v2660 = vld [vmem:[#allocation2 + $0xd0] sm:$0xff]
        %v2661 = vld [vmem:[#allocation2 + $0xd8] sm:$0xff]
        %v2662 = vld [vmem:[#allocation2 + $0xe0] sm:$0xff]
        %v2663 = vld [vmem:[#allocation2 + $0xe8] sm:$0xff]
        %v2664 = vld [vmem:[#allocation2 + $0xf0] sm:$0xff]
        %v2665 = vld [vmem:[#allocation2 + $0xf8] sm:$0xff]
        %v2666 = vld [vmem:[#allocation2 + $0x100] sm:$0xff]
        %v2667 = vld [vmem:[#allocation2 + $0x108] sm:$0xff]
        %v2668 = vld [vmem:[#allocation2 + $0x110] sm:$0xff]
        %v2669 = vld [vmem:[#allocation2 + $0x118] sm:$0xff]
        %v2670 = vld [vmem:[#allocation2 + $0x120] sm:$0xff]
        %v2671 = vld [vmem:[#allocation2 + $0x128] sm:$0xff]
        %v2672 = vld [vmem:[#allocation2 + $0x130] sm:$0xff]
        %v2673 = vld [vmem:[#allocation2 + $0x138] sm:$0xff]
        %v2674 = vld [vmem:[#allocation2 + $0x140] sm:$0xff]
        %v2675 = vld [vmem:[#allocation2 + $0x148] sm:$0xff]
        %v2676 = vld [vmem:[#allocation2 + $0x150] sm:$0xff]
        %v2677 = vld [vmem:[#allocation2 + $0x158] sm:$0xff]
        %v2678 = vld [vmem:[#allocation2 + $0x160] sm:$0xff]
        %v2679 = vld [vmem:[#allocation2 + $0x168] sm:$0xff]
        %v2680 = vld [vmem:[#allocation2 + $0x170] sm:$0xff]
        %v2681 = vld [vmem:[#allocation2 + $0x178] sm:$0xff]
        %v2682 = vld [vmem:[#allocation2 + $0x180] sm:$0xff]
        %v2683 = vld [vmem:[#allocation2 + $0x188] sm:$0xff]
        %v2684 = vld [vmem:[#allocation2 + $0x190] sm:$0xff]
        %v2685 = vld [vmem:[#allocation2 + $0x198] sm:$0xff]
        %v2686 = vld [vmem:[#allocation2 + $0x1a0] sm:$0xff]
        %v2687 = vld [vmem:[#allocation2 + $0x1a8] sm:$0xff]
        %v2688 = vld [vmem:[#allocation2 + $0x1b0] sm:$0xff]
        %v2689 = vld [vmem:[#allocation2 + $0x1b8] sm:$0xff]
        %v2690 = vld [vmem:[#allocation2 + $0x1c0] sm:$0xff]
        %v2691 = vld [vmem:[#allocation2 + $0x1c8] sm:$0xff]
        %v2692 = vld [vmem:[#allocation2 + $0x1d0] sm:$0xff]
        %v2693 = vld [vmem:[#allocation2 + $0x1d8] sm:$0xff]
        %v2694 = vld [vmem:[#allocation2 + $0x1e0] sm:$0xff]
        %v2695 = vld [vmem:[#allocation2 + $0x1e8] sm:$0xff]
        %v2696 = vld [vmem:[#allocation2 + $0x1f0] sm:$0xff]
        %v2697 = vld [vmem:[#allocation2 + $0x1f8] sm:$0xff]
        %v2698 = vmul.f32 %v2634, %v812
        %v2699 = vmul.f32 %v2635, %v814
        %v2700 = vmul.f32 %v2636, %v925
        %v2701 = vmul.f32 %v2637, %v927
        %v2702 = vmul.f32 %v2638, %v1038
        %v2703 = vmul.f32 %v2639, %v1040
        %v2704 = vmul.f32 %v2640, %v1151
        %v2705 = vmul.f32 %v2641, %v1153
        %v2706 = vmul.f32 %v2642, %v816
        %v2707 = vmul.f32 %v2643, %v818
        %v2708 = vmul.f32 %v2644, %v929
        %v2709 = vmul.f32 %v2645, %v931
        %v2710 = vmul.f32 %v2646, %v1042
        %v2711 = vmul.f32 %v2647, %v1044
        %v2712 = vmul.f32 %v2648, %v1155
        %v2713 = vmul.f32 %v2649, %v1157
        %v2714 = vmul.f32 %v2650, %v822
        %v2715 = vmul.f32 %v2651, %v824
        %v2716 = vmul.f32 %v2652, %v935
        %v2717 = vmul.f32 %v2653, %v937
        %v2718 = vmul.f32 %v2654, %v1048
        %v2719 = vmul.f32 %v2655, %v1050
        %v2720 = vmul.f32 %v2656, %v1161
        %v2721 = vmul.f32 %v2657, %v1163
        %v2722 = vmul.f32 %v2658, %v826
        %v2723 = vmul.f32 %v2659, %v828
        %v2724 = vmul.f32 %v2660, %v939
        %v2725 = vmul.f32 %v2661, %v941
        %v2726 = vmul.f32 %v2662, %v1052
        %v2727 = vmul.f32 %v2663, %v1054
        %v2728 = vmul.f32 %v2664, %v1165
        %v2729 = vmul.f32 %v2665, %v1167
        %v2730 = vadd.f32 %v2698, %v2666
        %v2731 = vadd.f32 %v2699, %v2667
        %v2732 = vadd.f32 %v2700, %v2668
        %v2733 = vadd.f32 %v2701, %v2669
        %v2734 = vadd.f32 %v2702, %v2670
        %v2735 = vadd.f32 %v2703, %v2671
        %v2736 = vadd.f32 %v2704, %v2672
        %v2737 = vadd.f32 %v2705, %v2673
        %v2738 = vadd.f32 %v2706, %v2674
        %v2739 = vadd.f32 %v2707, %v2675
        %v2740 = vadd.f32 %v2708, %v2676
        %v2741 = vadd.f32 %v2709, %v2677
        %v2742 = vadd.f32 %v2710, %v2678
        %v2743 = vadd.f32 %v2711, %v2679
        %v2744 = vadd.f32 %v2712, %v2680
        %v2745 = vadd.f32 %v2713, %v2681
        %v2746 = vadd.f32 %v2714, %v2682
        %v2747 = vadd.f32 %v2715, %v2683
        %v2748 = vadd.f32 %v2716, %v2684
        %v2749 = vadd.f32 %v2717, %v2685
        %v2750 = vadd.f32 %v2718, %v2686
        %v2751 = vadd.f32 %v2719, %v2687
        %v2752 = vadd.f32 %v2720, %v2688
        %v2753 = vadd.f32 %v2721, %v2689
        %v2754 = vadd.f32 %v2722, %v2690
        %v2755 = vadd.f32 %v2723, %v2691
        %v2756 = vadd.f32 %v2724, %v2692
        %v2757 = vadd.f32 %v2725, %v2693
        %v2758 = vadd.f32 %v2726, %v2694
        %v2759 = vadd.f32 %v2727, %v2695
        %v2760 = vadd.f32 %v2728, %v2696
        %v2761 = vadd.f32 %v2729, %v2697
        %v2762 = vmax.f32 %v2730, 0.0
        %v2763 = vmax.f32 %v2731, 0.0
        %v2764 = vmax.f32 %v2732, 0.0
        %v2765 = vmax.f32 %v2733, 0.0
        %v2766 = vmax.f32 %v2734, 0.0
        %v2767 = vmax.f32 %v2735, 0.0
        %v2768 = vmax.f32 %v2736, 0.0
        %v2769 = vmax.f32 %v2737, 0.0
        %v2770 = vmax.f32 %v2738, 0.0
        %v2771 = vmax.f32 %v2739, 0.0
        %v2772 = vmax.f32 %v2740, 0.0
        %v2773 = vmax.f32 %v2741, 0.0
        %v2774 = vmax.f32 %v2742, 0.0
        %v2775 = vmax.f32 %v2743, 0.0
        %v2776 = vmax.f32 %v2744, 0.0
        %v2777 = vmax.f32 %v2745, 0.0
        %v2778 = vmax.f32 %v2746, 0.0
        %v2779 = vmax.f32 %v2747, 0.0
        %v2780 = vmax.f32 %v2748, 0.0
        %v2781 = vmax.f32 %v2749, 0.0
        %v2782 = vmax.f32 %v2750, 0.0
        %v2783 = vmax.f32 %v2751, 0.0
        %v2784 = vmax.f32 %v2752, 0.0
        %v2785 = vmax.f32 %v2753, 0.0
        %v2786 = vmax.f32 %v2754, 0.0
        %v2787 = vmax.f32 %v2755, 0.0
        %v2788 = vmax.f32 %v2756, 0.0
        %v2789 = vmax.f32 %v2757, 0.0
        %v2790 = vmax.f32 %v2758, 0.0
        %v2791 = vmax.f32 %v2759, 0.0
        %v2792 = vmax.f32 %v2760, 0.0
        %v2793 = vmax.f32 %v2761, 0.0
        %v2794 = vld [vmem:[%s5] sm:$0xf]
        %v2795 = vld [vmem:[%s5 + $0x4] sm:$0xf]
        %v2796 = vld [vmem:[%s5 + $0x8] sm:$0xf]
        %v2797 = vld [vmem:[%s5 + $0xc] sm:$0xf]
        %v2798 = vpack.c.bf16 %v2770, %v2762
        %v2799 = vpack.c.bf16 %v2771, %v2763
        %v2800 = vpack.c.bf16 %v2772, %v2764
        %v2801 = vpack.c.bf16 %v2773, %v2765
        %v2802 = vpack.c.bf16 %v2774, %v2766
        %v2803 = vpack.c.bf16 %v2775, %v2767
        %v2804 = vpack.c.bf16 %v2776, %v2768
        %v2805 = vpack.c.bf16 %v2777, %v2769
        %v2806 = vpack.c.bf16 %v2786, %v2778
        %v2807 = vpack.c.bf16 %v2787, %v2779
        %v2808 = vpack.c.bf16 %v2788, %v2780
        %v2809 = vpack.c.bf16 %v2789, %v2781
        %v2810 = vpack.c.bf16 %v2790, %v2782
        %v2811 = vpack.c.bf16 %v2791, %v2783
        %v2812 = vpack.c.bf16 %v2792, %v2784
        %v2813 = vpack.c.bf16 %v2793, %v2785
        %v2814 = vld [vmem:[%s6] sm:$0xff]
        %v2815 = vld [vmem:[%s6 + $0x8] sm:$0xff]
        %v2816 = vld [vmem:[%s6 + $0x10] sm:$0xff]
        %v2817 = vld [vmem:[%s6 + $0x18] sm:$0xff]
        %2819 = vset.pattern.permute.xlu0 0
        %2820 = vperm.xlu0 %2819, %v2814
        %v2821 = vpop.permute.xlu0 %2820
        %2824 = vset.pattern.permute.xlu0 0
        %2825 = vperm.xlu0 %2824, %v2815
        %v2826 = vpop.permute.xlu0 %2825
        %2829 = vset.pattern.permute.xlu0 0
        %2830 = vperm.xlu0 %2829, %v2816
        %v2831 = vpop.permute.xlu0 %2830
        %2834 = vset.pattern.permute.xlu0 0
        %2835 = vperm.xlu0 %2834, %v2817
        %v2836 = vpop.permute.xlu0 %2835
        %v2842 = vunpack.c.l.b16 %v2794
        %v2843 = vunpack.c.l.b16 %v2795
        %v2844 = vunpack.c.l.b16 %v2796
        %v2845 = vunpack.c.l.b16 %v2797
        %v2846 = vpack.c.b16 %v2843, %v2842
        %v2847 = vpack.c.b16 %v2845, %v2844
        %vm2848 = vcmask 261120
        %v2850 = vsel %vm2848, %v2846, 0
        %v2853 = vsel %vm2848, %v2847, 0
        %2855 = vmatprep.subr.bf16.mxu0 %v2799
        %2856 = vmatpush1.bf16.msra.mxu0 %v2798
        %2857 = vmatprep.subr.bf16.mxu0 %v2807
        %2858 = vmatpush1.bf16.msra.mxu0 %v2806
        %2859 = vmatprep.subr.bf16.mxu0 0
        %2860 = vmatpush1.bf16.msra.mxu0 0
        %2861 = vmatprep.subr.bf16.mxu0 0
        %2862 = vmatpush1.bf16.msra.mxu0 0
        %2863 = vmatprep.subr.bf16.mxu0 0
        %2864 = vmatpush1.bf16.msra.mxu0 0
        %2865 = vmatprep.subr.bf16.mxu0 0
        %2866 = vmatpush1.bf16.msra.mxu0 0
        %2867 = vmatprep.subr.bf16.mxu0 0
        %2868 = vmatpush1.bf16.msra.mxu0 0
        %2869 = vmatprep.subr.bf16.mxu0 0
        %2870 = vmatpush1.bf16.msra.mxu0 0
        %2871 = vmatprep.subr.bf16.mxu0 0
        %2872 = vmatpush1.bf16.msra.mxu0 0
        %2873 = vmatprep.subr.bf16.mxu0 0
        %2874 = vmatpush1.bf16.msra.mxu0 0
        %2875 = vmatprep.subr.bf16.mxu0 0
        %2876 = vmatpush1.bf16.msra.mxu0 0
        %2877 = vmatprep.subr.bf16.mxu0 0
        %2878 = vmatpush1.bf16.msra.mxu0 0
        %2879 = vmatprep.subr.bf16.mxu0 0
        %2880 = vmatpush1.bf16.msra.mxu0 0
        %2881 = vmatprep.subr.bf16.mxu0 0
        %2882 = vmatpush1.bf16.msra.mxu0 0
        %2883 = vmatprep.subr.bf16.mxu0 0
        %2884 = vmatpush1.bf16.msra.mxu0 0
        %2885 = vmatprep.subr.bf16.mxu0 0
        %2886 = vmatpush1.bf16.msra.mxu0 0
        %2887 = vmatprep.mubr.bf16.mxu0 0
        %2888 = vmatmul.mubr.bf16.gmra.mrb[0].mxu0 %v2850
        %v2889 = vpop.f32.mrb[0].mxu0
        %v2890 = vadd.f32 %v2821, %v2889
        %v2891 = vpop.f32.mrb[0].mxu0
        %v2892 = vadd.f32 %v2821, %v2891
        %v2893 = vpop.f32.mrb[0].mxu0
        %v2894 = vadd.f32 %v2826, %v2893
        %v2895 = vpop.f32.mrb[0].mxu0
        %v2896 = vadd.f32 %v2826, %v2895
        %2897 = vmatprep.mubr.bf16.mxu0 0
        %2898 = vmatmul.mubr.bf16.gmra.mrb[0].mxu0 %v2853
        %v2899 = vpop.f32.mrb[0].mxu0
        %v2900 = vadd.f32 %v2831, %v2899
        %v2901 = vpop.f32.mrb[0].mxu0
        %v2902 = vadd.f32 %v2831, %v2901
        %v2903 = vpop.f32.mrb[0].mxu0
        %v2904 = vadd.f32 %v2836, %v2903
        %v2905 = vpop.f32.mrb[0].mxu0
        %v2906 = vadd.f32 %v2836, %v2905
        %2907 = vdwg.mxu0
        %2908 = vmatprep.subr.bf16.mxu0 %v2801
        %2909 = vmatpush1.bf16.msra.mxu0 %v2800
        %2910 = vmatprep.subr.bf16.mxu0 %v2809
        %2911 = vmatpush1.bf16.msra.mxu0 %v2808
        %2912 = vmatprep.subr.bf16.mxu0 0
        %2913 = vmatpush1.bf16.msra.mxu0 0
        %2914 = vmatprep.subr.bf16.mxu0 0
        %2915 = vmatpush1.bf16.msra.mxu0 0
        %2916 = vmatprep.subr.bf16.mxu0 0
        %2917 = vmatpush1.bf16.msra.mxu0 0
        %2918 = vmatprep.subr.bf16.mxu0 0
        %2919 = vmatpush1.bf16.msra.mxu0 0
        %2920 = vmatprep.subr.bf16.mxu0 0
        %2921 = vmatpush1.bf16.msra.mxu0 0
        %2922 = vmatprep.subr.bf16.mxu0 0
        %2923 = vmatpush1.bf16.msra.mxu0 0
        %2924 = vmatprep.subr.bf16.mxu0 0
        %2925 = vmatpush1.bf16.msra.mxu0 0
        %2926 = vmatprep.subr.bf16.mxu0 0
        %2927 = vmatpush1.bf16.msra.mxu0 0
        %2928 = vmatprep.subr.bf16.mxu0 0
        %2929 = vmatpush1.bf16.msra.mxu0 0
        %2930 = vmatprep.subr.bf16.mxu0 0
        %2931 = vmatpush1.bf16.msra.mxu0 0
        %2932 = vmatprep.subr.bf16.mxu0 0
        %2933 = vmatpush1.bf16.msra.mxu0 0
        %2934 = vmatprep.subr.bf16.mxu0 0
        %2935 = vmatpush1.bf16.msra.mxu0 0
        %2936 = vmatprep.subr.bf16.mxu0 0
        %2937 = vmatpush1.bf16.msra.mxu0 0
        %2938 = vmatprep.subr.bf16.mxu0 0
        %2939 = vmatpush1.bf16.msra.mxu0 0
        %2940 = vmatprep.mubr.bf16.mxu0 0
        %2941 = vmatmul.mubr.bf16.gmra.mrb[0].mxu0 %v2850
        %v2942 = vpop.f32.mrb[0].mxu0
        %v2943 = vadd.f32 %v2821, %v2942
        %v2944 = vpop.f32.mrb[0].mxu0
        %v2945 = vadd.f32 %v2821, %v2944
        %v2946 = vpop.f32.mrb[0].mxu0
        %v2947 = vadd.f32 %v2826, %v2946
        %v2948 = vpop.f32.mrb[0].mxu0
        %v2949 = vadd.f32 %v2826, %v2948
        %2950 = vmatprep.mubr.bf16.mxu0 0
        %2951 = vmatmul.mubr.bf16.gmra.mrb[0].mxu0 %v2853
        %v2952 = vpop.f32.mrb[0].mxu0
        %v2953 = vadd.f32 %v2831, %v2952
        %v2954 = vpop.f32.mrb[0].mxu0
        %v2955 = vadd.f32 %v2831, %v2954
        %v2956 = vpop.f32.mrb[0].mxu0
        %v2957 = vadd.f32 %v2836, %v2956
        %v2958 = vpop.f32.mrb[0].mxu0
        %v2959 = vadd.f32 %v2836, %v2958
        %2960 = vdwg.mxu0
        %2961 = vmatprep.subr.bf16.mxu0 %v2803
        %2962 = vmatpush1.bf16.msra.mxu0 %v2802
        %2963 = vmatprep.subr.bf16.mxu0 %v2811
        %2964 = vmatpush1.bf16.msra.mxu0 %v2810
        %2965 = vmatprep.subr.bf16.mxu0 0
        %2966 = vmatpush1.bf16.msra.mxu0 0
        %2967 = vmatprep.subr.bf16.mxu0 0
        %2968 = vmatpush1.bf16.msra.mxu0 0
        %2969 = vmatprep.subr.bf16.mxu0 0
        %2970 = vmatpush1.bf16.msra.mxu0 0
        %2971 = vmatprep.subr.bf16.mxu0 0
        %2972 = vmatpush1.bf16.msra.mxu0 0
        %2973 = vmatprep.subr.bf16.mxu0 0
        %2974 = vmatpush1.bf16.msra.mxu0 0
        %2975 = vmatprep.subr.bf16.mxu0 0
        %2976 = vmatpush1.bf16.msra.mxu0 0
        %2977 = vmatprep.subr.bf16.mxu0 0
        %2978 = vmatpush1.bf16.msra.mxu0 0
        %2979 = vmatprep.subr.bf16.mxu0 0
        %2980 = vmatpush1.bf16.msra.mxu0 0
        %2981 = vmatprep.subr.bf16.mxu0 0
        %2982 = vmatpush1.bf16.msra.mxu0 0
        %2983 = vmatprep.subr.bf16.mxu0 0
        %2984 = vmatpush1.bf16.msra.mxu0 0
        %2985 = vmatprep.subr.bf16.mxu0 0
        %2986 = vmatpush1.bf16.msra.mxu0 0
        %2987 = vmatprep.subr.bf16.mxu0 0
        %2988 = vmatpush1.bf16.msra.mxu0 0
        %2989 = vmatprep.subr.bf16.mxu0 0
        %2990 = vmatpush1.bf16.msra.mxu0 0
        %2991 = vmatprep.subr.bf16.mxu0 0
        %2992 = vmatpush1.bf16.msra.mxu0 0
        %2993 = vmatprep.mubr.bf16.mxu0 0
        %2994 = vmatmul.mubr.bf16.gmra.mrb[0].mxu0 %v2850
        %v2995 = vpop.f32.mrb[0].mxu0
        %v2996 = vadd.f32 %v2821, %v2995
        %v2997 = vpop.f32.mrb[0].mxu0
        %v2998 = vadd.f32 %v2821, %v2997
        %v2999 = vpop.f32.mrb[0].mxu0
        %v3000 = vadd.f32 %v2826, %v2999
        %v3001 = vpop.f32.mrb[0].mxu0
        %v3002 = vadd.f32 %v2826, %v3001
        %3003 = vmatprep.mubr.bf16.mxu0 0
        %3004 = vmatmul.mubr.bf16.gmra.mrb[0].mxu0 %v2853
        %v3005 = vpop.f32.mrb[0].mxu0
        %v3006 = vadd.f32 %v2831, %v3005
        %v3007 = vpop.f32.mrb[0].mxu0
        %v3008 = vadd.f32 %v2831, %v3007
        %v3009 = vpop.f32.mrb[0].mxu0
        %v3010 = vadd.f32 %v2836, %v3009
        %v3011 = vpop.f32.mrb[0].mxu0
        %v3012 = vadd.f32 %v2836, %v3011
        %3013 = vdwg.mxu0
        %3014 = vmatprep.subr.bf16.mxu0 %v2805
        %3015 = vmatpush1.bf16.msra.mxu0 %v2804
        %3016 = vmatprep.subr.bf16.mxu0 %v2813
        %3017 = vmatpush1.bf16.msra.mxu0 %v2812
        %3018 = vmatprep.subr.bf16.mxu0 0
        %3019 = vmatpush1.bf16.msra.mxu0 0
        %3020 = vmatprep.subr.bf16.mxu0 0
        %3021 = vmatpush1.bf16.msra.mxu0 0
        %3022 = vmatprep.subr.bf16.mxu0 0
        %3023 = vmatpush1.bf16.msra.mxu0 0
        %3024 = vmatprep.subr.bf16.mxu0 0
        %3025 = vmatpush1.bf16.msra.mxu0 0
        %3026 = vmatprep.subr.bf16.mxu0 0
        %3027 = vmatpush1.bf16.msra.mxu0 0
        %3028 = vmatprep.subr.bf16.mxu0 0
        %3029 = vmatpush1.bf16.msra.mxu0 0
        %3030 = vmatprep.subr.bf16.mxu0 0
        %3031 = vmatpush1.bf16.msra.mxu0 0
        %3032 = vmatprep.subr.bf16.mxu0 0
        %3033 = vmatpush1.bf16.msra.mxu0 0
        %3034 = vmatprep.subr.bf16.mxu0 0
        %3035 = vmatpush1.bf16.msra.mxu0 0
        %3036 = vmatprep.subr.bf16.mxu0 0
        %3037 = vmatpush1.bf16.msra.mxu0 0
        %3038 = vmatprep.subr.bf16.mxu0 0
        %3039 = vmatpush1.bf16.msra.mxu0 0
        %3040 = vmatprep.subr.bf16.mxu0 0
        %3041 = vmatpush1.bf16.msra.mxu0 0
        %3042 = vmatprep.subr.bf16.mxu0 0
        %3043 = vmatpush1.bf16.msra.mxu0 0
        %3044 = vmatprep.subr.bf16.mxu0 0
        %3045 = vmatpush1.bf16.msra.mxu0 0
        %3046 = vmatprep.mubr.bf16.mxu0 0
        %3047 = vmatmul.mubr.bf16.gmra.mrb[0].mxu0 %v2850
        %v3048 = vpop.f32.mrb[0].mxu0
        %v3049 = vadd.f32 %v2821, %v3048
        %v3050 = vpop.f32.mrb[0].mxu0
        %v3051 = vadd.f32 %v2821, %v3050
        %v3052 = vpop.f32.mrb[0].mxu0
        %v3053 = vadd.f32 %v2826, %v3052
        %v3054 = vpop.f32.mrb[0].mxu0
        %v3055 = vadd.f32 %v2826, %v3054
        %3056 = vmatprep.mubr.bf16.mxu0 0
        %3057 = vmatmul.mubr.bf16.gmra.mrb[0].mxu0 %v2853
        %v3058 = vpop.f32.mrb[0].mxu0
        %v3059 = vadd.f32 %v2831, %v3058
        %v3060 = vpop.f32.mrb[0].mxu0
        %v3061 = vadd.f32 %v2831, %v3060
        %v3062 = vpop.f32.mrb[0].mxu0
        %v3063 = vadd.f32 %v2836, %v3062
        %v3064 = vpop.f32.mrb[0].mxu0
        %v3065 = vadd.f32 %v2836, %v3064
        %3066 = vdwg.mxu0
        %v3067 = vld [vmem:[#allocation2 + $0x200] sm:$0xff]
        %v3068 = vld [vmem:[#allocation2 + $0x208] sm:$0xff]
        %v3069 = vld [vmem:[#allocation2 + $0x210] sm:$0xff]
        %v3070 = vld [vmem:[#allocation2 + $0x218] sm:$0xff]
        %v3071 = vld [vmem:[#allocation2 + $0x220] sm:$0xff]
        %v3072 = vld [vmem:[#allocation2 + $0x228] sm:$0xff]
        %v3073 = vld [vmem:[#allocation2 + $0x230] sm:$0xff]
        %v3074 = vld [vmem:[#allocation2 + $0x238] sm:$0xff]
        %v3075 = vld [vmem:[#allocation2 + $0x240] sm:$0xff]
        %v3076 = vld [vmem:[#allocation2 + $0x248] sm:$0xff]
        %v3077 = vld [vmem:[#allocation2 + $0x250] sm:$0xff]
        %v3078 = vld [vmem:[#allocation2 + $0x258] sm:$0xff]
        %v3079 = vld [vmem:[#allocation2 + $0x260] sm:$0xff]
        %v3080 = vld [vmem:[#allocation2 + $0x268] sm:$0xff]
        %v3081 = vld [vmem:[#allocation2 + $0x270] sm:$0xff]
        %v3082 = vld [vmem:[#allocation2 + $0x278] sm:$0xff]
        %v3083 = vld [vmem:[#allocation2 + $0x280] sm:$0xff]
        %v3084 = vld [vmem:[#allocation2 + $0x288] sm:$0xff]
        %v3085 = vld [vmem:[#allocation2 + $0x290] sm:$0xff]
        %v3086 = vld [vmem:[#allocation2 + $0x298] sm:$0xff]
        %v3087 = vld [vmem:[#allocation2 + $0x2a0] sm:$0xff]
        %v3088 = vld [vmem:[#allocation2 + $0x2a8] sm:$0xff]
        %v3089 = vld [vmem:[#allocation2 + $0x2b0] sm:$0xff]
        %v3090 = vld [vmem:[#allocation2 + $0x2b8] sm:$0xff]
        %v3091 = vld [vmem:[#allocation2 + $0x2c0] sm:$0xff]
        %v3092 = vld [vmem:[#allocation2 + $0x2c8] sm:$0xff]
        %v3093 = vld [vmem:[#allocation2 + $0x2d0] sm:$0xff]
        %v3094 = vld [vmem:[#allocation2 + $0x2d8] sm:$0xff]
        %v3095 = vld [vmem:[#allocation2 + $0x2e0] sm:$0xff]
        %v3096 = vld [vmem:[#allocation2 + $0x2e8] sm:$0xff]
        %v3097 = vld [vmem:[#allocation2 + $0x2f0] sm:$0xff]
        %v3098 = vld [vmem:[#allocation2 + $0x2f8] sm:$0xff]
        %v3099 = vld [vmem:[#allocation2 + $0x300] sm:$0xff]
        %v3100 = vld [vmem:[#allocation2 + $0x308] sm:$0xff]
        %v3101 = vld [vmem:[#allocation2 + $0x310] sm:$0xff]
        %v3102 = vld [vmem:[#allocation2 + $0x318] sm:$0xff]
        %v3103 = vld [vmem:[#allocation2 + $0x320] sm:$0xff]
        %v3104 = vld [vmem:[#allocation2 + $0x328] sm:$0xff]
        %v3105 = vld [vmem:[#allocation2 + $0x330] sm:$0xff]
        %v3106 = vld [vmem:[#allocation2 + $0x338] sm:$0xff]
        %v3107 = vld [vmem:[#allocation2 + $0x340] sm:$0xff]
        %v3108 = vld [vmem:[#allocation2 + $0x348] sm:$0xff]
        %v3109 = vld [vmem:[#allocation2 + $0x350] sm:$0xff]
        %v3110 = vld [vmem:[#allocation2 + $0x358] sm:$0xff]
        %v3111 = vld [vmem:[#allocation2 + $0x360] sm:$0xff]
        %v3112 = vld [vmem:[#allocation2 + $0x368] sm:$0xff]
        %v3113 = vld [vmem:[#allocation2 + $0x370] sm:$0xff]
        %v3114 = vld [vmem:[#allocation2 + $0x378] sm:$0xff]
        %v3115 = vld [vmem:[#allocation2 + $0x380] sm:$0xff]
        %v3116 = vld [vmem:[#allocation2 + $0x388] sm:$0xff]
        %v3117 = vld [vmem:[#allocation2 + $0x390] sm:$0xff]
        %v3118 = vld [vmem:[#allocation2 + $0x398] sm:$0xff]
        %v3119 = vld [vmem:[#allocation2 + $0x3a0] sm:$0xff]
        %v3120 = vld [vmem:[#allocation2 + $0x3a8] sm:$0xff]
        %v3121 = vld [vmem:[#allocation2 + $0x3b0] sm:$0xff]
        %v3122 = vld [vmem:[#allocation2 + $0x3b8] sm:$0xff]
        %v3123 = vld [vmem:[#allocation2 + $0x3c0] sm:$0xff]
        %v3124 = vld [vmem:[#allocation2 + $0x3c8] sm:$0xff]
        %v3125 = vld [vmem:[#allocation2 + $0x3d0] sm:$0xff]
        %v3126 = vld [vmem:[#allocation2 + $0x3d8] sm:$0xff]
        %v3127 = vld [vmem:[#allocation2 + $0x3e0] sm:$0xff]
        %v3128 = vld [vmem:[#allocation2 + $0x3e8] sm:$0xff]
        %v3129 = vld [vmem:[#allocation2 + $0x3f0] sm:$0xff]
        %v3130 = vld [vmem:[#allocation2 + $0x3f8] sm:$0xff]
        %v3131 = vmul.f32 %v3067, %v2890
        %v3132 = vmul.f32 %v3068, %v2892
        %v3133 = vmul.f32 %v3069, %v2943
        %v3134 = vmul.f32 %v3070, %v2945
        %v3135 = vmul.f32 %v3071, %v2996
        %v3136 = vmul.f32 %v3072, %v2998
        %v3137 = vmul.f32 %v3073, %v3049
        %v3138 = vmul.f32 %v3074, %v3051
        %v3139 = vmul.f32 %v3075, %v2894
        %v3140 = vmul.f32 %v3076, %v2896
        %v3141 = vmul.f32 %v3077, %v2947
        %v3142 = vmul.f32 %v3078, %v2949
        %v3143 = vmul.f32 %v3079, %v3000
        %v3144 = vmul.f32 %v3080, %v3002
        %v3145 = vmul.f32 %v3081, %v3053
        %v3146 = vmul.f32 %v3082, %v3055
        %v3147 = vmul.f32 %v3083, %v2900
        %v3148 = vmul.f32 %v3084, %v2902
        %v3149 = vmul.f32 %v3085, %v2953
        %v3150 = vmul.f32 %v3086, %v2955
        %v3151 = vmul.f32 %v3087, %v3006
        %v3152 = vmul.f32 %v3088, %v3008
        %v3153 = vmul.f32 %v3089, %v3059
        %v3154 = vmul.f32 %v3090, %v3061
        %v3155 = vmul.f32 %v3091, %v2904
        %v3156 = vmul.f32 %v3092, %v2906
        %v3157 = vmul.f32 %v3093, %v2957
        %v3158 = vmul.f32 %v3094, %v2959
        %v3159 = vmul.f32 %v3095, %v3010
        %v3160 = vmul.f32 %v3096, %v3012
        %v3161 = vmul.f32 %v3097, %v3063
        %v3162 = vmul.f32 %v3098, %v3065
        %v3163 = vadd.f32 %v3131, %v3099
        %v3164 = vadd.f32 %v3132, %v3100
        %v3165 = vadd.f32 %v3133, %v3101
        %v3166 = vadd.f32 %v3134, %v3102
        %v3167 = vadd.f32 %v3135, %v3103
        %v3168 = vadd.f32 %v3136, %v3104
        %v3169 = vadd.f32 %v3137, %v3105
        %v3170 = vadd.f32 %v3138, %v3106
        %v3171 = vadd.f32 %v3139, %v3107
        %v3172 = vadd.f32 %v3140, %v3108
        %v3173 = vadd.f32 %v3141, %v3109
        %v3174 = vadd.f32 %v3142, %v3110
        %v3175 = vadd.f32 %v3143, %v3111
        %v3176 = vadd.f32 %v3144, %v3112
        %v3177 = vadd.f32 %v3145, %v3113
        %v3178 = vadd.f32 %v3146, %v3114
        %v3179 = vadd.f32 %v3147, %v3115
        %v3180 = vadd.f32 %v3148, %v3116
        %v3181 = vadd.f32 %v3149, %v3117
        %v3182 = vadd.f32 %v3150, %v3118
        %v3183 = vadd.f32 %v3151, %v3119
        %v3184 = vadd.f32 %v3152, %v3120
        %v3185 = vadd.f32 %v3153, %v3121
        %v3186 = vadd.f32 %v3154, %v3122
        %v3187 = vadd.f32 %v3155, %v3123
        %v3188 = vadd.f32 %v3156, %v3124
        %v3189 = vadd.f32 %v3157, %v3125
        %v3190 = vadd.f32 %v3158, %v3126
        %v3191 = vadd.f32 %v3159, %v3127
        %v3192 = vadd.f32 %v3160, %v3128
        %v3193 = vadd.f32 %v3161, %v3129
        %v3194 = vadd.f32 %v3162, %v3130
        %v3195 = vmax.f32 %v3163, 0.0
        %v3196 = vmax.f32 %v3164, 0.0
        %v3197 = vmax.f32 %v3165, 0.0
        %v3198 = vmax.f32 %v3166, 0.0
        %v3199 = vmax.f32 %v3167, 0.0
        %v3200 = vmax.f32 %v3168, 0.0
        %v3201 = vmax.f32 %v3169, 0.0
        %v3202 = vmax.f32 %v3170, 0.0
        %v3203 = vmax.f32 %v3171, 0.0
        %v3204 = vmax.f32 %v3172, 0.0
        %v3205 = vmax.f32 %v3173, 0.0
        %v3206 = vmax.f32 %v3174, 0.0
        %v3207 = vmax.f32 %v3175, 0.0
        %v3208 = vmax.f32 %v3176, 0.0
        %v3209 = vmax.f32 %v3177, 0.0
        %v3210 = vmax.f32 %v3178, 0.0
        %v3211 = vmax.f32 %v3179, 0.0
        %v3212 = vmax.f32 %v3180, 0.0
        %v3213 = vmax.f32 %v3181, 0.0
        %v3214 = vmax.f32 %v3182, 0.0
        %v3215 = vmax.f32 %v3183, 0.0
        %v3216 = vmax.f32 %v3184, 0.0
        %v3217 = vmax.f32 %v3185, 0.0
        %v3218 = vmax.f32 %v3186, 0.0
        %v3219 = vmax.f32 %v3187, 0.0
        %v3220 = vmax.f32 %v3188, 0.0
        %v3221 = vmax.f32 %v3189, 0.0
        %v3222 = vmax.f32 %v3190, 0.0
        %v3223 = vmax.f32 %v3191, 0.0
        %v3224 = vmax.f32 %v3192, 0.0
        %v3225 = vmax.f32 %v3193, 0.0
        %v3226 = vmax.f32 %v3194, 0.0
        %v3227 = vld [vmem:[%s7] sm:$0xf]
        %v3228 = vld [vmem:[%s7 + $0x4] sm:$0xf]
        %v3229 = vld [vmem:[%s7 + $0x8] sm:$0xf]
        %v3230 = vld [vmem:[%s7 + $0xc] sm:$0xf]
        %v3231 = vpack.c.bf16 %v3203, %v3195
        %v3232 = vpack.c.bf16 %v3204, %v3196
        %v3233 = vpack.c.bf16 %v3205, %v3197
        %v3234 = vpack.c.bf16 %v3206, %v3198
        %v3235 = vpack.c.bf16 %v3207, %v3199
        %v3236 = vpack.c.bf16 %v3208, %v3200
        %v3237 = vpack.c.bf16 %v3209, %v3201
        %v3238 = vpack.c.bf16 %v3210, %v3202
        %v3239 = vpack.c.bf16 %v3219, %v3211
        %v3240 = vpack.c.bf16 %v3220, %v3212
        %v3241 = vpack.c.bf16 %v3221, %v3213
        %v3242 = vpack.c.bf16 %v3222, %v3214
        %v3243 = vpack.c.bf16 %v3223, %v3215
        %v3244 = vpack.c.bf16 %v3224, %v3216
        %v3245 = vpack.c.bf16 %v3225, %v3217
        %v3246 = vpack.c.bf16 %v3226, %v3218
        %v3247 = vld [vmem:[%s8] sm:$0xff]
        %v3248 = vld [vmem:[%s8 + $0x8] sm:$0xff]
        %v3249 = vld [vmem:[%s8 + $0x10] sm:$0xff]
        %v3250 = vld [vmem:[%s8 + $0x18] sm:$0xff]
        %3252 = vset.pattern.permute.xlu0 0
        %3253 = vperm.xlu0 %3252, %v3247
        %v3254 = vpop.permute.xlu0 %3253
        %3257 = vset.pattern.permute.xlu0 0
        %3258 = vperm.xlu0 %3257, %v3248
        %v3259 = vpop.permute.xlu0 %3258
        %3262 = vset.pattern.permute.xlu0 0
        %3263 = vperm.xlu0 %3262, %v3249
        %v3264 = vpop.permute.xlu0 %3263
        %3267 = vset.pattern.permute.xlu0 0
        %3268 = vperm.xlu0 %3267, %v3250
        %v3269 = vpop.permute.xlu0 %3268
        %v3275 = vunpack.c.l.b16 %v3227
        %v3276 = vunpack.c.l.b16 %v3228
        %v3277 = vunpack.c.l.b16 %v3229
        %v3278 = vunpack.c.l.b16 %v3230
        %v3279 = vpack.c.b16 %v3276, %v3275
        %v3280 = vpack.c.b16 %v3278, %v3277
        %v3282 = vsel %vm2848, %v3279, 0
        %v3285 = vsel %vm2848, %v3280, 0
        %3287 = vmatprep.subr.bf16.mxu0 %v3232
        %3288 = vmatpush1.bf16.msra.mxu0 %v3231
        %3289 = vmatprep.subr.bf16.mxu0 %v3240
        %3290 = vmatpush1.bf16.msra.mxu0 %v3239
        %3291 = vmatprep.subr.bf16.mxu0 0
        %3292 = vmatpush1.bf16.msra.mxu0 0
        %3293 = vmatprep.subr.bf16.mxu0 0
        %3294 = vmatpush1.bf16.msra.mxu0 0
        %3295 = vmatprep.subr.bf16.mxu0 0
        %3296 = vmatpush1.bf16.msra.mxu0 0
        %3297 = vmatprep.subr.bf16.mxu0 0
        %3298 = vmatpush1.bf16.msra.mxu0 0
        %3299 = vmatprep.subr.bf16.mxu0 0
        %3300 = vmatpush1.bf16.msra.mxu0 0
        %3301 = vmatprep.subr.bf16.mxu0 0
        %3302 = vmatpush1.bf16.msra.mxu0 0
        %3303 = vmatprep.subr.bf16.mxu0 0
        %3304 = vmatpush1.bf16.msra.mxu0 0
        %3305 = vmatprep.subr.bf16.mxu0 0
        %3306 = vmatpush1.bf16.msra.mxu0 0
        %3307 = vmatprep.subr.bf16.mxu0 0
        %3308 = vmatpush1.bf16.msra.mxu0 0
        %3309 = vmatprep.subr.bf16.mxu0 0
        %3310 = vmatpush1.bf16.msra.mxu0 0
        %3311 = vmatprep.subr.bf16.mxu0 0
        %3312 = vmatpush1.bf16.msra.mxu0 0
        %3313 = vmatprep.subr.bf16.mxu0 0
        %3314 = vmatpush1.bf16.msra.mxu0 0
        %3315 = vmatprep.subr.bf16.mxu0 0
        %3316 = vmatpush1.bf16.msra.mxu0 0
        %3317 = vmatprep.subr.bf16.mxu0 0
        %3318 = vmatpush1.bf16.msra.mxu0 0
        %3319 = vmatprep.mubr.bf16.mxu0 0
        %3320 = vmatmul.mubr.bf16.gmra.mrb[0].mxu0 %v3282
        %v3321 = vpop.f32.mrb[0].mxu0
        %v3322 = vadd.f32 %v3254, %v3321
        %v3323 = vpop.f32.mrb[0].mxu0
        %v3324 = vadd.f32 %v3254, %v3323
        %v3325 = vpop.f32.mrb[0].mxu0
        %v3326 = vadd.f32 %v3259, %v3325
        %v3327 = vpop.f32.mrb[0].mxu0
        %v3328 = vadd.f32 %v3259, %v3327
        %3329 = vmatprep.mubr.bf16.mxu0 0
        %3330 = vmatmul.mubr.bf16.gmra.mrb[0].mxu0 %v3285
        %v3331 = vpop.f32.mrb[0].mxu0
        %v3332 = vadd.f32 %v3264, %v3331
        %v3333 = vpop.f32.mrb[0].mxu0
        %v3334 = vadd.f32 %v3264, %v3333
        %v3335 = vpop.f32.mrb[0].mxu0
        %v3336 = vadd.f32 %v3269, %v3335
        %v3337 = vpop.f32.mrb[0].mxu0
        %v3338 = vadd.f32 %v3269, %v3337
        %3339 = vdwg.mxu0
        %3340 = vmatprep.subr.bf16.mxu0 %v3234
        %3341 = vmatpush1.bf16.msra.mxu0 %v3233
        %3342 = vmatprep.subr.bf16.mxu0 %v3242
        %3343 = vmatpush1.bf16.msra.mxu0 %v3241
        %3344 = vmatprep.subr.bf16.mxu0 0
        %3345 = vmatpush1.bf16.msra.mxu0 0
        %3346 = vmatprep.subr.bf16.mxu0 0
        %3347 = vmatpush1.bf16.msra.mxu0 0
        %3348 = vmatprep.subr.bf16.mxu0 0
        %3349 = vmatpush1.bf16.msra.mxu0 0
        %3350 = vmatprep.subr.bf16.mxu0 0
        %3351 = vmatpush1.bf16.msra.mxu0 0
        %3352 = vmatprep.subr.bf16.mxu0 0
        %3353 = vmatpush1.bf16.msra.mxu0 0
        %3354 = vmatprep.subr.bf16.mxu0 0
        %3355 = vmatpush1.bf16.msra.mxu0 0
        %3356 = vmatprep.subr.bf16.mxu0 0
        %3357 = vmatpush1.bf16.msra.mxu0 0
        %3358 = vmatprep.subr.bf16.mxu0 0
        %3359 = vmatpush1.bf16.msra.mxu0 0
        %3360 = vmatprep.subr.bf16.mxu0 0
        %3361 = vmatpush1.bf16.msra.mxu0 0
        %3362 = vmatprep.subr.bf16.mxu0 0
        %3363 = vmatpush1.bf16.msra.mxu0 0
        %3364 = vmatprep.subr.bf16.mxu0 0
        %3365 = vmatpush1.bf16.msra.mxu0 0
        %3366 = vmatprep.subr.bf16.mxu0 0
        %3367 = vmatpush1.bf16.msra.mxu0 0
        %3368 = vmatprep.subr.bf16.mxu0 0
        %3369 = vmatpush1.bf16.msra.mxu0 0
        %3370 = vmatprep.subr.bf16.mxu0 0
        %3371 = vmatpush1.bf16.msra.mxu0 0
        %3372 = vmatprep.mubr.bf16.mxu0 0
        %3373 = vmatmul.mubr.bf16.gmra.mrb[0].mxu0 %v3282
        %v3374 = vpop.f32.mrb[0].mxu0
        %v3375 = vadd.f32 %v3254, %v3374
        %v3376 = vpop.f32.mrb[0].mxu0
        %v3377 = vadd.f32 %v3254, %v3376
        %v3378 = vpop.f32.mrb[0].mxu0
        %v3379 = vadd.f32 %v3259, %v3378
        %v3380 = vpop.f32.mrb[0].mxu0
        %v3381 = vadd.f32 %v3259, %v3380
        %3382 = vmatprep.mubr.bf16.mxu0 0
        %3383 = vmatmul.mubr.bf16.gmra.mrb[0].mxu0 %v3285
        %v3384 = vpop.f32.mrb[0].mxu0
        %v3385 = vadd.f32 %v3264, %v3384
        %v3386 = vpop.f32.mrb[0].mxu0
        %v3387 = vadd.f32 %v3264, %v3386
        %v3388 = vpop.f32.mrb[0].mxu0
        %v3389 = vadd.f32 %v3269, %v3388
        %v3390 = vpop.f32.mrb[0].mxu0
        %v3391 = vadd.f32 %v3269, %v3390
        %3392 = vdwg.mxu0
        %3393 = vmatprep.subr.bf16.mxu0 %v3236
        %3394 = vmatpush1.bf16.msra.mxu0 %v3235
        %3395 = vmatprep.subr.bf16.mxu0 %v3244
        %3396 = vmatpush1.bf16.msra.mxu0 %v3243
        %3397 = vmatprep.subr.bf16.mxu0 0
        %3398 = vmatpush1.bf16.msra.mxu0 0
        %3399 = vmatprep.subr.bf16.mxu0 0
        %3400 = vmatpush1.bf16.msra.mxu0 0
        %3401 = vmatprep.subr.bf16.mxu0 0
        %3402 = vmatpush1.bf16.msra.mxu0 0
        %3403 = vmatprep.subr.bf16.mxu0 0
        %3404 = vmatpush1.bf16.msra.mxu0 0
        %3405 = vmatprep.subr.bf16.mxu0 0
        %3406 = vmatpush1.bf16.msra.mxu0 0
        %3407 = vmatprep.subr.bf16.mxu0 0
        %3408 = vmatpush1.bf16.msra.mxu0 0
        %3409 = vmatprep.subr.bf16.mxu0 0
        %3410 = vmatpush1.bf16.msra.mxu0 0
        %3411 = vmatprep.subr.bf16.mxu0 0
        %3412 = vmatpush1.bf16.msra.mxu0 0
        %3413 = vmatprep.subr.bf16.mxu0 0
        %3414 = vmatpush1.bf16.msra.mxu0 0
        %3415 = vmatprep.subr.bf16.mxu0 0
        %3416 = vmatpush1.bf16.msra.mxu0 0
        %3417 = vmatprep.subr.bf16.mxu0 0
        %3418 = vmatpush1.bf16.msra.mxu0 0
        %3419 = vmatprep.subr.bf16.mxu0 0
        %3420 = vmatpush1.bf16.msra.mxu0 0
        %3421 = vmatprep.subr.bf16.mxu0 0
        %3422 = vmatpush1.bf16.msra.mxu0 0
        %3423 = vmatprep.subr.bf16.mxu0 0
        %3424 = vmatpush1.bf16.msra.mxu0 0
        %3425 = vmatprep.mubr.bf16.mxu0 0
        %3426 = vmatmul.mubr.bf16.gmra.mrb[0].mxu0 %v3282
        %v3427 = vpop.f32.mrb[0].mxu0
        %v3428 = vadd.f32 %v3254, %v3427
        %v3429 = vpop.f32.mrb[0].mxu0
        %v3430 = vadd.f32 %v3254, %v3429
        %v3431 = vpop.f32.mrb[0].mxu0
        %v3432 = vadd.f32 %v3259, %v3431
        %v3433 = vpop.f32.mrb[0].mxu0
        %v3434 = vadd.f32 %v3259, %v3433
        %3435 = vmatprep.mubr.bf16.mxu0 0
        %3436 = vmatmul.mubr.bf16.gmra.mrb[0].mxu0 %v3285
        %v3437 = vpop.f32.mrb[0].mxu0
        %v3438 = vadd.f32 %v3264, %v3437
        %v3439 = vpop.f32.mrb[0].mxu0
        %v3440 = vadd.f32 %v3264, %v3439
        %v3441 = vpop.f32.mrb[0].mxu0
        %v3442 = vadd.f32 %v3269, %v3441
        %v3443 = vpop.f32.mrb[0].mxu0
        %v3444 = vadd.f32 %v3269, %v3443
        %3445 = vdwg.mxu0
        %3446 = vmatprep.subr.bf16.mxu0 %v3238
        %3447 = vmatpush1.bf16.msra.mxu0 %v3237
        %3448 = vmatprep.subr.bf16.mxu0 %v3246
        %3449 = vmatpush1.bf16.msra.mxu0 %v3245
        %3450 = vmatprep.subr.bf16.mxu0 0
        %3451 = vmatpush1.bf16.msra.mxu0 0
        %3452 = vmatprep.subr.bf16.mxu0 0
        %3453 = vmatpush1.bf16.msra.mxu0 0
        %3454 = vmatprep.subr.bf16.mxu0 0
        %3455 = vmatpush1.bf16.msra.mxu0 0
        %3456 = vmatprep.subr.bf16.mxu0 0
        %3457 = vmatpush1.bf16.msra.mxu0 0
        %3458 = vmatprep.subr.bf16.mxu0 0
        %3459 = vmatpush1.bf16.msra.mxu0 0
        %3460 = vmatprep.subr.bf16.mxu0 0
        %3461 = vmatpush1.bf16.msra.mxu0 0
        %3462 = vmatprep.subr.bf16.mxu0 0
        %3463 = vmatpush1.bf16.msra.mxu0 0
        %3464 = vmatprep.subr.bf16.mxu0 0
        %3465 = vmatpush1.bf16.msra.mxu0 0
        %3466 = vmatprep.subr.bf16.mxu0 0
        %3467 = vmatpush1.bf16.msra.mxu0 0
        %3468 = vmatprep.subr.bf16.mxu0 0
        %3469 = vmatpush1.bf16.msra.mxu0 0
        %3470 = vmatprep.subr.bf16.mxu0 0
        %3471 = vmatpush1.bf16.msra.mxu0 0
        %3472 = vmatprep.subr.bf16.mxu0 0
        %3473 = vmatpush1.bf16.msra.mxu0 0
        %3474 = vmatprep.subr.bf16.mxu0 0
        %3475 = vmatpush1.bf16.msra.mxu0 0
        %3476 = vmatprep.subr.bf16.mxu0 0
        %3477 = vmatpush1.bf16.msra.mxu0 0
        %3478 = vmatprep.mubr.bf16.mxu0 0
        %3479 = vmatmul.mubr.bf16.gmra.mrb[0].mxu0 %v3282
        %v3480 = vpop.f32.mrb[0].mxu0
        %v3481 = vadd.f32 %v3254, %v3480
        %v3482 = vpop.f32.mrb[0].mxu0
        %v3483 = vadd.f32 %v3254, %v3482
        %v3484 = vpop.f32.mrb[0].mxu0
        %v3485 = vadd.f32 %v3259, %v3484
        %v3486 = vpop.f32.mrb[0].mxu0
        %v3487 = vadd.f32 %v3259, %v3486
        %3488 = vmatprep.mubr.bf16.mxu0 0
        %3489 = vmatmul.mubr.bf16.gmra.mrb[0].mxu0 %v3285
        %v3490 = vpop.f32.mrb[0].mxu0
        %v3491 = vadd.f32 %v3264, %v3490
        %v3492 = vpop.f32.mrb[0].mxu0
        %v3493 = vadd.f32 %v3264, %v3492
        %v3494 = vpop.f32.mrb[0].mxu0
        %v3495 = vadd.f32 %v3269, %v3494
        %v3496 = vpop.f32.mrb[0].mxu0
        %v3497 = vadd.f32 %v3269, %v3496
        %3498 = vdwg.mxu0
        %v3499 = vld [vmem:[#allocation2 + $0x400] sm:$0xff]
        %v3500 = vld [vmem:[#allocation2 + $0x408] sm:$0xff]
        %v3501 = vld [vmem:[#allocation2 + $0x410] sm:$0xff]
        %v3502 = vld [vmem:[#allocation2 + $0x418] sm:$0xff]
        %v3503 = vld [vmem:[#allocation2 + $0x420] sm:$0xff]
        %v3504 = vld [vmem:[#allocation2 + $0x428] sm:$0xff]
        %v3505 = vld [vmem:[#allocation2 + $0x430] sm:$0xff]
        %v3506 = vld [vmem:[#allocation2 + $0x438] sm:$0xff]
        %v3507 = vld [vmem:[#allocation2 + $0x440] sm:$0xff]
        %v3508 = vld [vmem:[#allocation2 + $0x448] sm:$0xff]
        %v3509 = vld [vmem:[#allocation2 + $0x450] sm:$0xff]
        %v3510 = vld [vmem:[#allocation2 + $0x458] sm:$0xff]
        %v3511 = vld [vmem:[#allocation2 + $0x460] sm:$0xff]
        %v3512 = vld [vmem:[#allocation2 + $0x468] sm:$0xff]
        %v3513 = vld [vmem:[#allocation2 + $0x470] sm:$0xff]
        %v3514 = vld [vmem:[#allocation2 + $0x478] sm:$0xff]
        %v3515 = vld [vmem:[#allocation2 + $0x480] sm:$0xff]
        %v3516 = vld [vmem:[#allocation2 + $0x488] sm:$0xff]
        %v3517 = vld [vmem:[#allocation2 + $0x490] sm:$0xff]
        %v3518 = vld [vmem:[#allocation2 + $0x498] sm:$0xff]
        %v3519 = vld [vmem:[#allocation2 + $0x4a0] sm:$0xff]
        %v3520 = vld [vmem:[#allocation2 + $0x4a8] sm:$0xff]
        %v3521 = vld [vmem:[#allocation2 + $0x4b0] sm:$0xff]
        %v3522 = vld [vmem:[#allocation2 + $0x4b8] sm:$0xff]
        %v3523 = vld [vmem:[#allocation2 + $0x4c0] sm:$0xff]
        %v3524 = vld [vmem:[#allocation2 + $0x4c8] sm:$0xff]
        %v3525 = vld [vmem:[#allocation2 + $0x4d0] sm:$0xff]
        %v3526 = vld [vmem:[#allocation2 + $0x4d8] sm:$0xff]
        %v3527 = vld [vmem:[#allocation2 + $0x4e0] sm:$0xff]
        %v3528 = vld [vmem:[#allocation2 + $0x4e8] sm:$0xff]
        %v3529 = vld [vmem:[#allocation2 + $0x4f0] sm:$0xff]
        %v3530 = vld [vmem:[#allocation2 + $0x4f8] sm:$0xff]
        %v3531 = vld [vmem:[#allocation2 + $0x500] sm:$0xff]
        %v3532 = vld [vmem:[#allocation2 + $0x508] sm:$0xff]
        %v3533 = vld [vmem:[#allocation2 + $0x510] sm:$0xff]
        %v3534 = vld [vmem:[#allocation2 + $0x518] sm:$0xff]
        %v3535 = vld [vmem:[#allocation2 + $0x520] sm:$0xff]
        %v3536 = vld [vmem:[#allocation2 + $0x528] sm:$0xff]
        %v3537 = vld [vmem:[#allocation2 + $0x530] sm:$0xff]
        %v3538 = vld [vmem:[#allocation2 + $0x538] sm:$0xff]
        %v3539 = vld [vmem:[#allocation2 + $0x540] sm:$0xff]
        %v3540 = vld [vmem:[#allocation2 + $0x548] sm:$0xff]
        %v3541 = vld [vmem:[#allocation2 + $0x550] sm:$0xff]
        %v3542 = vld [vmem:[#allocation2 + $0x558] sm:$0xff]
        %v3543 = vld [vmem:[#allocation2 + $0x560] sm:$0xff]
        %v3544 = vld [vmem:[#allocation2 + $0x568] sm:$0xff]
        %v3545 = vld [vmem:[#allocation2 + $0x570] sm:$0xff]
        %v3546 = vld [vmem:[#allocation2 + $0x578] sm:$0xff]
        %v3547 = vld [vmem:[#allocation2 + $0x580] sm:$0xff]
        %v3548 = vld [vmem:[#allocation2 + $0x588] sm:$0xff]
        %v3549 = vld [vmem:[#allocation2 + $0x590] sm:$0xff]
        %v3550 = vld [vmem:[#allocation2 + $0x598] sm:$0xff]
        %v3551 = vld [vmem:[#allocation2 + $0x5a0] sm:$0xff]
        %v3552 = vld [vmem:[#allocation2 + $0x5a8] sm:$0xff]
        %v3553 = vld [vmem:[#allocation2 + $0x5b0] sm:$0xff]
        %v3554 = vld [vmem:[#allocation2 + $0x5b8] sm:$0xff]
        %v3555 = vld [vmem:[#allocation2 + $0x5c0] sm:$0xff]
        %v3556 = vld [vmem:[#allocation2 + $0x5c8] sm:$0xff]
        %v3557 = vld [vmem:[#allocation2 + $0x5d0] sm:$0xff]
        %v3558 = vld [vmem:[#allocation2 + $0x5d8] sm:$0xff]
        %v3559 = vld [vmem:[#allocation2 + $0x5e0] sm:$0xff]
        %v3560 = vld [vmem:[#allocation2 + $0x5e8] sm:$0xff]
        %v3561 = vld [vmem:[#allocation2 + $0x5f0] sm:$0xff]
        %v3562 = vld [vmem:[#allocation2 + $0x5f8] sm:$0xff]
        %v3563 = vmul.f32 %v3499, %v3322
        %v3564 = vmul.f32 %v3500, %v3324
        %v3565 = vmul.f32 %v3501, %v3375
        %v3566 = vmul.f32 %v3502, %v3377
        %v3567 = vmul.f32 %v3503, %v3428
        %v3568 = vmul.f32 %v3504, %v3430
        %v3569 = vmul.f32 %v3505, %v3481
        %v3570 = vmul.f32 %v3506, %v3483
        %v3571 = vmul.f32 %v3507, %v3326
        %v3572 = vmul.f32 %v3508, %v3328
        %v3573 = vmul.f32 %v3509, %v3379
        %v3574 = vmul.f32 %v3510, %v3381
        %v3575 = vmul.f32 %v3511, %v3432
        %v3576 = vmul.f32 %v3512, %v3434
        %v3577 = vmul.f32 %v3513, %v3485
        %v3578 = vmul.f32 %v3514, %v3487
        %v3579 = vmul.f32 %v3515, %v3332
        %v3580 = vmul.f32 %v3516, %v3334
        %v3581 = vmul.f32 %v3517, %v3385
        %v3582 = vmul.f32 %v3518, %v3387
        %v3583 = vmul.f32 %v3519, %v3438
        %v3584 = vmul.f32 %v3520, %v3440
        %v3585 = vmul.f32 %v3521, %v3491
        %v3586 = vmul.f32 %v3522, %v3493
        %v3587 = vmul.f32 %v3523, %v3336
        %v3588 = vmul.f32 %v3524, %v3338
        %v3589 = vmul.f32 %v3525, %v3389
        %v3590 = vmul.f32 %v3526, %v3391
        %v3591 = vmul.f32 %v3527, %v3442
        %v3592 = vmul.f32 %v3528, %v3444
        %v3593 = vmul.f32 %v3529, %v3495
        %v3594 = vmul.f32 %v3530, %v3497
        %v3595 = vadd.f32 %v3563, %v3531
        %v3596 = vadd.f32 %v3564, %v3532
        %v3597 = vadd.f32 %v3565, %v3533
        %v3598 = vadd.f32 %v3566, %v3534
        %v3599 = vadd.f32 %v3567, %v3535
        %v3600 = vadd.f32 %v3568, %v3536
        %v3601 = vadd.f32 %v3569, %v3537
        %v3602 = vadd.f32 %v3570, %v3538
        %v3603 = vadd.f32 %v3571, %v3539
        %v3604 = vadd.f32 %v3572, %v3540
        %v3605 = vadd.f32 %v3573, %v3541
        %v3606 = vadd.f32 %v3574, %v3542
        %v3607 = vadd.f32 %v3575, %v3543
        %v3608 = vadd.f32 %v3576, %v3544
        %v3609 = vadd.f32 %v3577, %v3545
        %v3610 = vadd.f32 %v3578, %v3546
        %v3611 = vadd.f32 %v3579, %v3547
        %v3612 = vadd.f32 %v3580, %v3548
        %v3613 = vadd.f32 %v3581, %v3549
        %v3614 = vadd.f32 %v3582, %v3550
        %v3615 = vadd.f32 %v3583, %v3551
        %v3616 = vadd.f32 %v3584, %v3552
        %v3617 = vadd.f32 %v3585, %v3553
        %v3618 = vadd.f32 %v3586, %v3554
        %v3619 = vadd.f32 %v3587, %v3555
        %v3620 = vadd.f32 %v3588, %v3556
        %v3621 = vadd.f32 %v3589, %v3557
        %v3622 = vadd.f32 %v3590, %v3558
        %v3623 = vadd.f32 %v3591, %v3559
        %v3624 = vadd.f32 %v3592, %v3560
        %v3625 = vadd.f32 %v3593, %v3561
        %v3626 = vadd.f32 %v3594, %v3562
        %v3627 = vmax.f32 %v3595, 0.0
        %v3628 = vmax.f32 %v3596, 0.0
        %v3629 = vmax.f32 %v3597, 0.0
        %v3630 = vmax.f32 %v3598, 0.0
        %v3631 = vmax.f32 %v3599, 0.0
        %v3632 = vmax.f32 %v3600, 0.0
        %v3633 = vmax.f32 %v3601, 0.0
        %v3634 = vmax.f32 %v3602, 0.0
        %v3635 = vmax.f32 %v3603, 0.0
        %v3636 = vmax.f32 %v3604, 0.0
        %v3637 = vmax.f32 %v3605, 0.0
        %v3638 = vmax.f32 %v3606, 0.0
        %v3639 = vmax.f32 %v3607, 0.0
        %v3640 = vmax.f32 %v3608, 0.0
        %v3641 = vmax.f32 %v3609, 0.0
        %v3642 = vmax.f32 %v3610, 0.0
        %v3643 = vmax.f32 %v3611, 0.0
        %v3644 = vmax.f32 %v3612, 0.0
        %v3645 = vmax.f32 %v3613, 0.0
        %v3646 = vmax.f32 %v3614, 0.0
        %v3647 = vmax.f32 %v3615, 0.0
        %v3648 = vmax.f32 %v3616, 0.0
        %v3649 = vmax.f32 %v3617, 0.0
        %v3650 = vmax.f32 %v3618, 0.0
        %v3651 = vmax.f32 %v3619, 0.0
        %v3652 = vmax.f32 %v3620, 0.0
        %v3653 = vmax.f32 %v3621, 0.0
        %v3654 = vmax.f32 %v3622, 0.0
        %v3655 = vmax.f32 %v3623, 0.0
        %v3656 = vmax.f32 %v3624, 0.0
        %v3657 = vmax.f32 %v3625, 0.0
        %v3658 = vmax.f32 %v3626, 0.0
        %v3659 = vld [vmem:[%s9] sm:$0x3]
        %v3660 = vpack.c.bf16 %v3635, %v3627
        %v3661 = vpack.c.bf16 %v3636, %v3628
        %v3662 = vpack.c.bf16 %v3637, %v3629
        %v3663 = vpack.c.bf16 %v3638, %v3630
        %v3664 = vpack.c.bf16 %v3639, %v3631
        %v3665 = vpack.c.bf16 %v3640, %v3632
        %v3666 = vpack.c.bf16 %v3641, %v3633
        %v3667 = vpack.c.bf16 %v3642, %v3634
        %v3668 = vpack.c.bf16 %v3651, %v3643
        %v3669 = vpack.c.bf16 %v3652, %v3644
        %v3670 = vpack.c.bf16 %v3653, %v3645
        %v3671 = vpack.c.bf16 %v3654, %v3646
        %v3672 = vpack.c.bf16 %v3655, %v3647
        %v3673 = vpack.c.bf16 %v3656, %v3648
        %v3674 = vpack.c.bf16 %v3657, %v3649
        %v3675 = vpack.c.bf16 %v3658, %v3650
        %v3676 = vld [vmem:[%s10] sm:$0xf]
        %3678 = vset.pattern.permute.xlu0 0
        %3679 = vperm.xlu0 %3678, %v3676
        %v3680 = vpop.permute.xlu0 %3679
        %v3683 = vsel %vm2848, %v3659, 0
        %3685 = vmatprep.subr.bf16.mxu0 %v3661
        %3686 = vmatpush1.bf16.msra.mxu0 %v3660
        %3687 = vmatprep.subr.bf16.mxu0 %v3669
        %3688 = vmatpush1.bf16.msra.mxu0 %v3668
        %3689 = vmatprep.subr.bf16.mxu0 0
        %3690 = vmatpush1.bf16.msra.mxu0 0
        %3691 = vmatprep.subr.bf16.mxu0 0
        %3692 = vmatpush1.bf16.msra.mxu0 0
        %3693 = vmatprep.subr.bf16.mxu0 0
        %3694 = vmatpush1.bf16.msra.mxu0 0
        %3695 = vmatprep.subr.bf16.mxu0 0
        %3696 = vmatpush1.bf16.msra.mxu0 0
        %3697 = vmatprep.subr.bf16.mxu0 0
        %3698 = vmatpush1.bf16.msra.mxu0 0
        %3699 = vmatprep.subr.bf16.mxu0 0
        %3700 = vmatpush1.bf16.msra.mxu0 0
        %3701 = vmatprep.subr.bf16.mxu0 0
        %3702 = vmatpush1.bf16.msra.mxu0 0
        %3703 = vmatprep.subr.bf16.mxu0 0
        %3704 = vmatpush1.bf16.msra.mxu0 0
        %3705 = vmatprep.subr.bf16.mxu0 0
        %3706 = vmatpush1.bf16.msra.mxu0 0
        %3707 = vmatprep.subr.bf16.mxu0 0
        %3708 = vmatpush1.bf16.msra.mxu0 0
        %3709 = vmatprep.subr.bf16.mxu0 0
        %3710 = vmatpush1.bf16.msra.mxu0 0
        %3711 = vmatprep.subr.bf16.mxu0 0
        %3712 = vmatpush1.bf16.msra.mxu0 0
        %3713 = vmatprep.subr.bf16.mxu0 0
        %3714 = vmatpush1.bf16.msra.mxu0 0
        %3715 = vmatprep.subr.bf16.mxu0 0
        %3716 = vmatpush1.bf16.msra.mxu0 0
        %3717 = vmatprep.mubr.bf16.mxu0 0
        %3718 = vmatmul.mubr.bf16.gmra.mrb[0].mxu0 %v3683
        %v3719 = vpop.f32.mrb[0].mxu0
        %v3720 = vadd.f32 %v3680, %v3719
        %v3721 = vpop.f32.mrb[0].mxu0
        %v3722 = vadd.f32 %v3680, %v3721
        %v3723 = vpop.f32.mrb[0].mxu0
        %v3724 = vpop.f32.mrb[0].mxu0
        %3725 = vdwg.mxu0
        %3726 = vmatprep.subr.bf16.mxu0 %v3663
        %3727 = vmatpush1.bf16.msra.mxu0 %v3662
        %3728 = vmatprep.subr.bf16.mxu0 %v3671
        %3729 = vmatpush1.bf16.msra.mxu0 %v3670
        %3730 = vmatprep.subr.bf16.mxu0 0
        %3731 = vmatpush1.bf16.msra.mxu0 0
        %3732 = vmatprep.subr.bf16.mxu0 0
        %3733 = vmatpush1.bf16.msra.mxu0 0
        %3734 = vmatprep.subr.bf16.mxu0 0
        %3735 = vmatpush1.bf16.msra.mxu0 0
        %3736 = vmatprep.subr.bf16.mxu0 0
        %3737 = vmatpush1.bf16.msra.mxu0 0
        %3738 = vmatprep.subr.bf16.mxu0 0
        %3739 = vmatpush1.bf16.msra.mxu0 0
        %3740 = vmatprep.subr.bf16.mxu0 0
        %3741 = vmatpush1.bf16.msra.mxu0 0
        %3742 = vmatprep.subr.bf16.mxu0 0
        %3743 = vmatpush1.bf16.msra.mxu0 0
        %3744 = vmatprep.subr.bf16.mxu0 0
        %3745 = vmatpush1.bf16.msra.mxu0 0
        %3746 = vmatprep.subr.bf16.mxu0 0
        %3747 = vmatpush1.bf16.msra.mxu0 0
        %3748 = vmatprep.subr.bf16.mxu0 0
        %3749 = vmatpush1.bf16.msra.mxu0 0
        %3750 = vmatprep.subr.bf16.mxu0 0
        %3751 = vmatpush1.bf16.msra.mxu0 0
        %3752 = vmatprep.subr.bf16.mxu0 0
        %3753 = vmatpush1.bf16.msra.mxu0 0
        %3754 = vmatprep.subr.bf16.mxu0 0
        %3755 = vmatpush1.bf16.msra.mxu0 0
        %3756 = vmatprep.subr.bf16.mxu0 0
        %3757 = vmatpush1.bf16.msra.mxu0 0
        %3758 = vmatprep.mubr.bf16.mxu0 0
        %3759 = vmatmul.mubr.bf16.gmra.mrb[0].mxu0 %v3683
        %v3760 = vpop.f32.mrb[0].mxu0
        %v3761 = vadd.f32 %v3680, %v3760
        %v3762 = vpop.f32.mrb[0].mxu0
        %v3763 = vadd.f32 %v3680, %v3762
        %v3764 = vpop.f32.mrb[0].mxu0
        %v3765 = vpop.f32.mrb[0].mxu0
        %3766 = vdwg.mxu0
        %3767 = vmatprep.subr.bf16.mxu0 %v3665
        %3768 = vmatpush1.bf16.msra.mxu0 %v3664
        %3769 = vmatprep.subr.bf16.mxu0 %v3673
        %3770 = vmatpush1.bf16.msra.mxu0 %v3672
        %3771 = vmatprep.subr.bf16.mxu0 0
        %3772 = vmatpush1.bf16.msra.mxu0 0
        %3773 = vmatprep.subr.bf16.mxu0 0
        %3774 = vmatpush1.bf16.msra.mxu0 0
        %3775 = vmatprep.subr.bf16.mxu0 0
        %3776 = vmatpush1.bf16.msra.mxu0 0
        %3777 = vmatprep.subr.bf16.mxu0 0
        %3778 = vmatpush1.bf16.msra.mxu0 0
        %3779 = vmatprep.subr.bf16.mxu0 0
        %3780 = vmatpush1.bf16.msra.mxu0 0
        %3781 = vmatprep.subr.bf16.mxu0 0
        %3782 = vmatpush1.bf16.msra.mxu0 0
        %3783 = vmatprep.subr.bf16.mxu0 0
        %3784 = vmatpush1.bf16.msra.mxu0 0
        %3785 = vmatprep.subr.bf16.mxu0 0
        %3786 = vmatpush1.bf16.msra.mxu0 0
        %3787 = vmatprep.subr.bf16.mxu0 0
        %3788 = vmatpush1.bf16.msra.mxu0 0
        %3789 = vmatprep.subr.bf16.mxu0 0
        %3790 = vmatpush1.bf16.msra.mxu0 0
        %3791 = vmatprep.subr.bf16.mxu0 0
        %3792 = vmatpush1.bf16.msra.mxu0 0
        %3793 = vmatprep.subr.bf16.mxu0 0
        %3794 = vmatpush1.bf16.msra.mxu0 0
        %3795 = vmatprep.subr.bf16.mxu0 0
        %3796 = vmatpush1.bf16.msra.mxu0 0
        %3797 = vmatprep.subr.bf16.mxu0 0
        %3798 = vmatpush1.bf16.msra.mxu0 0
        %3799 = vmatprep.mubr.bf16.mxu0 0
        %3800 = vmatmul.mubr.bf16.gmra.mrb[0].mxu0 %v3683
        %v3801 = vpop.f32.mrb[0].mxu0
        %v3802 = vadd.f32 %v3680, %v3801
        %v3803 = vpop.f32.mrb[0].mxu0
        %v3804 = vadd.f32 %v3680, %v3803
        %v3805 = vpop.f32.mrb[0].mxu0
        %v3806 = vpop.f32.mrb[0].mxu0
        %3807 = vdwg.mxu0
        %3808 = vmatprep.subr.bf16.mxu0 %v3667
        %3809 = vmatpush1.bf16.msra.mxu0 %v3666
        %3810 = vmatprep.subr.bf16.mxu0 %v3675
        %3811 = vmatpush1.bf16.msra.mxu0 %v3674
        %3812 = vmatprep.subr.bf16.mxu0 0
        %3813 = vmatpush1.bf16.msra.mxu0 0
        %3814 = vmatprep.subr.bf16.mxu0 0
        %3815 = vmatpush1.bf16.msra.mxu0 0
        %3816 = vmatprep.subr.bf16.mxu0 0
        %3817 = vmatpush1.bf16.msra.mxu0 0
        %3818 = vmatprep.subr.bf16.mxu0 0
        %3819 = vmatpush1.bf16.msra.mxu0 0
        %3820 = vmatprep.subr.bf16.mxu0 0
        %3821 = vmatpush1.bf16.msra.mxu0 0
        %3822 = vmatprep.subr.bf16.mxu0 0
        %3823 = vmatpush1.bf16.msra.mxu0 0
        %3824 = vmatprep.subr.bf16.mxu0 0
        %3825 = vmatpush1.bf16.msra.mxu0 0
        %3826 = vmatprep.subr.bf16.mxu0 0
        %3827 = vmatpush1.bf16.msra.mxu0 0
        %3828 = vmatprep.subr.bf16.mxu0 0
        %3829 = vmatpush1.bf16.msra.mxu0 0
        %3830 = vmatprep.subr.bf16.mxu0 0
        %3831 = vmatpush1.bf16.msra.mxu0 0
        %3832 = vmatprep.subr.bf16.mxu0 0
        %3833 = vmatpush1.bf16.msra.mxu0 0
        %3834 = vmatprep.subr.bf16.mxu0 0
        %3835 = vmatpush1.bf16.msra.mxu0 0
        %3836 = vmatprep.subr.bf16.mxu0 0
        %3837 = vmatpush1.bf16.msra.mxu0 0
        %3838 = vmatprep.subr.bf16.mxu0 0
        %3839 = vmatpush1.bf16.msra.mxu0 0
        %3840 = vmatprep.mubr.bf16.mxu0 0
        %3841 = vmatmul.mubr.bf16.gmra.mrb[0].mxu0 %v3683
        %v3842 = vpop.f32.mrb[0].mxu0
        %v3843 = vadd.f32 %v3680, %v3842
        %v3844 = vpop.f32.mrb[0].mxu0
        %v3845 = vadd.f32 %v3680, %v3844
        %v3846 = vpop.f32.mrb[0].mxu0
        %v3847 = vpop.f32.mrb[0].mxu0
        %3848 = vdwg.mxu0
        %v3849 = vtanh.pop %v3720
        %v3850 = vtanh.pop %v3722
        %v3851 = vtanh.pop %v3761
        %v3852 = vtanh.pop %v3763
        %v3853 = vtanh.pop %v3802
        %v3854 = vtanh.pop %v3804
        %v3855 = vtanh.pop %v3843
        %v3856 = vtanh.pop %v3845
        %v3857 = vlaneseq
        %v3858 = vshrl.u32 %v3857, 7
        %vm3859 = vcmp.eq.s32.totalorder %v3858, 0
        %v3860 = vlaneseq
        %v3861 = vshrl.u32 %v3860, 7
        %v3862 = vsub.s32 0, %v3861
        %v3863 = vrot.slane %v3849, %v3862
        %v3864 = vlaneseq
        %v3865 = vshrl.u32 %v3864, 7
        %v3866 = vsub.s32 0, %v3865
        %v3867 = vrot.slane %v3850, %v3866
        %v3868 = vlaneseq
        %v3869 = vshrl.u32 %v3868, 7
        %v3870 = vsub.s32 0, %v3869
        %v3871 = vrot.slane %v3851, %v3870
        %v3872 = vlaneseq
        %v3873 = vshrl.u32 %v3872, 7
        %v3874 = vsub.s32 0, %v3873
        %v3875 = vrot.slane %v3852, %v3874
        %v3876 = vlaneseq
        %v3877 = vshrl.u32 %v3876, 7
        %v3878 = vsub.s32 0, %v3877
        %v3879 = vrot.slane %v3853, %v3878
        %v3880 = vlaneseq
        %v3881 = vshrl.u32 %v3880, 7
        %v3882 = vsub.s32 0, %v3881
        %v3883 = vrot.slane %v3854, %v3882
        %v3884 = vlaneseq
        %v3885 = vshrl.u32 %v3884, 7
        %v3886 = vsub.s32 0, %v3885
        %v3887 = vrot.slane %v3855, %v3886
        %v3888 = vlaneseq
        %v3889 = vshrl.u32 %v3888, 7
        %v3890 = vsub.s32 0, %v3889
        %v3891 = vrot.slane %v3856, %v3890
        %v3892 = vsel %vm3859, %v3863, %v3720
        %v3893 = vsel %vm3859, %v3867, %v3722
        %v3894 = vsel %vm3859, %v3871, %v3761
        %v3895 = vsel %vm3859, %v3875, %v3763
        %v3896 = vsel %vm3859, %v3879, %v3802
        %v3897 = vsel %vm3859, %v3883, %v3804
        %v3898 = vsel %vm3859, %v3887, %v3843
        %v3899 = vsel %vm3859, %v3891, %v3845
        %v3908 = vcombine.low %v3892, %v3893
        %v3909 = vcombine.low %v3894, %v3895
        %v3910 = vcombine.low %v3896, %v3897
        %v3911 = vcombine.low %v3898, %v3899
        %3916 = vst [vmem:[%s453] sm:$0xff] %v3908
        %3917 = vst [vmem:[%s453 + $0x8] sm:$0xff] %v3909
        %3918 = vst [vmem:[%s453 + $0x10] sm:$0xff] %v3910
        %3919 = vst [vmem:[%s453 + $0x18] sm:$0xff] %v3911
        %s3920 = smul.u32 8, %s22
        %p3921 = scmp.lt.s32.totalorder %s3920, 15
        %s3922 = scalar_select %p3921, %s3920, 15
        %s3923 = smul.addr %s3922, 4
        %s3924 = scalar_lea.vmem %s11, %s3923
        // Predicated region
        $region88: #{decoder_forward.1} parent=82 // pred_check
          %p3925 = pneg %p276
        $region89: #{decoder_forward.1} parent=82 // pred_check_branch
          %3927 = sbr.rel (%p3925) target = $region91
        $region90: #{decoder_forward.1} parent=82 // pred_region
          %s3928 = smul.u32 8, %s22
        $region91: #{decoder_forward.1} parent=82 // pred_fallthru
          _
      $region83: #{decoder_forward.1} parent=5 // pred_fallthru
        _
      %p3929 = scmp.le.s32.totalorder 2, %s17
      // Predicated region
      $region92: #{decoder_forward.1} parent=5 // pred_check
        %p3930 = pneg %p3929
      $region93: #{decoder_forward.1} parent=5 // pred_check_branch
        %3932 = sbr.rel (%p3930) target = $region95
      $region94: #{decoder_forward.1} parent=5 // pred_region
        %s3933 = ssub.s32 %s17, 2
        // Predicated region
        $region96: #{decoder_forward.1} parent=94 // pred_check
          %p3934 = pneg %p282
        $region97: #{decoder_forward.1} parent=94 // pred_check_branch
          %3936 = sbr.rel (%p3934) target = $region99
        $region98: #{decoder_forward.1} parent=94 // pred_region
          %s3937 = smul.u32 8, %s23
          %p3938 = scmp.lt.s32.totalorder %s3937, 15
          %s3939 = scalar_select %p3938, %s3937, 15
          %s3940 = smul.addr %s3939, 4
          %s3941 = scalar_lea.vmem %s11, %s3940
        $region99: #{decoder_forward.1} parent=94 // pred_fallthru
          _
      $region95: #{decoder_forward.1} parent=5 // pred_fallthru
        _
    $region6: #{decoder_forward.1} parent=1 // loop_footer
      %s21 = sadd.s32 1, %s17
    $region7: #{decoder_forward.1} parent=1 // loop_footer_branch
      %16 = sbr.rel target = $region3
    $region8: #{decoder_forward.1} parent=1 // loop_exit
      _

</llo_original>
